<compile_context>
chip_gen: v6e
topology: v6e:2x2x1
jax: 0.10.0
libtpu: 0.0.40
codegen_flags: <defaults>
</compile_context>

<pallas_src>
import functools

import numpy as np
import jax
import jax.numpy as jnp
from jax import lax
from jax.experimental import pallas as pl
from jax.experimental.pallas import tpu as pltpu


C1, C2 = 6, 16      # conv output channels
KS = 5              # conv kernel size
W1OUT = 14          # pooled width after conv1 (28 / 2)
W2OUT = 5           # pooled width after conv2 (10 / 2)
LANES = 128         # every lane dim padded to a full vreg width
H1P = 128           # fc1 width 120 -> 128
H2P = 128           # fc2 width  84 -> 128
OUTP = 128          # fc3 width  10 -> 128 (lane-dense output block)
TB_MAX = 64         # images per grid step (sweepable 32..128, multiple of 8)

_DOT = functools.partial(jnp.dot, preferred_element_type=jnp.float32)


# ----------------------------------------------------------------------------
# Fused kernel: whole forward for one batch tile of `tb` images
# ----------------------------------------------------------------------------
def _lenet_kernel(x_ref, wb1_ref, b1_ref, wb2_ref, b2_ref,
                  w1p_ref, bf1_ref, w2p_ref, bf2_ref, w3p_ref, bf3_ref,
                  out_ref, ym1_ref, p1_ref, ym2_ref, p2_ref):
    """Row "frames" per image: input 32 rows, conv1 out 32 (0..27 valid),
    pool1 16 (0..13 valid), conv2 out 16 (0..9 valid), pool2 8 (0..4 valid).
    Column layouts (all padded to 128 lanes): input w*3+ci; conv1/pool1
    co*14+jp; conv2/pool2 co*5+j3.  Conv weights carry both width-pool
    parities side by side (N = 2 x 128)."""
    tb = out_ref.shape[0]
    bf16 = jnp.bfloat16
    n1 = tb * 32 - (KS - 1)          # rows of the conv1 output frame
    n2 = tb * 16 - (KS - 1)          # rows of the conv2 output frame

    # The stride-2 row pool reads 4 tail rows per stage that the banded
    # matmuls never write.  Zero just those rows (2 masked vsts) every step
    # so every intermediate stays finite regardless of stale VMEM / TC split.
    ym1_ref[pl.ds(n1, KS - 1), :] = jnp.zeros((KS - 1, LANES), jnp.float32)
    ym2_ref[pl.ds(n2, KS - 1), :] = jnp.zeros((KS - 1, LANES), jnp.float32)

    # ---------------- conv1 + ReLU + 2x2 max-pool ---------------------------
    # One (n1,128)x(128,256) bf16 dot per kernel row; lanes [0:128) hold width
    # parity 0, lanes [128:256) parity 1 (parity fold baked into the weights).
    acc = None
    for dh in range(KS):
        t = _DOT(x_ref[pl.ds(dh, n1), :].astype(bf16), wb1_ref[dh])
        acc = t if acc is None else acc + t
    ym1_ref[pl.ds(0, n1), :] = jnp.maximum(acc[:, :LANES], acc[:, LANES:])
    ev = ym1_ref[pl.ds(0, tb * 16, stride=2), :]          # rows b*32 + 2i
    od = ym1_ref[pl.ds(1, tb * 16, stride=2), :]          # rows b*32 + 2i + 1
    p1_ref[...] = jnp.maximum(jnp.maximum(ev, od) + b1_ref[...], 0.0)

    # ---------------- conv2 + ReLU + 2x2 max-pool ---------------------------
    acc = None
    for dh in range(KS):
        t = _DOT(p1_ref[pl.ds(dh, n2), :].astype(bf16), wb2_ref[dh])
        acc = t if acc is None else acc + t
    ym2_ref[pl.ds(0, n2), :] = jnp.maximum(acc[:, :LANES], acc[:, LANES:])
    ev = ym2_ref[pl.ds(0, tb * 8, stride=2), :]
    od = ym2_ref[pl.ds(1, tb * 8, stride=2), :]
    p2_ref[...] = jnp.maximum(jnp.maximum(ev, od) + b2_ref[...], 0.0)

    # ---------------- fc1 -> fc2 -> fc3 (torch NCHW flatten folded in) ------
    acc = None
    for i3 in range(W2OUT):                   # pooled output-row index
        rows = p2_ref[pl.ds(i3, tb, stride=8), :].astype(bf16)   # (tb, 128)
        t = _DOT(rows, w1p_ref[i3])
        acc = t if acc is None else acc + t
    h1 = jnp.maximum(acc + bf1_ref[...], 0.0)
    h2 = jnp.maximum(_DOT(h1.astype(bf16), w2p_ref[...]) + bf2_ref[...], 0.0)
    out_ref[...] = _DOT(h2.astype(bf16), w3p_ref[...]) + bf3_ref[...]


def _build_forward(np_batch, tb):
    grid = (np_batch // tb,)
    return pl.pallas_call(
        _lenet_kernel,
        out_shape=jax.ShapeDtypeStruct((np_batch, OUTP), jnp.float32),
        grid_spec=pltpu.PrefetchScalarGridSpec(
            num_scalar_prefetch=0,
            grid=grid,
            in_specs=[
                pl.BlockSpec((tb * 32, LANES), lambda i: (i, 0)),      # input tile
                pl.BlockSpec((KS, LANES, 2 * LANES), lambda i: (0, 0, 0)),   # wb1
                pl.BlockSpec((1, LANES), lambda i: (0, 0)),            # b1
                pl.BlockSpec((KS, LANES, 2 * LANES), lambda i: (0, 0, 0)),   # wb2
                pl.BlockSpec((1, LANES), lambda i: (0, 0)),            # b2
                pl.BlockSpec((W2OUT, LANES, H1P), lambda i: (0, 0, 0)),      # w1p
                pl.BlockSpec((1, H1P), lambda i: (0, 0)),
                pl.BlockSpec((H1P, H2P), lambda i: (0, 0)),
                pl.BlockSpec((1, H2P), lambda i: (0, 0)),
                pl.BlockSpec((H2P, OUTP), lambda i: (0, 0)),
                pl.BlockSpec((1, OUTP), lambda i: (0, 0)),
            ],
            out_specs=pl.BlockSpec((tb, OUTP), lambda i: (i, 0)),
            scratch_shapes=[
                pltpu.VMEM((tb * 32, LANES), jnp.float32),   # conv1 width-pooled
                pltpu.VMEM((tb * 16, LANES), jnp.float32),   # pool1 activations
                pltpu.VMEM((tb * 16, LANES), jnp.float32),   # conv2 width-pooled
                pltpu.VMEM((tb * 8, LANES), jnp.float32),    # pool2 activations
            ],
        ),
        compiler_params=pltpu.CompilerParams(
            dimension_semantics=("parallel",),    # batch tiles independent
            vmem_limit_bytes=32 * 1024 * 1024,    # ~10 MiB worst case at TB=128
        ),
    )


def _choose_tiling(n):
    """Pick (tb, padded_batch): tb multiple of 8, <= TB_MAX, and grid >= 2
    whenever the batch allows (so v7x's two TensorCores both get work)."""
    n8 = max(8, -(-n // 8) * 8)
    if n8 >= 16:
        tb = min(TB_MAX, max(8, (n8 // 2) // 8 * 8))
    else:
        tb = 8
    np_batch = -(-n8 // tb) * tb
    return tb, np_batch


@jax.jit
def net_forward(x_nchw, packed):
    """x_nchw: (N, 3, 32, 32) float32 -> logits (N, 10)."""
    n = x_nchw.shape[0]
    tb, np_batch = _choose_tiling(n)
    x = jnp.transpose(x_nchw, (0, 2, 3, 1))              # NCHW -> NHWC (tiny op)
    if np_batch != n:
        x = jnp.pad(x, ((0, np_batch - n), (0, 0), (0, 0), (0, 0)))
    x2d = x.reshape(np_batch * 32, 32 * 3)               # rows b*32+h, cols w*3+c
    x2d = jnp.pad(x2d, ((0, 0), (0, LANES - 32 * 3)))    # lane-pad 96 -> 128
    out = _build_forward(np_batch, tb)(
        x2d, packed["wb1"], packed["b1t"], packed["wb2"], packed["b2t"],
        packed["w1p"], packed["bf1"], packed["w2p"], packed["bf2"],
        packed["w3p"], packed["bf3"])
    return out[:n, :10]


# ----------------------------------------------------------------------------
# One-time host-side parameter packing (banded bf16 conv weights, padded fc)
# ----------------------------------------------------------------------------
def pack_params(p):
    w1 = np.asarray(p["conv1_w"], np.float32)    # (6, 3, 5, 5)   [co, ci, dh, dw]
    b1 = np.asarray(p["conv1_b"], np.float32)
    w2 = np.asarray(p["conv2_w"], np.float32)    # (16, 6, 5, 5)
    b2 = np.asarray(p["conv2_b"], np.float32)
    fw1 = np.asarray(p["fc1_w"], np.float32)     # (120, 400)
    fb1 = np.asarray(p["fc1_b"], np.float32)
    fw2 = np.asarray(p["fc2_w"], np.float32)     # (84, 120)
    fb2 = np.asarray(p["fc2_b"], np.float32)
    fw3 = np.asarray(p["fc3_w"], np.float32)     # (10, 84)
    fb3 = np.asarray(p["fc3_b"], np.float32)

    # conv1 banded weight, both width-pool parities side by side along N:
    # wb1[dh, jin*3+ci, q*128 + co*14 + jp] = w1[co, ci, dh, dw], jin=2*jp+q+dw.
    wb1 = np.zeros((KS, LANES, 2 * LANES), np.float32)
    for dh in range(KS):
        for q in range(2):
            for dw in range(KS):
                for jp in range(W1OUT):
                    jin = 2 * jp + q + dw
                    for ci in range(3):
                        wb1[dh, jin * 3 + ci,
                            q * LANES + jp: q * LANES + C1 * W1OUT: W1OUT] = \
                            w1[:, ci, dh, dw]
    b1t = np.zeros((1, LANES), np.float32)
    b1t[0, :C1 * W1OUT] = np.repeat(b1, W1OUT)          # col co*14+jp -> b1[co]

    # conv2 banded weight: wb2[dh, ci*14+jin, q*128 + co*5 + j3] = w2[co,ci,dh,dw]
    wb2 = np.zeros((KS, LANES, 2 * LANES), np.float32)
    for dh in range(KS):
        for q in range(2):
            for dw in range(KS):
                for j3 in range(W2OUT):
                    jin = 2 * j3 + q + dw
                    for ci in range(C1):
                        wb2[dh, ci * W1OUT + jin,
                            q * LANES + j3: q * LANES + C2 * W2OUT: W2OUT] = \
                            w2[:, ci, dh, dw]
    b2t = np.zeros((1, LANES), np.float32)
    b2t[0, :C2 * W2OUT] = np.repeat(b2, W2OUT)          # col co*5+j3 -> b2[co]

    # fc1: fold torch's NCHW view(-1, 400) into the weight:
    # w1p[i3, co*5+j3, u] = fc1_w[u, co*25 + i3*5 + j3], padded to 128 lanes.
    w1p = np.zeros((W2OUT, LANES, H1P), np.float32)
    t = fw1.reshape(120, C2, W2OUT, W2OUT)                      # [u, c, h, w]
    w1p[:, :C2 * W2OUT, :120] = \
        np.transpose(t, (2, 1, 3, 0)).reshape(W2OUT, C2 * W2OUT, 120)
    bf1 = np.zeros((1, H1P), np.float32)
    bf1[0, :120] = fb1

    w2p = np.zeros((H1P, H2P), np.float32)
    w2p[:120, :84] = fw2.T
    bf2 = np.zeros((1, H2P), np.float32)
    bf2[0, :84] = fb2

    w3p = np.zeros((H2P, OUTP), np.float32)
    w3p[:84, :10] = fw3.T
    bf3 = np.zeros((1, OUTP), np.float32)
    bf3[0, :10] = fb3

    wt = lambda a: jnp.asarray(a, jnp.bfloat16)   # weights bf16 (single MXU pass)
    ft = lambda a: jnp.asarray(a, jnp.float32)    # biases stay f32 (post-acc add)
    return {"wb1": wt(wb1), "b1t": ft(b1t), "wb2": wt(wb2), "b2t": ft(b2t),
            "w1p": wt(w1p), "bf1": ft(bf1), "w2p": wt(w2p), "bf2": ft(bf2),
            "w3p": wt(w3p), "bf3": ft(bf3)}


def init_params(key):
    ks = jax.random.split(key, 10)
    s = 0.1
    return {
        "conv1_w": jax.random.normal(ks[0], (6, 3, 5, 5), jnp.float32) * s,
        "conv1_b": jax.random.normal(ks[1], (6,), jnp.float32) * s,
        "conv2_w": jax.random.normal(ks[2], (16, 6, 5, 5), jnp.float32) * s,
        "conv2_b": jax.random.normal(ks[3], (16,), jnp.float32) * s,
        "fc1_w": jax.random.normal(ks[4], (120, 400), jnp.float32) * s,
        "fc1_b": jax.random.normal(ks[5], (120,), jnp.float32) * s,
        "fc2_w": jax.random.normal(ks[6], (84, 120), jnp.float32) * s,
        "fc2_b": jax.random.normal(ks[7], (84,), jnp.float32) * s,
        "fc3_w": jax.random.normal(ks[8], (10, 84), jnp.float32) * s,
        "fc3_b": jax.random.normal(ks[9], (10,), jnp.float32) * s,
    }


# ----------------------------------------------------------------------------
# Pure-JAX (XLA, default precision) reference for a correctness sanity check
# ----------------------------------------------------------------------------
def _ref_pool(y):
    return jnp.maximum(jnp.maximum(y[:, :, 0::2, 0::2], y[:, :, 0::2, 1::2]),
                       jnp.maximum(y[:, :, 1::2, 0::2], y[:, :, 1::2, 1::2]))


def reference_forward(x_nchw, p):
    dn = ("NCHW", "OIHW", "NCHW")
    y = lax.conv_general_dilated(x_nchw, p["conv1_w"], (1, 1), "VALID",
                                 dimension_numbers=dn)
    y = _ref_pool(jnp.maximum(y + p["conv1_b"][None, :, None, None], 0.0))
    y = lax.conv_general_dilated(y, p["conv2_w"], (1, 1), "VALID",
                                 dimension_numbers=dn)
    y = _ref_pool(jnp.maximum(y + p["conv2_b"][None, :, None, None], 0.0))
    flat = y.reshape(y.shape[0], C2 * W2OUT * W2OUT)
    h1 = jnp.maximum(jnp.dot(flat, p["fc1_w"].T) + p["fc1_b"], 0.0)
    h2 = jnp.maximum(jnp.dot(h1, p["fc2_w"].T) + p["fc2_b"], 0.0)
    return jnp.dot(h2, p["fc3_w"].T) + p["fc3_b"]


if __name__ == "__main__":
    key = jax.random.PRNGKey(0)
    kx, kp, kx2 = jax.random.split(key, 3)
    params = init_params(kp)
    packed = pack_params(params)

    # Input must be 3x32x32 so the 16*5*5 flatten in fc1 holds (LeNet / CIFAR).
    x = jax.random.normal(kx, (2, 3, 32, 32), dtype=jnp.float32)
    out = jax.block_until_ready(net_forward(x, packed))
    assert out.shape == (2, 10) and out.dtype == jnp.float32
    assert bool(jnp.all(jnp.isfinite(out)))
    ref = reference_forward(x, params)
    tol = 8e-2 * (1.0 + float(jnp.max(jnp.abs(ref))))   # bf16-MXU tolerance
    err = float(jnp.max(jnp.abs(out - ref)))
    assert err < tol, f"small-batch mismatch vs reference: {err} (tol {tol})"

    # Larger batch: TB=32 tiles, 2-step grid (exercises both TCs on v7x and
    # the multi-step scratch/tail-row handling).
    xb = jax.random.normal(kx2, (64, 3, 32, 32), dtype=jnp.float32)
    outb = jax.block_until_ready(net_forward(xb, packed))
    assert outb.shape == (64, 10)
    refb = reference_forward(xb, params)
    tolb = 8e-2 * (1.0 + float(jnp.max(jnp.abs(refb))))
    errb = float(jnp.max(jnp.abs(outb - refb)))
    assert bool(jnp.all(jnp.isfinite(outb))) and errb < tolb, \
        f"batch-64 mismatch vs reference: {errb} (tol {tolb})"

    print("KERNEL_OK")
</pallas_src>

<mosaic_0001>
module attributes {stable_mosaic.version = 11 : i64} {
  func.func @_lenet_kernel(%arg0: i32, %arg1: memref<256x128xf32, #tpu.memory_space<vmem>>, %arg2: memref<5x128x256xbf16, #tpu.memory_space<vmem>>, %arg3: memref<1x128xf32, #tpu.memory_space<vmem>>, %arg4: memref<5x128x256xbf16, #tpu.memory_space<vmem>>, %arg5: memref<1x128xf32, #tpu.memory_space<vmem>>, %arg6: memref<5x128x128xbf16, #tpu.memory_space<vmem>>, %arg7: memref<1x128xf32, #tpu.memory_space<vmem>>, %arg8: memref<128x128xbf16, #tpu.memory_space<vmem>>, %arg9: memref<1x128xf32, #tpu.memory_space<vmem>>, %arg10: memref<128x128xbf16, #tpu.memory_space<vmem>>, %arg11: memref<1x128xf32, #tpu.memory_space<vmem>>, %arg12: memref<8x128xf32, #tpu.memory_space<vmem>>, %arg13: memref<256x128xf32, #tpu.memory_space<vmem>>, %arg14: memref<128x128xf32, #tpu.memory_space<vmem>>, %arg15: memref<128x128xf32, #tpu.memory_space<vmem>>, %arg16: memref<64x128xf32, #tpu.memory_space<vmem>>) attributes {dimension_semantics = [#tpu.dimension_semantics<parallel>], iteration_bounds = array<i64: 1>, scalar_prefetch = 0 : i64, scratch_operands = 4 : i64, tpu.core_type = #tpu.core_type<tc>, window_params = [{transform_indices = @transform_0, window_bounds = array<i64: 256, 128>}, {pipeline_mode = #tpu.pipeline_mode<synchronous>, transform_indices = @transform_1, window_bounds = array<i64: 5, 128, 256>}, {pipeline_mode = #tpu.pipeline_mode<synchronous>, transform_indices = @transform_2, window_bounds = array<i64: 1, 128>}, {pipeline_mode = #tpu.pipeline_mode<synchronous>, transform_indices = @transform_3, window_bounds = array<i64: 5, 128, 256>}, {pipeline_mode = #tpu.pipeline_mode<synchronous>, transform_indices = @transform_4, window_bounds = array<i64: 1, 128>}, {pipeline_mode = #tpu.pipeline_mode<synchronous>, transform_indices = @transform_5, window_bounds = array<i64: 5, 128, 128>}, {pipeline_mode = #tpu.pipeline_mode<synchronous>, transform_indices = @transform_6, window_bounds = array<i64: 1, 128>}, {pipeline_mode = #tpu.pipeline_mode<synchronous>, transform_indices = @transform_7, window_bounds = array<i64: 128, 128>}, {pipeline_mode = #tpu.pipeline_mode<synchronous>, transform_indices = @transform_8, window_bounds = array<i64: 1, 128>}, {pipeline_mode = #tpu.pipeline_mode<synchronous>, transform_indices = @transform_9, window_bounds = array<i64: 128, 128>}, {pipeline_mode = #tpu.pipeline_mode<synchronous>, transform_indices = @transform_10, window_bounds = array<i64: 1, 128>}, {transform_indices = @transform_11, window_bounds = array<i64: 8, 128>}]} {
    %cst = arith.constant 0.000000e+00 : f32
    %0 = vector.broadcast %cst : f32 to vector<4x128xf32>
    %c252 = arith.constant 252 : index
    %c0 = arith.constant 0 : index
    %1 = vector.load %arg13[%c252, %c0] : memref<256x128xf32, #tpu.memory_space<vmem>>, vector<4x128xf32>
    tpu.vector_store %arg13[%c252, %c0], %0 {strides = array<i32>} : memref<256x128xf32, #tpu.memory_space<vmem>>, vector<4x128xf32>,
    %cst_0 = arith.constant 0.000000e+00 : f32
    %2 = vector.broadcast %cst_0 : f32 to vector<4x128xf32>
    %c124 = arith.constant 124 : index
    %c0_1 = arith.constant 0 : index
    %3 = vector.load %arg15[%c124, %c0_1] : memref<128x128xf32, #tpu.memory_space<vmem>>, vector<4x128xf32>
    tpu.vector_store %arg15[%c124, %c0_1], %2 {strides = array<i32>} : memref<128x128xf32, #tpu.memory_space<vmem>>, vector<4x128xf32>,
    %c0_2 = arith.constant 0 : index
    %c0_3 = arith.constant 0 : index
    %4 = vector.load %arg1[%c0_2, %c0_3] : memref<256x128xf32, #tpu.memory_space<vmem>>, vector<252x128xf32>
    %5 = arith.truncf %4 : vector<252x128xf32> to vector<252x128xbf16>
    %c0_4 = arith.constant 0 : index
    %c0_5 = arith.constant 0 : index
    %c0_6 = arith.constant 0 : index
    %6 = vector.load %arg2[%c0_4, %c0_5, %c0_6] : memref<5x128x256xbf16, #tpu.memory_space<vmem>>, vector<1x128x256xbf16>
    %7 = vector.shape_cast %6 : vector<1x128x256xbf16> to vector<128x256xbf16>
    %cst_7 = arith.constant dense<0.000000e+00> : vector<252x256xf32>
    %8 = tpu.matmul %5, %7, %cst_7 {dimension_numbers = #tpu.dot_dimension_numbers<[1], [0], [0], [1], [0, 0, 1, 1], [], []>} : vector<252x128xbf16>, vector<128x256xbf16>, vector<252x256xf32> -> vector<252x256xf32>
    %c1 = arith.constant 1 : index
    %c0_8 = arith.constant 0 : index
    %9 = vector.load %arg1[%c1, %c0_8] : memref<256x128xf32, #tpu.memory_space<vmem>>, vector<252x128xf32>
    %10 = arith.truncf %9 : vector<252x128xf32> to vector<252x128xbf16>
    %c1_9 = arith.constant 1 : index
    %c0_10 = arith.constant 0 : index
    %c0_11 = arith.constant 0 : index
    %11 = vector.load %arg2[%c1_9, %c0_10, %c0_11] : memref<5x128x256xbf16, #tpu.memory_space<vmem>>, vector<1x128x256xbf16>
    %12 = vector.shape_cast %11 : vector<1x128x256xbf16> to vector<128x256xbf16>
    %cst_12 = arith.constant dense<0.000000e+00> : vector<252x256xf32>
    %13 = tpu.matmul %10, %12, %cst_12 {dimension_numbers = #tpu.dot_dimension_numbers<[1], [0], [0], [1], [0, 0, 1, 1], [], []>} : vector<252x128xbf16>, vector<128x256xbf16>, vector<252x256xf32> -> vector<252x256xf32>
    %14 = arith.addf %8, %13 : vector<252x256xf32>
    %c2 = arith.constant 2 : index
    %c0_13 = arith.constant 0 : index
    %15 = vector.load %arg1[%c2, %c0_13] : memref<256x128xf32, #tpu.memory_space<vmem>>, vector<252x128xf32>
    %16 = arith.truncf %15 : vector<252x128xf32> to vector<252x128xbf16>
    %c2_14 = arith.constant 2 : index
    %c0_15 = arith.constant 0 : index
    %c0_16 = arith.constant 0 : index
    %17 = vector.load %arg2[%c2_14, %c0_15, %c0_16] : memref<5x128x256xbf16, #tpu.memory_space<vmem>>, vector<1x128x256xbf16>
    %18 = vector.shape_cast %17 : vector<1x128x256xbf16> to vector<128x256xbf16>
    %cst_17 = arith.constant dense<0.000000e+00> : vector<252x256xf32>
    %19 = tpu.matmul %16, %18, %cst_17 {dimension_numbers = #tpu.dot_dimension_numbers<[1], [0], [0], [1], [0, 0, 1, 1], [], []>} : vector<252x128xbf16>, vector<128x256xbf16>, vector<252x256xf32> -> vector<252x256xf32>
    %20 = arith.addf %14, %19 : vector<252x256xf32>
    %c3 = arith.constant 3 : index
    %c0_18 = arith.constant 0 : index
    %21 = vector.load %arg1[%c3, %c0_18] : memref<256x128xf32, #tpu.memory_space<vmem>>, vector<252x128xf32>
    %22 = arith.truncf %21 : vector<252x128xf32> to vector<252x128xbf16>
    %c3_19 = arith.constant 3 : index
    %c0_20 = arith.constant 0 : index
    %c0_21 = arith.constant 0 : index
    %23 = vector.load %arg2[%c3_19, %c0_20, %c0_21] : memref<5x128x256xbf16, #tpu.memory_space<vmem>>, vector<1x128x256xbf16>
    %24 = vector.shape_cast %23 : vector<1x128x256xbf16> to vector<128x256xbf16>
    %cst_22 = arith.constant dense<0.000000e+00> : vector<252x256xf32>
    %25 = tpu.matmul %22, %24, %cst_22 {dimension_numbers = #tpu.dot_dimension_numbers<[1], [0], [0], [1], [0, 0, 1, 1], [], []>} : vector<252x128xbf16>, vector<128x256xbf16>, vector<252x256xf32> -> vector<252x256xf32>
    %26 = arith.addf %20, %25 : vector<252x256xf32>
    %c4 = arith.constant 4 : index
    %c0_23 = arith.constant 0 : index
    %27 = vector.load %arg1[%c4, %c0_23] : memref<256x128xf32, #tpu.memory_space<vmem>>, vector<252x128xf32>
    %28 = arith.truncf %27 : vector<252x128xf32> to vector<252x128xbf16>
    %c4_24 = arith.constant 4 : index
    %c0_25 = arith.constant 0 : index
    %c0_26 = arith.constant 0 : index
    %29 = vector.load %arg2[%c4_24, %c0_25, %c0_26] : memref<5x128x256xbf16, #tpu.memory_space<vmem>>, vector<1x128x256xbf16>
    %30 = vector.shape_cast %29 : vector<1x128x256xbf16> to vector<128x256xbf16>
    %cst_27 = arith.constant dense<0.000000e+00> : vector<252x256xf32>
    %31 = tpu.matmul %28, %30, %cst_27 {dimension_numbers = #tpu.dot_dimension_numbers<[1], [0], [0], [1], [0, 0, 1, 1], [], []>} : vector<252x128xbf16>, vector<128x256xbf16>, vector<252x256xf32> -> vector<252x256xf32>
    %32 = arith.addf %26, %31 : vector<252x256xf32>
    %33 = vector.extract_strided_slice %32 {offsets = [0, 0], sizes = [252, 128], strides = [1, 1]} : vector<252x256xf32> to vector<252x128xf32>
    %34 = vector.extract_strided_slice %32 {offsets = [0, 128], sizes = [252, 128], strides = [1, 1]} : vector<252x256xf32> to vector<252x128xf32>
    %35 = arith.maximumf %33, %34 : vector<252x128xf32>
    %c0_28 = arith.constant 0 : index
    %c0_29 = arith.constant 0 : index
    %36 = vector.load %arg13[%c0_28, %c0_29] : memref<256x128xf32, #tpu.memory_space<vmem>>, vector<252x128xf32>
    tpu.vector_store %arg13[%c0_28, %c0_29], %35 {strides = array<i32>} : memref<256x128xf32, #tpu.memory_space<vmem>>, vector<252x128xf32>,
    %c0_30 = arith.constant 0 : index
    %c0_31 = arith.constant 0 : index
    %37 = tpu.strided_load %arg13[%c0_30, %c0_31] {strides = array<i32: 2, 1>} : memref<256x128xf32, #tpu.memory_space<vmem>>, vector<128x128xf32>
    %c1_32 = arith.constant 1 : index
    %c0_33 = arith.constant 0 : index
    %38 = tpu.strided_load %arg13[%c1_32, %c0_33] {strides = array<i32: 2, 1>} : memref<256x128xf32, #tpu.memory_space<vmem>>, vector<128x128xf32>
    %39 = arith.maximumf %37, %38 : vector<128x128xf32>
    %c0_34 = arith.constant 0 : index
    %c0_35 = arith.constant 0 : index
    %40 = vector.load %arg3[%c0_34, %c0_35] : memref<1x128xf32, #tpu.memory_space<vmem>>, vector<1x128xf32>
    %41 = vector.broadcast %40 : vector<1x128xf32> to vector<128x128xf32>
    %42 = arith.addf %39, %41 : vector<128x128xf32>
    %cst_36 = arith.constant 0.000000e+00 : f32
    %43 = vector.broadcast %cst_36 : f32 to vector<128x128xf32>
    %44 = arith.maximumf %42, %43 : vector<128x128xf32>
    %c0_37 = arith.constant 0 : index
    %c0_38 = arith.constant 0 : index
    %45 = vector.load %arg14[%c0_37, %c0_38] : memref<128x128xf32, #tpu.memory_space<vmem>>, vector<128x128xf32>
    tpu.vector_store %arg14[%c0_37, %c0_38], %44 {strides = array<i32>} : memref<128x128xf32, #tpu.memory_space<vmem>>, vector<128x128xf32>,
    %c0_39 = arith.constant 0 : index
    %c0_40 = arith.constant 0 : index
    %46 = vector.load %arg14[%c0_39, %c0_40] : memref<128x128xf32, #tpu.memory_space<vmem>>, vector<124x128xf32>
    %47 = arith.truncf %46 : vector<124x128xf32> to vector<124x128xbf16>
    %c0_41 = arith.constant 0 : index
    %c0_42 = arith.constant 0 : index
    %c0_43 = arith.constant 0 : index
    %48 = vector.load %arg4[%c0_41, %c0_42, %c0_43] : memref<5x128x256xbf16, #tpu.memory_space<vmem>>, vector<1x128x256xbf16>
    %49 = vector.shape_cast %48 : vector<1x128x256xbf16> to vector<128x256xbf16>
    %cst_44 = arith.constant dense<0.000000e+00> : vector<124x256xf32>
    %50 = tpu.matmul %47, %49, %cst_44 {dimension_numbers = #tpu.dot_dimension_numbers<[1], [0], [0], [1], [0, 0, 1, 1], [], []>} : vector<124x128xbf16>, vector<128x256xbf16>, vector<124x256xf32> -> vector<124x256xf32>
    %c1_45 = arith.constant 1 : index
    %c0_46 = arith.constant 0 : index
    %51 = vector.load %arg14[%c1_45, %c0_46] : memref<128x128xf32, #tpu.memory_space<vmem>>, vector<124x128xf32>
    %52 = arith.truncf %51 : vector<124x128xf32> to vector<124x128xbf16>
    %c1_47 = arith.constant 1 : index
    %c0_48 = arith.constant 0 : index
    %c0_49 = arith.constant 0 : index
    %53 = vector.load %arg4[%c1_47, %c0_48, %c0_49] : memref<5x128x256xbf16, #tpu.memory_space<vmem>>, vector<1x128x256xbf16>
    %54 = vector.shape_cast %53 : vector<1x128x256xbf16> to vector<128x256xbf16>
    %cst_50 = arith.constant dense<0.000000e+00> : vector<124x256xf32>
    %55 = tpu.matmul %52, %54, %cst_50 {dimension_numbers = #tpu.dot_dimension_numbers<[1], [0], [0], [1], [0, 0, 1, 1], [], []>} : vector<124x128xbf16>, vector<128x256xbf16>, vector<124x256xf32> -> vector<124x256xf32>
    %56 = arith.addf %50, %55 : vector<124x256xf32>
    %c2_51 = arith.constant 2 : index
    %c0_52 = arith.constant 0 : index
    %57 = vector.load %arg14[%c2_51, %c0_52] : memref<128x128xf32, #tpu.memory_space<vmem>>, vector<124x128xf32>
    %58 = arith.truncf %57 : vector<124x128xf32> to vector<124x128xbf16>
    %c2_53 = arith.constant 2 : index
    %c0_54 = arith.constant 0 : index
    %c0_55 = arith.constant 0 : index
    %59 = vector.load %arg4[%c2_53, %c0_54, %c0_55] : memref<5x128x256xbf16, #tpu.memory_space<vmem>>, vector<1x128x256xbf16>
    %60 = vector.shape_cast %59 : vector<1x128x256xbf16> to vector<128x256xbf16>
    %cst_56 = arith.constant dense<0.000000e+00> : vector<124x256xf32>
    %61 = tpu.matmul %58, %60, %cst_56 {dimension_numbers = #tpu.dot_dimension_numbers<[1], [0], [0], [1], [0, 0, 1, 1], [], []>} : vector<124x128xbf16>, vector<128x256xbf16>, vector<124x256xf32> -> vector<124x256xf32>
    %62 = arith.addf %56, %61 : vector<124x256xf32>
    %c3_57 = arith.constant 3 : index
    %c0_58 = arith.constant 0 : index
    %63 = vector.load %arg14[%c3_57, %c0_58] : memref<128x128xf32, #tpu.memory_space<vmem>>, vector<124x128xf32>
    %64 = arith.truncf %63 : vector<124x128xf32> to vector<124x128xbf16>
    %c3_59 = arith.constant 3 : index
    %c0_60 = arith.constant 0 : index
    %c0_61 = arith.constant 0 : index
    %65 = vector.load %arg4[%c3_59, %c0_60, %c0_61] : memref<5x128x256xbf16, #tpu.memory_space<vmem>>, vector<1x128x256xbf16>
    %66 = vector.shape_cast %65 : vector<1x128x256xbf16> to vector<128x256xbf16>
    %cst_62 = arith.constant dense<0.000000e+00> : vector<124x256xf32>
    %67 = tpu.matmul %64, %66, %cst_62 {dimension_numbers = #tpu.dot_dimension_numbers<[1], [0], [0], [1], [0, 0, 1, 1], [], []>} : vector<124x128xbf16>, vector<128x256xbf16>, vector<124x256xf32> -> vector<124x256xf32>
    %68 = arith.addf %62, %67 : vector<124x256xf32>
    %c4_63 = arith.constant 4 : index
    %c0_64 = arith.constant 0 : index
    %69 = vector.load %arg14[%c4_63, %c0_64] : memref<128x128xf32, #tpu.memory_space<vmem>>, vector<124x128xf32>
    %70 = arith.truncf %69 : vector<124x128xf32> to vector<124x128xbf16>
    %c4_65 = arith.constant 4 : index
    %c0_66 = arith.constant 0 : index
    %c0_67 = arith.constant 0 : index
    %71 = vector.load %arg4[%c4_65, %c0_66, %c0_67] : memref<5x128x256xbf16, #tpu.memory_space<vmem>>, vector<1x128x256xbf16>
    %72 = vector.shape_cast %71 : vector<1x128x256xbf16> to vector<128x256xbf16>
    %cst_68 = arith.constant dense<0.000000e+00> : vector<124x256xf32>
    %73 = tpu.matmul %70, %72, %cst_68 {dimension_numbers = #tpu.dot_dimension_numbers<[1], [0], [0], [1], [0, 0, 1, 1], [], []>} : vector<124x128xbf16>, vector<128x256xbf16>, vector<124x256xf32> -> vector<124x256xf32>
    %74 = arith.addf %68, %73 : vector<124x256xf32>
    %75 = vector.extract_strided_slice %74 {offsets = [0, 0], sizes = [124, 128], strides = [1, 1]} : vector<124x256xf32> to vector<124x128xf32>
    %76 = vector.extract_strided_slice %74 {offsets = [0, 128], sizes = [124, 128], strides = [1, 1]} : vector<124x256xf32> to vector<124x128xf32>
    %77 = arith.maximumf %75, %76 : vector<124x128xf32>
    %c0_69 = arith.constant 0 : index
    %c0_70 = arith.constant 0 : index
    %78 = vector.load %arg15[%c0_69, %c0_70] : memref<128x128xf32, #tpu.memory_space<vmem>>, vector<124x128xf32>
    tpu.vector_store %arg15[%c0_69, %c0_70], %77 {strides = array<i32>} : memref<128x128xf32, #tpu.memory_space<vmem>>, vector<124x128xf32>,
    %c0_71 = arith.constant 0 : index
    %c0_72 = arith.constant 0 : index
    %79 = tpu.strided_load %arg15[%c0_71, %c0_72] {strides = array<i32: 2, 1>} : memref<128x128xf32, #tpu.memory_space<vmem>>, vector<64x128xf32>
    %c1_73 = arith.constant 1 : index
    %c0_74 = arith.constant 0 : index
    %80 = tpu.strided_load %arg15[%c1_73, %c0_74] {strides = array<i32: 2, 1>} : memref<128x128xf32, #tpu.memory_space<vmem>>, vector<64x128xf32>
    %81 = arith.maximumf %79, %80 : vector<64x128xf32>
    %c0_75 = arith.constant 0 : index
    %c0_76 = arith.constant 0 : index
    %82 = vector.load %arg5[%c0_75, %c0_76] : memref<1x128xf32, #tpu.memory_space<vmem>>, vector<1x128xf32>
    %83 = vector.broadcast %82 : vector<1x128xf32> to vector<64x128xf32>
    %84 = arith.addf %81, %83 : vector<64x128xf32>
    %cst_77 = arith.constant 0.000000e+00 : f32
    %85 = vector.broadcast %cst_77 : f32 to vector<64x128xf32>
    %86 = arith.maximumf %84, %85 : vector<64x128xf32>
    %c0_78 = arith.constant 0 : index
    %c0_79 = arith.constant 0 : index
    %87 = vector.load %arg16[%c0_78, %c0_79] : memref<64x128xf32, #tpu.memory_space<vmem>>, vector<64x128xf32>
    tpu.vector_store %arg16[%c0_78, %c0_79], %86 {strides = array<i32>} : memref<64x128xf32, #tpu.memory_space<vmem>>, vector<64x128xf32>,
    %c0_80 = arith.constant 0 : index
    %c0_81 = arith.constant 0 : index
    %88 = tpu.strided_load %arg16[%c0_80, %c0_81] {strides = array<i32: 8, 1>} : memref<64x128xf32, #tpu.memory_space<vmem>>, vector<8x128xf32>
    %89 = arith.truncf %88 : vector<8x128xf32> to vector<8x128xbf16>
    %c0_82 = arith.constant 0 : index
    %c0_83 = arith.constant 0 : index
    %c0_84 = arith.constant 0 : index
    %90 = vector.load %arg6[%c0_82, %c0_83, %c0_84] : memref<5x128x128xbf16, #tpu.memory_space<vmem>>, vector<1x128x128xbf16>
    %91 = vector.shape_cast %90 : vector<1x128x128xbf16> to vector<128x128xbf16>
    %cst_85 = arith.constant dense<0.000000e+00> : vector<8x128xf32>
    %92 = tpu.matmul %89, %91, %cst_85 {dimension_numbers = #tpu.dot_dimension_numbers<[1], [0], [0], [1], [0, 0, 1, 1], [], []>} : vector<8x128xbf16>, vector<128x128xbf16>, vector<8x128xf32> -> vector<8x128xf32>
    %c1_86 = arith.constant 1 : index
    %c0_87 = arith.constant 0 : index
    %93 = tpu.strided_load %arg16[%c1_86, %c0_87] {strides = array<i32: 8, 1>} : memref<64x128xf32, #tpu.memory_space<vmem>>, vector<8x128xf32>
    %94 = arith.truncf %93 : vector<8x128xf32> to vector<8x128xbf16>
    %c1_88 = arith.constant 1 : index
    %c0_89 = arith.constant 0 : index
    %c0_90 = arith.constant 0 : index
    %95 = vector.load %arg6[%c1_88, %c0_89, %c0_90] : memref<5x128x128xbf16, #tpu.memory_space<vmem>>, vector<1x128x128xbf16>
    %96 = vector.shape_cast %95 : vector<1x128x128xbf16> to vector<128x128xbf16>
    %cst_91 = arith.constant dense<0.000000e+00> : vector<8x128xf32>
    %97 = tpu.matmul %94, %96, %cst_91 {dimension_numbers = #tpu.dot_dimension_numbers<[1], [0], [0], [1], [0, 0, 1, 1], [], []>} : vector<8x128xbf16>, vector<128x128xbf16>, vector<8x128xf32> -> vector<8x128xf32>
    %98 = arith.addf %92, %97 : vector<8x128xf32>
    %c2_92 = arith.constant 2 : index
    %c0_93 = arith.constant 0 : index
    %99 = tpu.strided_load %arg16[%c2_92, %c0_93] {strides = array<i32: 8, 1>} : memref<64x128xf32, #tpu.memory_space<vmem>>, vector<8x128xf32>
    %100 = arith.truncf %99 : vector<8x128xf32> to vector<8x128xbf16>
    %c2_94 = arith.constant 2 : index
    %c0_95 = arith.constant 0 : index
    %c0_96 = arith.constant 0 : index
    %101 = vector.load %arg6[%c2_94, %c0_95, %c0_96] : memref<5x128x128xbf16, #tpu.memory_space<vmem>>, vector<1x128x128xbf16>
    %102 = vector.shape_cast %101 : vector<1x128x128xbf16> to vector<128x128xbf16>
    %cst_97 = arith.constant dense<0.000000e+00> : vector<8x128xf32>
    %103 = tpu.matmul %100, %102, %cst_97 {dimension_numbers = #tpu.dot_dimension_numbers<[1], [0], [0], [1], [0, 0, 1, 1], [], []>} : vector<8x128xbf16>, vector<128x128xbf16>, vector<8x128xf32> -> vector<8x128xf32>
    %104 = arith.addf %98, %103 : vector<8x128xf32>
    %c3_98 = arith.constant 3 : index
    %c0_99 = arith.constant 0 : index
    %105 = tpu.strided_load %arg16[%c3_98, %c0_99] {strides = array<i32: 8, 1>} : memref<64x128xf32, #tpu.memory_space<vmem>>, vector<8x128xf32>
    %106 = arith.truncf %105 : vector<8x128xf32> to vector<8x128xbf16>
    %c3_100 = arith.constant 3 : index
    %c0_101 = arith.constant 0 : index
    %c0_102 = arith.constant 0 : index
    %107 = vector.load %arg6[%c3_100, %c0_101, %c0_102] : memref<5x128x128xbf16, #tpu.memory_space<vmem>>, vector<1x128x128xbf16>
    %108 = vector.shape_cast %107 : vector<1x128x128xbf16> to vector<128x128xbf16>
    %cst_103 = arith.constant dense<0.000000e+00> : vector<8x128xf32>
    %109 = tpu.matmul %106, %108, %cst_103 {dimension_numbers = #tpu.dot_dimension_numbers<[1], [0], [0], [1], [0, 0, 1, 1], [], []>} : vector<8x128xbf16>, vector<128x128xbf16>, vector<8x128xf32> -> vector<8x128xf32>
    %110 = arith.addf %104, %109 : vector<8x128xf32>
    %c4_104 = arith.constant 4 : index
    %c0_105 = arith.constant 0 : index
    %111 = tpu.strided_load %arg16[%c4_104, %c0_105] {strides = array<i32: 8, 1>} : memref<64x128xf32, #tpu.memory_space<vmem>>, vector<8x128xf32>
    %112 = arith.truncf %111 : vector<8x128xf32> to vector<8x128xbf16>
    %c4_106 = arith.constant 4 : index
    %c0_107 = arith.constant 0 : index
    %c0_108 = arith.constant 0 : index
    %113 = vector.load %arg6[%c4_106, %c0_107, %c0_108] : memref<5x128x128xbf16, #tpu.memory_space<vmem>>, vector<1x128x128xbf16>
    %114 = vector.shape_cast %113 : vector<1x128x128xbf16> to vector<128x128xbf16>
    %cst_109 = arith.constant dense<0.000000e+00> : vector<8x128xf32>
    %115 = tpu.matmul %112, %114, %cst_109 {dimension_numbers = #tpu.dot_dimension_numbers<[1], [0], [0], [1], [0, 0, 1, 1], [], []>} : vector<8x128xbf16>, vector<128x128xbf16>, vector<8x128xf32> -> vector<8x128xf32>
    %116 = arith.addf %110, %115 : vector<8x128xf32>
    %c0_110 = arith.constant 0 : index
    %c0_111 = arith.constant 0 : index
    %117 = vector.load %arg7[%c0_110, %c0_111] : memref<1x128xf32, #tpu.memory_space<vmem>>, vector<1x128xf32>
    %118 = vector.broadcast %117 : vector<1x128xf32> to vector<8x128xf32>
    %119 = arith.addf %116, %118 : vector<8x128xf32>
    %cst_112 = arith.constant 0.000000e+00 : f32
    %120 = vector.broadcast %cst_112 : f32 to vector<8x128xf32>
    %121 = arith.maximumf %119, %120 : vector<8x128xf32>
    %122 = arith.truncf %121 : vector<8x128xf32> to vector<8x128xbf16>
    %c0_113 = arith.constant 0 : index
    %c0_114 = arith.constant 0 : index
    %123 = vector.load %arg8[%c0_113, %c0_114] : memref<128x128xbf16, #tpu.memory_space<vmem>>, vector<128x128xbf16>
    %cst_115 = arith.constant dense<0.000000e+00> : vector<8x128xf32>
    %124 = tpu.matmul %122, %123, %cst_115 {dimension_numbers = #tpu.dot_dimension_numbers<[1], [0], [0], [1], [0, 0, 1, 1], [], []>} : vector<8x128xbf16>, vector<128x128xbf16>, vector<8x128xf32> -> vector<8x128xf32>
    %c0_116 = arith.constant 0 : index
    %c0_117 = arith.constant 0 : index
    %125 = vector.load %arg9[%c0_116, %c0_117] : memref<1x128xf32, #tpu.memory_space<vmem>>, vector<1x128xf32>
    %126 = vector.broadcast %125 : vector<1x128xf32> to vector<8x128xf32>
    %127 = arith.addf %124, %126 : vector<8x128xf32>
    %cst_118 = arith.constant 0.000000e+00 : f32
    %128 = vector.broadcast %cst_118 : f32 to vector<8x128xf32>
    %129 = arith.maximumf %127, %128 : vector<8x128xf32>
    %130 = arith.truncf %129 : vector<8x128xf32> to vector<8x128xbf16>
    %c0_119 = arith.constant 0 : index
    %c0_120 = arith.constant 0 : index
    %131 = vector.load %arg10[%c0_119, %c0_120] : memref<128x128xbf16, #tpu.memory_space<vmem>>, vector<128x128xbf16>
    %cst_121 = arith.constant dense<0.000000e+00> : vector<8x128xf32>
    %132 = tpu.matmul %130, %131, %cst_121 {dimension_numbers = #tpu.dot_dimension_numbers<[1], [0], [0], [1], [0, 0, 1, 1], [], []>} : vector<8x128xbf16>, vector<128x128xbf16>, vector<8x128xf32> -> vector<8x128xf32>
    %c0_122 = arith.constant 0 : index
    %c0_123 = arith.constant 0 : index
    %133 = vector.load %arg11[%c0_122, %c0_123] : memref<1x128xf32, #tpu.memory_space<vmem>>, vector<1x128xf32>
    %134 = vector.broadcast %133 : vector<1x128xf32> to vector<8x128xf32>
    %135 = arith.addf %132, %134 : vector<8x128xf32>
    %c0_124 = arith.constant 0 : index
    %c0_125 = arith.constant 0 : index
    %136 = vector.load %arg12[%c0_124, %c0_125] : memref<8x128xf32, #tpu.memory_space<vmem>>, vector<8x128xf32>
    tpu.vector_store %arg12[%c0_124, %c0_125], %135 {strides = array<i32>} : memref<8x128xf32, #tpu.memory_space<vmem>>, vector<8x128xf32>,
    return
  }
  func.func @transform_0(%arg0: i32) -> (i32, i32) {
    %c0_i32 = arith.constant 0 : i32
    %c0_i32_0 = arith.constant 0 : i32
    return %arg0, %c0_i32 : i32, i32
  }
  func.func @transform_1(%arg0: i32) -> (i32, i32, i32) {
    %c0_i32 = arith.constant 0 : i32
    %c0_i32_0 = arith.constant 0 : i32
    %c0_i32_1 = arith.constant 0 : i32
    %c0_i32_2 = arith.constant 0 : i32
    return %c0_i32, %c0_i32_0, %c0_i32_1 : i32, i32, i32
  }
  func.func @transform_2(%arg0: i32) -> (i32, i32) {
    %c0_i32 = arith.constant 0 : i32
    %c0_i32_0 = arith.constant 0 : i32
    %c0_i32_1 = arith.constant 0 : i32
    return %c0_i32, %c0_i32_0 : i32, i32
  }
  func.func @transform_3(%arg0: i32) -> (i32, i32, i32) {
    %c0_i32 = arith.constant 0 : i32
    %c0_i32_0 = arith.constant 0 : i32
    %c0_i32_1 = arith.constant 0 : i32
    %c0_i32_2 = arith.constant 0 : i32
    return %c0_i32, %c0_i32_0, %c0_i32_1 : i32, i32, i32
  }
  func.func @transform_4(%arg0: i32) -> (i32, i32) {
    %c0_i32 = arith.constant 0 : i32
    %c0_i32_0 = arith.constant 0 : i32
    %c0_i32_1 = arith.constant 0 : i32
    return %c0_i32, %c0_i32_0 : i32, i32
  }
  func.func @transform_5(%arg0: i32) -> (i32, i32, i32) {
    %c0_i32 = arith.constant 0 : i32
    %c0_i32_0 = arith.constant 0 : i32
    %c0_i32_1 = arith.constant 0 : i32
    %c0_i32_2 = arith.constant 0 : i32
    return %c0_i32, %c0_i32_0, %c0_i32_1 : i32, i32, i32
  }
  func.func @transform_6(%arg0: i32) -> (i32, i32) {
    %c0_i32 = arith.constant 0 : i32
    %c0_i32_0 = arith.constant 0 : i32
    %c0_i32_1 = arith.constant 0 : i32
    return %c0_i32, %c0_i32_0 : i32, i32
  }
  func.func @transform_7(%arg0: i32) -> (i32, i32) {
    %c0_i32 = arith.constant 0 : i32
    %c0_i32_0 = arith.constant 0 : i32
    %c0_i32_1 = arith.constant 0 : i32
    return %c0_i32, %c0_i32_0 : i32, i32
  }
  func.func @transform_8(%arg0: i32) -> (i32, i32) {
    %c0_i32 = arith.constant 0 : i32
    %c0_i32_0 = arith.constant 0 : i32
    %c0_i32_1 = arith.constant 0 : i32
    return %c0_i32, %c0_i32_0 : i32, i32
  }
  func.func @transform_9(%arg0: i32) -> (i32, i32) {
    %c0_i32 = arith.constant 0 : i32
    %c0_i32_0 = arith.constant 0 : i32
    %c0_i32_1 = arith.constant 0 : i32
    return %c0_i32, %c0_i32_0 : i32, i32
  }
  func.func @transform_10(%arg0: i32) -> (i32, i32) {
    %c0_i32 = arith.constant 0 : i32
    %c0_i32_0 = arith.constant 0 : i32
    %c0_i32_1 = arith.constant 0 : i32
    return %c0_i32, %c0_i32_0 : i32, i32
  }
  func.func @transform_11(%arg0: i32) -> (i32, i32) {
    %c0_i32 = arith.constant 0 : i32
    %c0_i32_0 = arith.constant 0 : i32
    return %arg0, %c0_i32 : i32, i32
  }
}

</mosaic_0001>

<llo_original>
// kernel: net_forward.1
$region0: #{net_forward.1}
  #allocation0 [shape = 'u32[]', space=smem, size = 0x4, offset = 0x4, fixed_abs, tag = 'smem constant byte address 0x4 - core index']
  #allocation1 [shape = 'u32[144,128]{1,0:T(1,128)}', space=vmem, size = 0x12000, scoped, tag = 'internal scratch']
  #allocation2 [shape = 'f32[256,128]{1,0:T(8,128)}', space=vmem, size = 0x20000, scoped, tag = 'scratch operand']
  #allocation3 [shape = 'f32[128,128]{1,0:T(8,128)}', space=vmem, size = 0x10000, scoped, tag = 'scratch operand']
  #allocation4 [shape = 'f32[128,128]{1,0:T(8,128)}', space=vmem, size = 0x10000, scoped, tag = 'scratch operand']
  #allocation5 [shape = 'f32[64,128]{1,0:T(8,128)}', space=vmem, size = 0x8000, scoped, tag = 'scratch operand']
  %s0 = inlined_call_operand.vmem [shape: f32[256,128], index: 0, kind: input, shape index: {}]
  %s1 = inlined_call_operand.vmem [shape: bf16[5,128,256], index: 1, kind: input, shape index: {}]
  %s2 = inlined_call_operand.vmem [shape: f32[1,128], index: 2, kind: input, shape index: {}]
  %s3 = inlined_call_operand.vmem [shape: bf16[5,128,256], index: 3, kind: input, shape index: {}]
  %s4 = inlined_call_operand.vmem [shape: f32[1,128], index: 4, kind: input, shape index: {}]
  %s5 = inlined_call_operand.vmem [shape: bf16[5,128,128], index: 5, kind: input, shape index: {}]
  %s6 = inlined_call_operand.vmem [shape: f32[1,128], index: 6, kind: input, shape index: {}]
  %s7 = inlined_call_operand.vmem [shape: bf16[128,128], index: 7, kind: input, shape index: {}]
  %s8 = inlined_call_operand.vmem [shape: f32[1,128], index: 8, kind: input, shape index: {}]
  %s9 = inlined_call_operand.vmem [shape: bf16[128,128], index: 9, kind: input, shape index: {}]
  %s10 = inlined_call_operand.vmem [shape: f32[1,128], index: 10, kind: input, shape index: {}]
  %s11 = inlined_call_operand.vmem [shape: f32[8,128], index: 11, kind: output, shape index: {}]
  %s12 = sld [smem:[#allocation0]]
  $region54: #{net_forward.1} parent=0
    _
  %s14 = ssub.s32 1, %s12
  %s15 = scalar_select 0, %s14, %s12
  // Predicated region
  $region2: #{net_forward.1} parent=0 // pred_check
    _
  $region3: #{net_forward.1} parent=0 // pred_check_branch
    %17 = sbr.rel (0) target = $region5
  $region4: #{net_forward.1} parent=0 // pred_region
    _
  $region5: #{net_forward.1} parent=0 // pred_fallthru
    _
  // Predicated region
  $region6: #{net_forward.1} parent=0 // pred_check
    _
  $region7: #{net_forward.1} parent=0 // pred_check_branch
    %19 = sbr.rel (0) target = $region9
  $region8: #{net_forward.1} parent=0 // pred_region
    _
  $region9: #{net_forward.1} parent=0 // pred_fallthru
    _
  // Predicated region
  $region10: #{net_forward.1} parent=0 // pred_check
    _
  $region11: #{net_forward.1} parent=0 // pred_check_branch
    %21 = sbr.rel (0) target = $region13
  $region12: #{net_forward.1} parent=0 // pred_region
    _
  $region13: #{net_forward.1} parent=0 // pred_fallthru
    _
  // Predicated region
  $region14: #{net_forward.1} parent=0 // pred_check
    _
  $region15: #{net_forward.1} parent=0 // pred_check_branch
    %23 = sbr.rel (0) target = $region17
  $region16: #{net_forward.1} parent=0 // pred_region
    _
  $region17: #{net_forward.1} parent=0 // pred_fallthru
    _
  // Predicated region
  $region18: #{net_forward.1} parent=0 // pred_check
    _
  $region19: #{net_forward.1} parent=0 // pred_check_branch
    %25 = sbr.rel (0) target = $region21
  $region20: #{net_forward.1} parent=0 // pred_region
    _
  $region21: #{net_forward.1} parent=0 // pred_fallthru
    _
  // Predicated region
  $region22: #{net_forward.1} parent=0 // pred_check
    _
  $region23: #{net_forward.1} parent=0 // pred_check_branch
    %27 = sbr.rel (0) target = $region25
  $region24: #{net_forward.1} parent=0 // pred_region
    _
  $region25: #{net_forward.1} parent=0 // pred_fallthru
    _
  // Predicated region
  $region26: #{net_forward.1} parent=0 // pred_check
    _
  $region27: #{net_forward.1} parent=0 // pred_check_branch
    %29 = sbr.rel (0) target = $region29
  $region28: #{net_forward.1} parent=0 // pred_region
    _
  $region29: #{net_forward.1} parent=0 // pred_fallthru
    _
  // Predicated region
  $region30: #{net_forward.1} parent=0 // pred_check
    _
  $region31: #{net_forward.1} parent=0 // pred_check_branch
    %31 = sbr.rel (0) target = $region33
  $region32: #{net_forward.1} parent=0 // pred_region
    _
  $region33: #{net_forward.1} parent=0 // pred_fallthru
    _
  // Predicated region
  $region34: #{net_forward.1} parent=0 // pred_check
    _
  $region35: #{net_forward.1} parent=0 // pred_check_branch
    %33 = sbr.rel (0) target = $region37
  $region36: #{net_forward.1} parent=0 // pred_region
    _
  $region37: #{net_forward.1} parent=0 // pred_fallthru
    _
  // Predicated region
  $region38: #{net_forward.1} parent=0 // pred_check
    _
  $region39: #{net_forward.1} parent=0 // pred_check_branch
    %35 = sbr.rel (0) target = $region41
  $region40: #{net_forward.1} parent=0 // pred_region
    _
  $region41: #{net_forward.1} parent=0 // pred_fallthru
    _
  // Predicated region
  $region42: #{net_forward.1} parent=0 // pred_check
    _
  $region43: #{net_forward.1} parent=0 // pred_check_branch
    %37 = sbr.rel (0) target = $region45
  $region44: #{net_forward.1} parent=0 // pred_region
    _
  $region45: #{net_forward.1} parent=0 // pred_fallthru
    _
  %39 = vst [vmem:[#allocation2 + $0xfc] sm:$0xf] 0.0
  %40 = vst [vmem:[#allocation4 + $0x7c] sm:$0xf] 0.0
  %v41 = vld [vmem:[%s0] sm:$0xff]
  %v42 = vld [vmem:[%s0 + $0x8] sm:$0xff]
  %v43 = vld [vmem:[%s0 + $0x10] sm:$0xff]
  %v44 = vld [vmem:[%s0 + $0x18] sm:$0xff]
  %v45 = vld [vmem:[%s0 + $0x20] sm:$0xff]
  %v46 = vld [vmem:[%s0 + $0x28] sm:$0xff]
  %v47 = vld [vmem:[%s0 + $0x30] sm:$0xff]
  %v48 = vld [vmem:[%s0 + $0x38] sm:$0xff]
  %v49 = vld [vmem:[%s0 + $0x40] sm:$0xff]
  %v50 = vld [vmem:[%s0 + $0x48] sm:$0xff]
  %v51 = vld [vmem:[%s0 + $0x50] sm:$0xff]
  %v52 = vld [vmem:[%s0 + $0x58] sm:$0xff]
  %v53 = vld [vmem:[%s0 + $0x60] sm:$0xff]
  %v54 = vld [vmem:[%s0 + $0x68] sm:$0xff]
  %v55 = vld [vmem:[%s0 + $0x70] sm:$0xff]
  %v56 = vld [vmem:[%s0 + $0x78] sm:$0xff]
  %v57 = vld [vmem:[%s0 + $0x80] sm:$0xff]
  %v58 = vld [vmem:[%s0 + $0x88] sm:$0xff]
  %v59 = vld [vmem:[%s0 + $0x90] sm:$0xff]
  %v60 = vld [vmem:[%s0 + $0x98] sm:$0xff]
  %v61 = vld [vmem:[%s0 + $0xa0] sm:$0xff]
  %v62 = vld [vmem:[%s0 + $0xa8] sm:$0xff]
  %v63 = vld [vmem:[%s0 + $0xb0] sm:$0xff]
  %v64 = vld [vmem:[%s0 + $0xb8] sm:$0xff]
  %v65 = vld [vmem:[%s0 + $0xc0] sm:$0xff]
  %v66 = vld [vmem:[%s0 + $0xc8] sm:$0xff]
  %v67 = vld [vmem:[%s0 + $0xd0] sm:$0xff]
  %v68 = vld [vmem:[%s0 + $0xd8] sm:$0xff]
  %v69 = vld [vmem:[%s0 + $0xe0] sm:$0xff]
  %v70 = vld [vmem:[%s0 + $0xe8] sm:$0xff]
  %v71 = vld [vmem:[%s0 + $0xf0] sm:$0xff]
  %v72 = vld [vmem:[%s0 + $0xf8] sm:$0xf]
  %v73 = vpack.c.bf16 %v42, %v41
  %v74 = vpack.c.bf16 %v44, %v43
  %v75 = vpack.c.bf16 %v46, %v45
  %v76 = vpack.c.bf16 %v48, %v47
  %v77 = vpack.c.bf16 %v50, %v49
  %v78 = vpack.c.bf16 %v52, %v51
  %v79 = vpack.c.bf16 %v54, %v53
  %v80 = vpack.c.bf16 %v56, %v55
  %v81 = vpack.c.bf16 %v58, %v57
  %v82 = vpack.c.bf16 %v60, %v59
  %v83 = vpack.c.bf16 %v62, %v61
  %v84 = vpack.c.bf16 %v64, %v63
  %v85 = vpack.c.bf16 %v66, %v65
  %v86 = vpack.c.bf16 %v68, %v67
  %v87 = vpack.c.bf16 %v70, %v69
  %v88 = vpack.c.bf16 %v72, %v71
  %v89 = vld [vmem:[%s1] sm:$0xff]
  %v90 = vld [vmem:[%s1 + $0x8] sm:$0xff]
  %v91 = vld [vmem:[%s1 + $0x10] sm:$0xff]
  %v92 = vld [vmem:[%s1 + $0x18] sm:$0xff]
  %v93 = vld [vmem:[%s1 + $0x20] sm:$0xff]
  %v94 = vld [vmem:[%s1 + $0x28] sm:$0xff]
  %v95 = vld [vmem:[%s1 + $0x30] sm:$0xff]
  %v96 = vld [vmem:[%s1 + $0x38] sm:$0xff]
  %v97 = vld [vmem:[%s1 + $0x40] sm:$0xff]
  %v98 = vld [vmem:[%s1 + $0x48] sm:$0xff]
  %v99 = vld [vmem:[%s1 + $0x50] sm:$0xff]
  %v100 = vld [vmem:[%s1 + $0x58] sm:$0xff]
  %v101 = vld [vmem:[%s1 + $0x60] sm:$0xff]
  %v102 = vld [vmem:[%s1 + $0x68] sm:$0xff]
  %v103 = vld [vmem:[%s1 + $0x70] sm:$0xff]
  %v104 = vld [vmem:[%s1 + $0x78] sm:$0xff]
  %v105 = vld [vmem:[%s0 + $0x1] sm:$0xff]
  %v106 = vld [vmem:[%s0 + $0x9] sm:$0xff]
  %v107 = vld [vmem:[%s0 + $0x11] sm:$0xff]
  %v108 = vld [vmem:[%s0 + $0x19] sm:$0xff]
  %v109 = vld [vmem:[%s0 + $0x21] sm:$0xff]
  %v110 = vld [vmem:[%s0 + $0x29] sm:$0xff]
  %v111 = vld [vmem:[%s0 + $0x31] sm:$0xff]
  %v112 = vld [vmem:[%s0 + $0x39] sm:$0xff]
  %v113 = vld [vmem:[%s0 + $0x41] sm:$0xff]
  %v114 = vld [vmem:[%s0 + $0x49] sm:$0xff]
  %v115 = vld [vmem:[%s0 + $0x51] sm:$0xff]
  %v116 = vld [vmem:[%s0 + $0x59] sm:$0xff]
  %v117 = vld [vmem:[%s0 + $0x61] sm:$0xff]
  %v118 = vld [vmem:[%s0 + $0x69] sm:$0xff]
  %v119 = vld [vmem:[%s0 + $0x71] sm:$0xff]
  %v120 = vld [vmem:[%s0 + $0x79] sm:$0xff]
  %v121 = vld [vmem:[%s0 + $0x81] sm:$0xff]
  %v122 = vld [vmem:[%s0 + $0x89] sm:$0xff]
  %v123 = vld [vmem:[%s0 + $0x91] sm:$0xff]
  %v124 = vld [vmem:[%s0 + $0x99] sm:$0xff]
  %v125 = vld [vmem:[%s0 + $0xa1] sm:$0xff]
  %v126 = vld [vmem:[%s0 + $0xa9] sm:$0xff]
  %v127 = vld [vmem:[%s0 + $0xb1] sm:$0xff]
  %v128 = vld [vmem:[%s0 + $0xb9] sm:$0xff]
  %v129 = vld [vmem:[%s0 + $0xc1] sm:$0xff]
  %v130 = vld [vmem:[%s0 + $0xc9] sm:$0xff]
  %v131 = vld [vmem:[%s0 + $0xd1] sm:$0xff]
  %v132 = vld [vmem:[%s0 + $0xd9] sm:$0xff]
  %v133 = vld [vmem:[%s0 + $0xe1] sm:$0xff]
  %v134 = vld [vmem:[%s0 + $0xe9] sm:$0xff]
  %v135 = vld [vmem:[%s0 + $0xf1] sm:$0xff]
  %v136 = vld [vmem:[%s0 + $0xf9] sm:$0xf]
  %v137 = vpack.c.bf16 %v106, %v105
  %v138 = vpack.c.bf16 %v108, %v107
  %v139 = vpack.c.bf16 %v110, %v109
  %v140 = vpack.c.bf16 %v112, %v111
  %v141 = vpack.c.bf16 %v114, %v113
  %v142 = vpack.c.bf16 %v116, %v115
  %v143 = vpack.c.bf16 %v118, %v117
  %v144 = vpack.c.bf16 %v120, %v119
  %v145 = vpack.c.bf16 %v122, %v121
  %v146 = vpack.c.bf16 %v124, %v123
  %v147 = vpack.c.bf16 %v126, %v125
  %v148 = vpack.c.bf16 %v128, %v127
  %v149 = vpack.c.bf16 %v130, %v129
  %v150 = vpack.c.bf16 %v132, %v131
  %v151 = vpack.c.bf16 %v134, %v133
  %v152 = vpack.c.bf16 %v136, %v135
  %s153 = scalar_lea.vmem %s1, 128
  %v154 = vld [vmem:[%s153] sm:$0xff]
  %v155 = vld [vmem:[%s153 + $0x8] sm:$0xff]
  %v156 = vld [vmem:[%s153 + $0x10] sm:$0xff]
  %v157 = vld [vmem:[%s153 + $0x18] sm:$0xff]
  %v158 = vld [vmem:[%s153 + $0x20] sm:$0xff]
  %v159 = vld [vmem:[%s153 + $0x28] sm:$0xff]
  %v160 = vld [vmem:[%s153 + $0x30] sm:$0xff]
  %v161 = vld [vmem:[%s153 + $0x38] sm:$0xff]
  %v162 = vld [vmem:[%s153 + $0x40] sm:$0xff]
  %v163 = vld [vmem:[%s153 + $0x48] sm:$0xff]
  %v164 = vld [vmem:[%s153 + $0x50] sm:$0xff]
  %v165 = vld [vmem:[%s153 + $0x58] sm:$0xff]
  %v166 = vld [vmem:[%s153 + $0x60] sm:$0xff]
  %v167 = vld [vmem:[%s153 + $0x68] sm:$0xff]
  %v168 = vld [vmem:[%s153 + $0x70] sm:$0xff]
  %v169 = vld [vmem:[%s153 + $0x78] sm:$0xff]
  %v186 = vunpack.c.l.b16 %v154
  %v187 = vunpack.c.h.b16 %v154
  %v188 = vunpack.c.l.b16 %v155
  %v189 = vunpack.c.h.b16 %v155
  %v190 = vunpack.c.l.b16 %v156
  %v191 = vunpack.c.h.b16 %v156
  %v192 = vunpack.c.l.b16 %v157
  %v193 = vunpack.c.h.b16 %v157
  %v194 = vunpack.c.l.b16 %v158
  %v195 = vunpack.c.h.b16 %v158
  %v196 = vunpack.c.l.b16 %v159
  %v197 = vunpack.c.h.b16 %v159
  %v198 = vunpack.c.l.b16 %v160
  %v199 = vunpack.c.h.b16 %v160
  %v200 = vunpack.c.l.b16 %v161
  %v201 = vunpack.c.h.b16 %v161
  %v202 = vunpack.c.l.b16 %v162
  %v203 = vunpack.c.h.b16 %v162
  %v204 = vunpack.c.l.b16 %v163
  %v205 = vunpack.c.h.b16 %v163
  %v206 = vunpack.c.l.b16 %v164
  %v207 = vunpack.c.h.b16 %v164
  %v208 = vunpack.c.l.b16 %v165
  %v209 = vunpack.c.h.b16 %v165
  %v210 = vunpack.c.l.b16 %v166
  %v211 = vunpack.c.h.b16 %v166
  %v212 = vunpack.c.l.b16 %v167
  %v213 = vunpack.c.h.b16 %v167
  %v214 = vunpack.c.l.b16 %v168
  %v215 = vunpack.c.h.b16 %v168
  %v216 = vunpack.c.l.b16 %v169
  %v217 = vunpack.c.h.b16 %v169
  %v218 = vpack.c.b16 %v188, %v186
  %v219 = vpack.c.b16 %v189, %v187
  %v220 = vpack.c.b16 %v192, %v190
  %v221 = vpack.c.b16 %v193, %v191
  %v222 = vpack.c.b16 %v196, %v194
  %v223 = vpack.c.b16 %v197, %v195
  %v224 = vpack.c.b16 %v200, %v198
  %v225 = vpack.c.b16 %v201, %v199
  %v226 = vpack.c.b16 %v204, %v202
  %v227 = vpack.c.b16 %v205, %v203
  %v228 = vpack.c.b16 %v208, %v206
  %v229 = vpack.c.b16 %v209, %v207
  %v230 = vpack.c.b16 %v212, %v210
  %v231 = vpack.c.b16 %v213, %v211
  %v232 = vpack.c.b16 %v216, %v214
  %v233 = vpack.c.b16 %v217, %v215
  %250 = vmatprep.subr.bf16.mxu0 %v233
  %251 = vmatpush1.bf16.msra.mxu0 %v232
  %252 = vmatprep.subr.bf16.mxu0 %v231
  %253 = vmatpush1.bf16.msra.mxu0 %v230
  %254 = vmatprep.subr.bf16.mxu0 %v229
  %255 = vmatpush1.bf16.msra.mxu0 %v228
  %256 = vmatprep.subr.bf16.mxu0 %v227
  %257 = vmatpush1.bf16.msra.mxu0 %v226
  %258 = vmatprep.subr.bf16.mxu0 %v225
  %259 = vmatpush1.bf16.msra.mxu0 %v224
  %260 = vmatprep.subr.bf16.mxu0 %v223
  %261 = vmatpush1.bf16.msra.mxu0 %v222
  %262 = vmatprep.subr.bf16.mxu0 %v221
  %263 = vmatpush1.bf16.msra.mxu0 %v220
  %264 = vmatprep.subr.bf16.mxu0 %v219
  %265 = vmatpush1.bf16.msra.mxu0 %v218
  %266 = vmatprep.subr.bf16.mxu0 0
  %267 = vmatpush2.bf16.msra.mxu0 0
  %268 = vmatprep.subr.bf16.mxu0 0
  %269 = vmatpush2.bf16.msra.mxu0 0
  %270 = vmatprep.subr.bf16.mxu0 0
  %271 = vmatpush2.bf16.msra.mxu0 0
  %272 = vmatprep.subr.bf16.mxu0 0
  %273 = vmatpush2.bf16.msra.mxu0 0
  %274 = vmatprep.subr.bf16.mxu0 0
  %275 = vmatpush2.bf16.msra.mxu0 0
  %276 = vmatprep.subr.bf16.mxu0 0
  %277 = vmatpush2.bf16.msra.mxu0 0
  %278 = vmatprep.subr.bf16.mxu0 0
  %279 = vmatpush2.bf16.msra.mxu0 0
  %280 = vmatprep.subr.bf16.mxu0 0
  %281 = vmatpush2.bf16.msra.mxu0 0
  %282 = vmatprep.mubr.bf16.mxu0 0
  %283 = vmatmul.mubr.bf16.gmra.mxu0 %v137
  %v284 = vpop.f32.mrf.mxu0
  %v285 = vadd.f32 0.0, %v284
  %v286 = vpop.f32.mrf.mxu0
  %v287 = vadd.f32 0.0, %v286
  %v288 = vpop.f32.mrf.mxu0
  %v289 = vadd.f32 0.0, %v288
  %v290 = vpop.f32.mrf.mxu0
  %v291 = vadd.f32 0.0, %v290
  %292 = vmatprep.mubr.bf16.mxu0 0
  %293 = vmatmul.mubr.bf16.gmra.mxu0 %v138
  %v294 = vpop.f32.mrf.mxu0
  %v295 = vadd.f32 0.0, %v294
  %v296 = vpop.f32.mrf.mxu0
  %v297 = vadd.f32 0.0, %v296
  %v298 = vpop.f32.mrf.mxu0
  %v299 = vadd.f32 0.0, %v298
  %v300 = vpop.f32.mrf.mxu0
  %v301 = vadd.f32 0.0, %v300
  %302 = vmatprep.mubr.bf16.mxu0 0
  %303 = vmatmul.mubr.bf16.gmra.mxu0 %v139
  %v304 = vpop.f32.mrf.mxu0
  %v305 = vadd.f32 0.0, %v304
  %v306 = vpop.f32.mrf.mxu0
  %v307 = vadd.f32 0.0, %v306
  %v308 = vpop.f32.mrf.mxu0
  %v309 = vadd.f32 0.0, %v308
  %v310 = vpop.f32.mrf.mxu0
  %v311 = vadd.f32 0.0, %v310
  %312 = vmatprep.mubr.bf16.mxu0 0
  %313 = vmatmul.mubr.bf16.gmra.mxu0 %v140
  %v314 = vpop.f32.mrf.mxu0
  %v315 = vadd.f32 0.0, %v314
  %v316 = vpop.f32.mrf.mxu0
  %v317 = vadd.f32 0.0, %v316
  %v318 = vpop.f32.mrf.mxu0
  %v319 = vadd.f32 0.0, %v318
  %v320 = vpop.f32.mrf.mxu0
  %v321 = vadd.f32 0.0, %v320
  %322 = vmatprep.mubr.bf16.mxu0 0
  %323 = vmatmul.mubr.bf16.gmra.mxu0 %v141
  %v324 = vpop.f32.mrf.mxu0
  %v325 = vadd.f32 0.0, %v324
  %v326 = vpop.f32.mrf.mxu0
  %v327 = vadd.f32 0.0, %v326
  %v328 = vpop.f32.mrf.mxu0
  %v329 = vadd.f32 0.0, %v328
  %v330 = vpop.f32.mrf.mxu0
  %v331 = vadd.f32 0.0, %v330
  %332 = vmatprep.mubr.bf16.mxu0 0
  %333 = vmatmul.mubr.bf16.gmra.mxu0 %v142
  %v334 = vpop.f32.mrf.mxu0
  %v335 = vadd.f32 0.0, %v334
  %v336 = vpop.f32.mrf.mxu0
  %v337 = vadd.f32 0.0, %v336
  %v338 = vpop.f32.mrf.mxu0
  %v339 = vadd.f32 0.0, %v338
  %v340 = vpop.f32.mrf.mxu0
  %v341 = vadd.f32 0.0, %v340
  %342 = vmatprep.mubr.bf16.mxu0 0
  %343 = vmatmul.mubr.bf16.gmra.mxu0 %v143
  %v344 = vpop.f32.mrf.mxu0
  %v345 = vadd.f32 0.0, %v344
  %v346 = vpop.f32.mrf.mxu0
  %v347 = vadd.f32 0.0, %v346
  %v348 = vpop.f32.mrf.mxu0
  %v349 = vadd.f32 0.0, %v348
  %v350 = vpop.f32.mrf.mxu0
  %v351 = vadd.f32 0.0, %v350
  %352 = vmatprep.mubr.bf16.mxu0 0
  %353 = vmatmul.mubr.bf16.gmra.mxu0 %v144
  %v354 = vpop.f32.mrf.mxu0
  %v355 = vadd.f32 0.0, %v354
  %v356 = vpop.f32.mrf.mxu0
  %v357 = vadd.f32 0.0, %v356
  %v358 = vpop.f32.mrf.mxu0
  %v359 = vadd.f32 0.0, %v358
  %v360 = vpop.f32.mrf.mxu0
  %v361 = vadd.f32 0.0, %v360
  %362 = vmatprep.mubr.bf16.mxu0 0
  %363 = vmatmul.mubr.bf16.gmra.mxu0 %v145
  %v364 = vpop.f32.mrf.mxu0
  %v365 = vadd.f32 0.0, %v364
  %v366 = vpop.f32.mrf.mxu0
  %v367 = vadd.f32 0.0, %v366
  %v368 = vpop.f32.mrf.mxu0
  %v369 = vadd.f32 0.0, %v368
  %v370 = vpop.f32.mrf.mxu0
  %v371 = vadd.f32 0.0, %v370
  %372 = vmatprep.mubr.bf16.mxu0 0
  %373 = vmatmul.mubr.bf16.gmra.mxu0 %v146
  %v374 = vpop.f32.mrf.mxu0
  %v375 = vadd.f32 0.0, %v374
  %v376 = vpop.f32.mrf.mxu0
  %v377 = vadd.f32 0.0, %v376
  %v378 = vpop.f32.mrf.mxu0
  %v379 = vadd.f32 0.0, %v378
  %v380 = vpop.f32.mrf.mxu0
  %v381 = vadd.f32 0.0, %v380
  %382 = vmatprep.mubr.bf16.mxu0 0
  %383 = vmatmul.mubr.bf16.gmra.mxu0 %v147
  %v384 = vpop.f32.mrf.mxu0
  %v385 = vadd.f32 0.0, %v384
  %v386 = vpop.f32.mrf.mxu0
  %v387 = vadd.f32 0.0, %v386
  %v388 = vpop.f32.mrf.mxu0
  %v389 = vadd.f32 0.0, %v388
  %v390 = vpop.f32.mrf.mxu0
  %v391 = vadd.f32 0.0, %v390
  %392 = vmatprep.mubr.bf16.mxu0 0
  %393 = vmatmul.mubr.bf16.gmra.mxu0 %v148
  %v394 = vpop.f32.mrf.mxu0
  %v395 = vadd.f32 0.0, %v394
  %v396 = vpop.f32.mrf.mxu0
  %v397 = vadd.f32 0.0, %v396
  %v398 = vpop.f32.mrf.mxu0
  %v399 = vadd.f32 0.0, %v398
  %v400 = vpop.f32.mrf.mxu0
  %v401 = vadd.f32 0.0, %v400
  %402 = vmatprep.mubr.bf16.mxu0 0
  %403 = vmatmul.mubr.bf16.gmra.mxu0 %v149
  %v404 = vpop.f32.mrf.mxu0
  %v405 = vadd.f32 0.0, %v404
  %v406 = vpop.f32.mrf.mxu0
  %v407 = vadd.f32 0.0, %v406
  %v408 = vpop.f32.mrf.mxu0
  %v409 = vadd.f32 0.0, %v408
  %v410 = vpop.f32.mrf.mxu0
  %v411 = vadd.f32 0.0, %v410
  %412 = vmatprep.mubr.bf16.mxu0 0
  %413 = vmatmul.mubr.bf16.gmra.mxu0 %v150
  %v414 = vpop.f32.mrf.mxu0
  %v415 = vadd.f32 0.0, %v414
  %v416 = vpop.f32.mrf.mxu0
  %v417 = vadd.f32 0.0, %v416
  %v418 = vpop.f32.mrf.mxu0
  %v419 = vadd.f32 0.0, %v418
  %v420 = vpop.f32.mrf.mxu0
  %v421 = vadd.f32 0.0, %v420
  %422 = vmatprep.mubr.bf16.mxu0 0
  %423 = vmatmul.mubr.bf16.gmra.mxu0 %v151
  %v424 = vpop.f32.mrf.mxu0
  %v425 = vadd.f32 0.0, %v424
  %v426 = vpop.f32.mrf.mxu0
  %v427 = vadd.f32 0.0, %v426
  %v428 = vpop.f32.mrf.mxu0
  %v429 = vadd.f32 0.0, %v428
  %v430 = vpop.f32.mrf.mxu0
  %v431 = vadd.f32 0.0, %v430
  %432 = vmatprep.mubr.bf16.mxu0 0
  %433 = vmatmul.mubr.bf16.gmra.mxu0 %v152
  %v434 = vpop.f32.mrf.mxu0
  %v435 = vadd.f32 0.0, %v434
  %v436 = vpop.f32.mrf.mxu0
  %v437 = vadd.f32 0.0, %v436
  %v438 = vpop.f32.mrf.mxu0
  %v439 = vadd.f32 0.0, %v438
  %v440 = vpop.f32.mrf.mxu0
  %v441 = vadd.f32 0.0, %v440
  %442 = vdwg.mxu0
  %v459 = vunpack.c.l.b16 %v89
  %v460 = vunpack.c.h.b16 %v89
  %v461 = vunpack.c.l.b16 %v90
  %v462 = vunpack.c.h.b16 %v90
  %v463 = vunpack.c.l.b16 %v91
  %v464 = vunpack.c.h.b16 %v91
  %v465 = vunpack.c.l.b16 %v92
  %v466 = vunpack.c.h.b16 %v92
  %v467 = vunpack.c.l.b16 %v93
  %v468 = vunpack.c.h.b16 %v93
  %v469 = vunpack.c.l.b16 %v94
  %v470 = vunpack.c.h.b16 %v94
  %v471 = vunpack.c.l.b16 %v95
  %v472 = vunpack.c.h.b16 %v95
  %v473 = vunpack.c.l.b16 %v96
  %v474 = vunpack.c.h.b16 %v96
  %v475 = vunpack.c.l.b16 %v97
  %v476 = vunpack.c.h.b16 %v97
  %v477 = vunpack.c.l.b16 %v98
  %v478 = vunpack.c.h.b16 %v98
  %v479 = vunpack.c.l.b16 %v99
  %v480 = vunpack.c.h.b16 %v99
  %v481 = vunpack.c.l.b16 %v100
  %v482 = vunpack.c.h.b16 %v100
  %v483 = vunpack.c.l.b16 %v101
  %v484 = vunpack.c.h.b16 %v101
  %v485 = vunpack.c.l.b16 %v102
  %v486 = vunpack.c.h.b16 %v102
  %v487 = vunpack.c.l.b16 %v103
  %v488 = vunpack.c.h.b16 %v103
  %v489 = vunpack.c.l.b16 %v104
  %v490 = vunpack.c.h.b16 %v104
  %v491 = vpack.c.b16 %v461, %v459
  %v492 = vpack.c.b16 %v462, %v460
  %v493 = vpack.c.b16 %v465, %v463
  %v494 = vpack.c.b16 %v466, %v464
  %v495 = vpack.c.b16 %v469, %v467
  %v496 = vpack.c.b16 %v470, %v468
  %v497 = vpack.c.b16 %v473, %v471
  %v498 = vpack.c.b16 %v474, %v472
  %v499 = vpack.c.b16 %v477, %v475
  %v500 = vpack.c.b16 %v478, %v476
  %v501 = vpack.c.b16 %v481, %v479
  %v502 = vpack.c.b16 %v482, %v480
  %v503 = vpack.c.b16 %v485, %v483
  %v504 = vpack.c.b16 %v486, %v484
  %v505 = vpack.c.b16 %v489, %v487
  %v506 = vpack.c.b16 %v490, %v488
  %523 = vmatprep.subr.bf16.mxu0 %v506
  %524 = vmatpush1.bf16.msra.mxu0 %v505
  %525 = vmatprep.subr.bf16.mxu0 %v504
  %526 = vmatpush1.bf16.msra.mxu0 %v503
  %527 = vmatprep.subr.bf16.mxu0 %v502
  %528 = vmatpush1.bf16.msra.mxu0 %v501
  %529 = vmatprep.subr.bf16.mxu0 %v500
  %530 = vmatpush1.bf16.msra.mxu0 %v499
  %531 = vmatprep.subr.bf16.mxu0 %v498
  %532 = vmatpush1.bf16.msra.mxu0 %v497
  %533 = vmatprep.subr.bf16.mxu0 %v496
  %534 = vmatpush1.bf16.msra.mxu0 %v495
  %535 = vmatprep.subr.bf16.mxu0 %v494
  %536 = vmatpush1.bf16.msra.mxu0 %v493
  %537 = vmatprep.subr.bf16.mxu0 %v492
  %538 = vmatpush1.bf16.msra.mxu0 %v491
  %539 = vmatprep.subr.bf16.mxu0 0
  %540 = vmatpush2.bf16.msra.mxu0 0
  %541 = vmatprep.subr.bf16.mxu0 0
  %542 = vmatpush2.bf16.msra.mxu0 0
  %543 = vmatprep.subr.bf16.mxu0 0
  %544 = vmatpush2.bf16.msra.mxu0 0
  %545 = vmatprep.subr.bf16.mxu0 0
  %546 = vmatpush2.bf16.msra.mxu0 0
  %547 = vmatprep.subr.bf16.mxu0 0
  %548 = vmatpush2.bf16.msra.mxu0 0
  %549 = vmatprep.subr.bf16.mxu0 0
  %550 = vmatpush2.bf16.msra.mxu0 0
  %551 = vmatprep.subr.bf16.mxu0 0
  %552 = vmatpush2.bf16.msra.mxu0 0
  %553 = vmatprep.subr.bf16.mxu0 0
  %554 = vmatpush2.bf16.msra.mxu0 0
  %555 = vmatprep.mubr.bf16.mxu0 0
  %556 = vmatmul.mubr.bf16.gmra.mxu0 %v73
  %v557 = vpop.f32.mrf.mxu0
  %v558 = vadd.f32 %v285, %v557
  %v559 = vpop.f32.mrf.mxu0
  %v560 = vadd.f32 %v287, %v559
  %v561 = vpop.f32.mrf.mxu0
  %v562 = vadd.f32 %v289, %v561
  %v563 = vpop.f32.mrf.mxu0
  %v564 = vadd.f32 %v291, %v563
  %565 = vmatprep.mubr.bf16.mxu0 0
  %566 = vmatmul.mubr.bf16.gmra.mxu0 %v74
  %v567 = vpop.f32.mrf.mxu0
  %v568 = vadd.f32 %v295, %v567
  %v569 = vpop.f32.mrf.mxu0
  %v570 = vadd.f32 %v297, %v569
  %v571 = vpop.f32.mrf.mxu0
  %v572 = vadd.f32 %v299, %v571
  %v573 = vpop.f32.mrf.mxu0
  %v574 = vadd.f32 %v301, %v573
  %575 = vmatprep.mubr.bf16.mxu0 0
  %576 = vmatmul.mubr.bf16.gmra.mxu0 %v75
  %v577 = vpop.f32.mrf.mxu0
  %v578 = vadd.f32 %v305, %v577
  %v579 = vpop.f32.mrf.mxu0
  %v580 = vadd.f32 %v307, %v579
  %v581 = vpop.f32.mrf.mxu0
  %v582 = vadd.f32 %v309, %v581
  %v583 = vpop.f32.mrf.mxu0
  %v584 = vadd.f32 %v311, %v583
  %585 = vmatprep.mubr.bf16.mxu0 0
  %586 = vmatmul.mubr.bf16.gmra.mxu0 %v76
  %v587 = vpop.f32.mrf.mxu0
  %v588 = vadd.f32 %v315, %v587
  %v589 = vpop.f32.mrf.mxu0
  %v590 = vadd.f32 %v317, %v589
  %v591 = vpop.f32.mrf.mxu0
  %v592 = vadd.f32 %v319, %v591
  %v593 = vpop.f32.mrf.mxu0
  %v594 = vadd.f32 %v321, %v593
  %595 = vmatprep.mubr.bf16.mxu0 0
  %596 = vmatmul.mubr.bf16.gmra.mxu0 %v77
  %v597 = vpop.f32.mrf.mxu0
  %v598 = vadd.f32 %v325, %v597
  %v599 = vpop.f32.mrf.mxu0
  %v600 = vadd.f32 %v327, %v599
  %v601 = vpop.f32.mrf.mxu0
  %v602 = vadd.f32 %v329, %v601
  %v603 = vpop.f32.mrf.mxu0
  %v604 = vadd.f32 %v331, %v603
  %605 = vmatprep.mubr.bf16.mxu0 0
  %606 = vmatmul.mubr.bf16.gmra.mxu0 %v78
  %v607 = vpop.f32.mrf.mxu0
  %v608 = vadd.f32 %v335, %v607
  %v609 = vpop.f32.mrf.mxu0
  %v610 = vadd.f32 %v337, %v609
  %v611 = vpop.f32.mrf.mxu0
  %v612 = vadd.f32 %v339, %v611
  %v613 = vpop.f32.mrf.mxu0
  %v614 = vadd.f32 %v341, %v613
  %615 = vmatprep.mubr.bf16.mxu0 0
  %616 = vmatmul.mubr.bf16.gmra.mxu0 %v79
  %v617 = vpop.f32.mrf.mxu0
  %v618 = vadd.f32 %v345, %v617
  %v619 = vpop.f32.mrf.mxu0
  %v620 = vadd.f32 %v347, %v619
  %v621 = vpop.f32.mrf.mxu0
  %v622 = vadd.f32 %v349, %v621
  %v623 = vpop.f32.mrf.mxu0
  %v624 = vadd.f32 %v351, %v623
  %625 = vmatprep.mubr.bf16.mxu0 0
  %626 = vmatmul.mubr.bf16.gmra.mxu0 %v80
  %v627 = vpop.f32.mrf.mxu0
  %v628 = vadd.f32 %v355, %v627
  %v629 = vpop.f32.mrf.mxu0
  %v630 = vadd.f32 %v357, %v629
  %v631 = vpop.f32.mrf.mxu0
  %v632 = vadd.f32 %v359, %v631
  %v633 = vpop.f32.mrf.mxu0
  %v634 = vadd.f32 %v361, %v633
  %635 = vmatprep.mubr.bf16.mxu0 0
  %636 = vmatmul.mubr.bf16.gmra.mxu0 %v81
  %v637 = vpop.f32.mrf.mxu0
  %v638 = vadd.f32 %v365, %v637
  %v639 = vpop.f32.mrf.mxu0
  %v640 = vadd.f32 %v367, %v639
  %v641 = vpop.f32.mrf.mxu0
  %v642 = vadd.f32 %v369, %v641
  %v643 = vpop.f32.mrf.mxu0
  %v644 = vadd.f32 %v371, %v643
  %645 = vmatprep.mubr.bf16.mxu0 0
  %646 = vmatmul.mubr.bf16.gmra.mxu0 %v82
  %v647 = vpop.f32.mrf.mxu0
  %v648 = vadd.f32 %v375, %v647
  %v649 = vpop.f32.mrf.mxu0
  %v650 = vadd.f32 %v377, %v649
  %v651 = vpop.f32.mrf.mxu0
  %v652 = vadd.f32 %v379, %v651
  %v653 = vpop.f32.mrf.mxu0
  %v654 = vadd.f32 %v381, %v653
  %655 = vmatprep.mubr.bf16.mxu0 0
  %656 = vmatmul.mubr.bf16.gmra.mxu0 %v83
  %v657 = vpop.f32.mrf.mxu0
  %v658 = vadd.f32 %v385, %v657
  %v659 = vpop.f32.mrf.mxu0
  %v660 = vadd.f32 %v387, %v659
  %v661 = vpop.f32.mrf.mxu0
  %v662 = vadd.f32 %v389, %v661
  %v663 = vpop.f32.mrf.mxu0
  %v664 = vadd.f32 %v391, %v663
  %665 = vmatprep.mubr.bf16.mxu0 0
  %666 = vmatmul.mubr.bf16.gmra.mxu0 %v84
  %v667 = vpop.f32.mrf.mxu0
  %v668 = vadd.f32 %v395, %v667
  %v669 = vpop.f32.mrf.mxu0
  %v670 = vadd.f32 %v397, %v669
  %v671 = vpop.f32.mrf.mxu0
  %v672 = vadd.f32 %v399, %v671
  %v673 = vpop.f32.mrf.mxu0
  %v674 = vadd.f32 %v401, %v673
  %675 = vmatprep.mubr.bf16.mxu0 0
  %676 = vmatmul.mubr.bf16.gmra.mxu0 %v85
  %v677 = vpop.f32.mrf.mxu0
  %v678 = vadd.f32 %v405, %v677
  %v679 = vpop.f32.mrf.mxu0
  %v680 = vadd.f32 %v407, %v679
  %v681 = vpop.f32.mrf.mxu0
  %v682 = vadd.f32 %v409, %v681
  %v683 = vpop.f32.mrf.mxu0
  %v684 = vadd.f32 %v411, %v683
  %685 = vmatprep.mubr.bf16.mxu0 0
  %686 = vmatmul.mubr.bf16.gmra.mxu0 %v86
  %v687 = vpop.f32.mrf.mxu0
  %v688 = vadd.f32 %v415, %v687
  %v689 = vpop.f32.mrf.mxu0
  %v690 = vadd.f32 %v417, %v689
  %v691 = vpop.f32.mrf.mxu0
  %v692 = vadd.f32 %v419, %v691
  %v693 = vpop.f32.mrf.mxu0
  %v694 = vadd.f32 %v421, %v693
  %695 = vmatprep.mubr.bf16.mxu0 0
  %696 = vmatmul.mubr.bf16.gmra.mxu0 %v87
  %v697 = vpop.f32.mrf.mxu0
  %v698 = vadd.f32 %v425, %v697
  %v699 = vpop.f32.mrf.mxu0
  %v700 = vadd.f32 %v427, %v699
  %v701 = vpop.f32.mrf.mxu0
  %v702 = vadd.f32 %v429, %v701
  %v703 = vpop.f32.mrf.mxu0
  %v704 = vadd.f32 %v431, %v703
  %705 = vmatprep.mubr.bf16.mxu0 0
  %706 = vmatmul.mubr.bf16.gmra.mxu0 %v88
  %v707 = vpop.f32.mrf.mxu0
  %v708 = vadd.f32 %v435, %v707
  %v709 = vpop.f32.mrf.mxu0
  %v710 = vadd.f32 %v437, %v709
  %v711 = vpop.f32.mrf.mxu0
  %v712 = vadd.f32 %v439, %v711
  %v713 = vpop.f32.mrf.mxu0
  %v714 = vadd.f32 %v441, %v713
  %715 = vdwg.mxu0
  %v716 = vld [vmem:[%s0 + $0x2] sm:$0xff]
  %v717 = vld [vmem:[%s0 + $0xa] sm:$0xff]
  %v718 = vld [vmem:[%s0 + $0x12] sm:$0xff]
  %v719 = vld [vmem:[%s0 + $0x1a] sm:$0xff]
  %v720 = vld [vmem:[%s0 + $0x22] sm:$0xff]
  %v721 = vld [vmem:[%s0 + $0x2a] sm:$0xff]
  %v722 = vld [vmem:[%s0 + $0x32] sm:$0xff]
  %v723 = vld [vmem:[%s0 + $0x3a] sm:$0xff]
  %v724 = vld [vmem:[%s0 + $0x42] sm:$0xff]
  %v725 = vld [vmem:[%s0 + $0x4a] sm:$0xff]
  %v726 = vld [vmem:[%s0 + $0x52] sm:$0xff]
  %v727 = vld [vmem:[%s0 + $0x5a] sm:$0xff]
  %v728 = vld [vmem:[%s0 + $0x62] sm:$0xff]
  %v729 = vld [vmem:[%s0 + $0x6a] sm:$0xff]
  %v730 = vld [vmem:[%s0 + $0x72] sm:$0xff]
  %v731 = vld [vmem:[%s0 + $0x7a] sm:$0xff]
  %v732 = vld [vmem:[%s0 + $0x82] sm:$0xff]
  %v733 = vld [vmem:[%s0 + $0x8a] sm:$0xff]
  %v734 = vld [vmem:[%s0 + $0x92] sm:$0xff]
  %v735 = vld [vmem:[%s0 + $0x9a] sm:$0xff]
  %v736 = vld [vmem:[%s0 + $0xa2] sm:$0xff]
  %v737 = vld [vmem:[%s0 + $0xaa] sm:$0xff]
  %v738 = vld [vmem:[%s0 + $0xb2] sm:$0xff]
  %v739 = vld [vmem:[%s0 + $0xba] sm:$0xff]
  %v740 = vld [vmem:[%s0 + $0xc2] sm:$0xff]
  %v741 = vld [vmem:[%s0 + $0xca] sm:$0xff]
  %v742 = vld [vmem:[%s0 + $0xd2] sm:$0xff]
  %v743 = vld [vmem:[%s0 + $0xda] sm:$0xff]
  %v744 = vld [vmem:[%s0 + $0xe2] sm:$0xff]
  %v745 = vld [vmem:[%s0 + $0xea] sm:$0xff]
  %v746 = vld [vmem:[%s0 + $0xf2] sm:$0xff]
  %v747 = vld [vmem:[%s0 + $0xfa] sm:$0xf]
  %v748 = vpack.c.bf16 %v717, %v716
  %v749 = vpack.c.bf16 %v719, %v718
  %v750 = vpack.c.bf16 %v721, %v720
  %v751 = vpack.c.bf16 %v723, %v722
  %v752 = vpack.c.bf16 %v725, %v724
  %v753 = vpack.c.bf16 %v727, %v726
  %v754 = vpack.c.bf16 %v729, %v728
  %v755 = vpack.c.bf16 %v731, %v730
  %v756 = vpack.c.bf16 %v733, %v732
  %v757 = vpack.c.bf16 %v735, %v734
  %v758 = vpack.c.bf16 %v737, %v736
  %v759 = vpack.c.bf16 %v739, %v738
  %v760 = vpack.c.bf16 %v741, %v740
  %v761 = vpack.c.bf16 %v743, %v742
  %v762 = vpack.c.bf16 %v745, %v744
  %v763 = vpack.c.bf16 %v747, %v746
  %s764 = scalar_lea.vmem %s1, 256
  %v765 = vld [vmem:[%s764] sm:$0xff]
  %v766 = vld [vmem:[%s764 + $0x8] sm:$0xff]
  %v767 = vld [vmem:[%s764 + $0x10] sm:$0xff]
  %v768 = vld [vmem:[%s764 + $0x18] sm:$0xff]
  %v769 = vld [vmem:[%s764 + $0x20] sm:$0xff]
  %v770 = vld [vmem:[%s764 + $0x28] sm:$0xff]
  %v771 = vld [vmem:[%s764 + $0x30] sm:$0xff]
  %v772 = vld [vmem:[%s764 + $0x38] sm:$0xff]
  %v773 = vld [vmem:[%s764 + $0x40] sm:$0xff]
  %v774 = vld [vmem:[%s764 + $0x48] sm:$0xff]
  %v775 = vld [vmem:[%s764 + $0x50] sm:$0xff]
  %v776 = vld [vmem:[%s764 + $0x58] sm:$0xff]
  %v777 = vld [vmem:[%s764 + $0x60] sm:$0xff]
  %v778 = vld [vmem:[%s764 + $0x68] sm:$0xff]
  %v779 = vld [vmem:[%s764 + $0x70] sm:$0xff]
  %v780 = vld [vmem:[%s764 + $0x78] sm:$0xff]
  %v797 = vunpack.c.l.b16 %v765
  %v798 = vunpack.c.h.b16 %v765
  %v799 = vunpack.c.l.b16 %v766
  %v800 = vunpack.c.h.b16 %v766
  %v801 = vunpack.c.l.b16 %v767
  %v802 = vunpack.c.h.b16 %v767
  %v803 = vunpack.c.l.b16 %v768
  %v804 = vunpack.c.h.b16 %v768
  %v805 = vunpack.c.l.b16 %v769
  %v806 = vunpack.c.h.b16 %v769
  %v807 = vunpack.c.l.b16 %v770
  %v808 = vunpack.c.h.b16 %v770
  %v809 = vunpack.c.l.b16 %v771
  %v810 = vunpack.c.h.b16 %v771
  %v811 = vunpack.c.l.b16 %v772
  %v812 = vunpack.c.h.b16 %v772
  %v813 = vunpack.c.l.b16 %v773
  %v814 = vunpack.c.h.b16 %v773
  %v815 = vunpack.c.l.b16 %v774
  %v816 = vunpack.c.h.b16 %v774
  %v817 = vunpack.c.l.b16 %v775
  %v818 = vunpack.c.h.b16 %v775
  %v819 = vunpack.c.l.b16 %v776
  %v820 = vunpack.c.h.b16 %v776
  %v821 = vunpack.c.l.b16 %v777
  %v822 = vunpack.c.h.b16 %v777
  %v823 = vunpack.c.l.b16 %v778
  %v824 = vunpack.c.h.b16 %v778
  %v825 = vunpack.c.l.b16 %v779
  %v826 = vunpack.c.h.b16 %v779
  %v827 = vunpack.c.l.b16 %v780
  %v828 = vunpack.c.h.b16 %v780
  %v829 = vpack.c.b16 %v799, %v797
  %v830 = vpack.c.b16 %v800, %v798
  %v831 = vpack.c.b16 %v803, %v801
  %v832 = vpack.c.b16 %v804, %v802
  %v833 = vpack.c.b16 %v807, %v805
  %v834 = vpack.c.b16 %v808, %v806
  %v835 = vpack.c.b16 %v811, %v809
  %v836 = vpack.c.b16 %v812, %v810
  %v837 = vpack.c.b16 %v815, %v813
  %v838 = vpack.c.b16 %v816, %v814
  %v839 = vpack.c.b16 %v819, %v817
  %v840 = vpack.c.b16 %v820, %v818
  %v841 = vpack.c.b16 %v823, %v821
  %v842 = vpack.c.b16 %v824, %v822
  %v843 = vpack.c.b16 %v827, %v825
  %v844 = vpack.c.b16 %v828, %v826
  %861 = vmatprep.subr.bf16.mxu0 %v844
  %862 = vmatpush1.bf16.msra.mxu0 %v843
  %863 = vmatprep.subr.bf16.mxu0 %v842
  %864 = vmatpush1.bf16.msra.mxu0 %v841
  %865 = vmatprep.subr.bf16.mxu0 %v840
  %866 = vmatpush1.bf16.msra.mxu0 %v839
  %867 = vmatprep.subr.bf16.mxu0 %v838
  %868 = vmatpush1.bf16.msra.mxu0 %v837
  %869 = vmatprep.subr.bf16.mxu0 %v836
  %870 = vmatpush1.bf16.msra.mxu0 %v835
  %871 = vmatprep.subr.bf16.mxu0 %v834
  %872 = vmatpush1.bf16.msra.mxu0 %v833
  %873 = vmatprep.subr.bf16.mxu0 %v832
  %874 = vmatpush1.bf16.msra.mxu0 %v831
  %875 = vmatprep.subr.bf16.mxu0 %v830
  %876 = vmatpush1.bf16.msra.mxu0 %v829
  %877 = vmatprep.subr.bf16.mxu0 0
  %878 = vmatpush2.bf16.msra.mxu0 0
  %879 = vmatprep.subr.bf16.mxu0 0
  %880 = vmatpush2.bf16.msra.mxu0 0
  %881 = vmatprep.subr.bf16.mxu0 0
  %882 = vmatpush2.bf16.msra.mxu0 0
  %883 = vmatprep.subr.bf16.mxu0 0
  %884 = vmatpush2.bf16.msra.mxu0 0
  %885 = vmatprep.subr.bf16.mxu0 0
  %886 = vmatpush2.bf16.msra.mxu0 0
  %887 = vmatprep.subr.bf16.mxu0 0
  %888 = vmatpush2.bf16.msra.mxu0 0
  %889 = vmatprep.subr.bf16.mxu0 0
  %890 = vmatpush2.bf16.msra.mxu0 0
  %891 = vmatprep.subr.bf16.mxu0 0
  %892 = vmatpush2.bf16.msra.mxu0 0
  %893 = vmatprep.mubr.bf16.mxu0 0
  %894 = vmatmul.mubr.bf16.gmra.mxu0 %v748
  %v895 = vpop.f32.mrf.mxu0
  %v896 = vadd.f32 0.0, %v895
  %v897 = vpop.f32.mrf.mxu0
  %v898 = vadd.f32 0.0, %v897
  %v899 = vpop.f32.mrf.mxu0
  %v900 = vadd.f32 0.0, %v899
  %v901 = vpop.f32.mrf.mxu0
  %v902 = vadd.f32 0.0, %v901
  %903 = vmatprep.mubr.bf16.mxu0 0
  %904 = vmatmul.mubr.bf16.gmra.mxu0 %v749
  %v905 = vpop.f32.mrf.mxu0
  %v906 = vadd.f32 0.0, %v905
  %v907 = vpop.f32.mrf.mxu0
  %v908 = vadd.f32 0.0, %v907
  %v909 = vpop.f32.mrf.mxu0
  %v910 = vadd.f32 0.0, %v909
  %v911 = vpop.f32.mrf.mxu0
  %v912 = vadd.f32 0.0, %v911
  %913 = vmatprep.mubr.bf16.mxu0 0
  %914 = vmatmul.mubr.bf16.gmra.mxu0 %v750
  %v915 = vpop.f32.mrf.mxu0
  %v916 = vadd.f32 0.0, %v915
  %v917 = vpop.f32.mrf.mxu0
  %v918 = vadd.f32 0.0, %v917
  %v919 = vpop.f32.mrf.mxu0
  %v920 = vadd.f32 0.0, %v919
  %v921 = vpop.f32.mrf.mxu0
  %v922 = vadd.f32 0.0, %v921
  %923 = vmatprep.mubr.bf16.mxu0 0
  %924 = vmatmul.mubr.bf16.gmra.mxu0 %v751
  %v925 = vpop.f32.mrf.mxu0
  %v926 = vadd.f32 0.0, %v925
  %v927 = vpop.f32.mrf.mxu0
  %v928 = vadd.f32 0.0, %v927
  %v929 = vpop.f32.mrf.mxu0
  %v930 = vadd.f32 0.0, %v929
  %v931 = vpop.f32.mrf.mxu0
  %v932 = vadd.f32 0.0, %v931
  %933 = vmatprep.mubr.bf16.mxu0 0
  %934 = vmatmul.mubr.bf16.gmra.mxu0 %v752
  %v935 = vpop.f32.mrf.mxu0
  %v936 = vadd.f32 0.0, %v935
  %v937 = vpop.f32.mrf.mxu0
  %v938 = vadd.f32 0.0, %v937
  %v939 = vpop.f32.mrf.mxu0
  %v940 = vadd.f32 0.0, %v939
  %v941 = vpop.f32.mrf.mxu0
  %v942 = vadd.f32 0.0, %v941
  %943 = vmatprep.mubr.bf16.mxu0 0
  %944 = vmatmul.mubr.bf16.gmra.mxu0 %v753
  %v945 = vpop.f32.mrf.mxu0
  %v946 = vadd.f32 0.0, %v945
  %v947 = vpop.f32.mrf.mxu0
  %v948 = vadd.f32 0.0, %v947
  %v949 = vpop.f32.mrf.mxu0
  %v950 = vadd.f32 0.0, %v949
  %v951 = vpop.f32.mrf.mxu0
  %v952 = vadd.f32 0.0, %v951
  %953 = vmatprep.mubr.bf16.mxu0 0
  %954 = vmatmul.mubr.bf16.gmra.mxu0 %v754
  %v955 = vpop.f32.mrf.mxu0
  %v956 = vadd.f32 0.0, %v955
  %v957 = vpop.f32.mrf.mxu0
  %v958 = vadd.f32 0.0, %v957
  %v959 = vpop.f32.mrf.mxu0
  %v960 = vadd.f32 0.0, %v959
  %v961 = vpop.f32.mrf.mxu0
  %v962 = vadd.f32 0.0, %v961
  %963 = vmatprep.mubr.bf16.mxu0 0
  %964 = vmatmul.mubr.bf16.gmra.mxu0 %v755
  %v965 = vpop.f32.mrf.mxu0
  %v966 = vadd.f32 0.0, %v965
  %v967 = vpop.f32.mrf.mxu0
  %v968 = vadd.f32 0.0, %v967
  %v969 = vpop.f32.mrf.mxu0
  %v970 = vadd.f32 0.0, %v969
  %v971 = vpop.f32.mrf.mxu0
  %v972 = vadd.f32 0.0, %v971
  %973 = vmatprep.mubr.bf16.mxu0 0
  %974 = vmatmul.mubr.bf16.gmra.mxu0 %v756
  %v975 = vpop.f32.mrf.mxu0
  %v976 = vadd.f32 0.0, %v975
  %v977 = vpop.f32.mrf.mxu0
  %v978 = vadd.f32 0.0, %v977
  %v979 = vpop.f32.mrf.mxu0
  %v980 = vadd.f32 0.0, %v979
  %v981 = vpop.f32.mrf.mxu0
  %v982 = vadd.f32 0.0, %v981
  %983 = vmatprep.mubr.bf16.mxu0 0
  %984 = vmatmul.mubr.bf16.gmra.mxu0 %v757
  %v985 = vpop.f32.mrf.mxu0
  %v986 = vadd.f32 0.0, %v985
  %v987 = vpop.f32.mrf.mxu0
  %v988 = vadd.f32 0.0, %v987
  %v989 = vpop.f32.mrf.mxu0
  %v990 = vadd.f32 0.0, %v989
  %v991 = vpop.f32.mrf.mxu0
  %v992 = vadd.f32 0.0, %v991
  %993 = vmatprep.mubr.bf16.mxu0 0
  %994 = vmatmul.mubr.bf16.gmra.mxu0 %v758
  %v995 = vpop.f32.mrf.mxu0
  %v996 = vadd.f32 0.0, %v995
  %v997 = vpop.f32.mrf.mxu0
  %v998 = vadd.f32 0.0, %v997
  %v999 = vpop.f32.mrf.mxu0
  %v1000 = vadd.f32 0.0, %v999
  %v1001 = vpop.f32.mrf.mxu0
  %v1002 = vadd.f32 0.0, %v1001
  %1003 = vmatprep.mubr.bf16.mxu0 0
  %1004 = vmatmul.mubr.bf16.gmra.mxu0 %v759
  %v1005 = vpop.f32.mrf.mxu0
  %v1006 = vadd.f32 0.0, %v1005
  %v1007 = vpop.f32.mrf.mxu0
  %v1008 = vadd.f32 0.0, %v1007
  %v1009 = vpop.f32.mrf.mxu0
  %v1010 = vadd.f32 0.0, %v1009
  %v1011 = vpop.f32.mrf.mxu0
  %v1012 = vadd.f32 0.0, %v1011
  %1013 = vmatprep.mubr.bf16.mxu0 0
  %1014 = vmatmul.mubr.bf16.gmra.mxu0 %v760
  %v1015 = vpop.f32.mrf.mxu0
  %v1016 = vadd.f32 0.0, %v1015
  %v1017 = vpop.f32.mrf.mxu0
  %v1018 = vadd.f32 0.0, %v1017
  %v1019 = vpop.f32.mrf.mxu0
  %v1020 = vadd.f32 0.0, %v1019
  %v1021 = vpop.f32.mrf.mxu0
  %v1022 = vadd.f32 0.0, %v1021
  %1023 = vmatprep.mubr.bf16.mxu0 0
  %1024 = vmatmul.mubr.bf16.gmra.mxu0 %v761
  %v1025 = vpop.f32.mrf.mxu0
  %v1026 = vadd.f32 0.0, %v1025
  %v1027 = vpop.f32.mrf.mxu0
  %v1028 = vadd.f32 0.0, %v1027
  %v1029 = vpop.f32.mrf.mxu0
  %v1030 = vadd.f32 0.0, %v1029
  %v1031 = vpop.f32.mrf.mxu0
  %v1032 = vadd.f32 0.0, %v1031
  %1033 = vmatprep.mubr.bf16.mxu0 0
  %1034 = vmatmul.mubr.bf16.gmra.mxu0 %v762
  %v1035 = vpop.f32.mrf.mxu0
  %v1036 = vadd.f32 0.0, %v1035
  %v1037 = vpop.f32.mrf.mxu0
  %v1038 = vadd.f32 0.0, %v1037
  %v1039 = vpop.f32.mrf.mxu0
  %v1040 = vadd.f32 0.0, %v1039
  %v1041 = vpop.f32.mrf.mxu0
  %v1042 = vadd.f32 0.0, %v1041
  %1043 = vmatprep.mubr.bf16.mxu0 0
  %1044 = vmatmul.mubr.bf16.gmra.mxu0 %v763
  %v1045 = vpop.f32.mrf.mxu0
  %v1046 = vadd.f32 0.0, %v1045
  %v1047 = vpop.f32.mrf.mxu0
  %v1048 = vadd.f32 0.0, %v1047
  %v1049 = vpop.f32.mrf.mxu0
  %v1050 = vadd.f32 0.0, %v1049
  %v1051 = vpop.f32.mrf.mxu0
  %v1052 = vadd.f32 0.0, %v1051
  %1053 = vdwg.mxu0
  %v1054 = vadd.f32 %v558, %v896
  %v1055 = vadd.f32 %v560, %v898
  %v1056 = vadd.f32 %v562, %v900
  %v1057 = vadd.f32 %v564, %v902
  %v1058 = vadd.f32 %v568, %v906
  %v1059 = vadd.f32 %v570, %v908
  %v1060 = vadd.f32 %v572, %v910
  %v1061 = vadd.f32 %v574, %v912
  %v1062 = vadd.f32 %v578, %v916
  %v1063 = vadd.f32 %v580, %v918
  %v1064 = vadd.f32 %v582, %v920
  %v1065 = vadd.f32 %v584, %v922
  %v1066 = vadd.f32 %v588, %v926
  %v1067 = vadd.f32 %v590, %v928
  %v1068 = vadd.f32 %v592, %v930
  %v1069 = vadd.f32 %v594, %v932
  %v1070 = vadd.f32 %v598, %v936
  %v1071 = vadd.f32 %v600, %v938
  %v1072 = vadd.f32 %v602, %v940
  %v1073 = vadd.f32 %v604, %v942
  %v1074 = vadd.f32 %v608, %v946
  %v1075 = vadd.f32 %v610, %v948
  %v1076 = vadd.f32 %v612, %v950
  %v1077 = vadd.f32 %v614, %v952
  %v1078 = vadd.f32 %v618, %v956
  %v1079 = vadd.f32 %v620, %v958
  %v1080 = vadd.f32 %v622, %v960
  %v1081 = vadd.f32 %v624, %v962
  %v1082 = vadd.f32 %v628, %v966
  %v1083 = vadd.f32 %v630, %v968
  %v1084 = vadd.f32 %v632, %v970
  %v1085 = vadd.f32 %v634, %v972
  %v1086 = vadd.f32 %v638, %v976
  %v1087 = vadd.f32 %v640, %v978
  %v1088 = vadd.f32 %v642, %v980
  %v1089 = vadd.f32 %v644, %v982
  %v1090 = vadd.f32 %v648, %v986
  %v1091 = vadd.f32 %v650, %v988
  %v1092 = vadd.f32 %v652, %v990
  %v1093 = vadd.f32 %v654, %v992
  %v1094 = vadd.f32 %v658, %v996
  %v1095 = vadd.f32 %v660, %v998
  %v1096 = vadd.f32 %v662, %v1000
  %v1097 = vadd.f32 %v664, %v1002
  %v1098 = vadd.f32 %v668, %v1006
  %v1099 = vadd.f32 %v670, %v1008
  %v1100 = vadd.f32 %v672, %v1010
  %v1101 = vadd.f32 %v674, %v1012
  %v1102 = vadd.f32 %v678, %v1016
  %v1103 = vadd.f32 %v680, %v1018
  %v1104 = vadd.f32 %v682, %v1020
  %v1105 = vadd.f32 %v684, %v1022
  %v1106 = vadd.f32 %v688, %v1026
  %v1107 = vadd.f32 %v690, %v1028
  %v1108 = vadd.f32 %v692, %v1030
  %v1109 = vadd.f32 %v694, %v1032
  %v1110 = vadd.f32 %v698, %v1036
  %v1111 = vadd.f32 %v700, %v1038
  %v1112 = vadd.f32 %v702, %v1040
  %v1113 = vadd.f32 %v704, %v1042
  %v1114 = vadd.f32 %v708, %v1046
  %v1115 = vadd.f32 %v710, %v1048
  %v1116 = vadd.f32 %v712, %v1050
  %v1117 = vadd.f32 %v714, %v1052
  %v1118 = vld [vmem:[%s0 + $0x3] sm:$0xff]
  %v1119 = vld [vmem:[%s0 + $0xb] sm:$0xff]
  %v1120 = vld [vmem:[%s0 + $0x13] sm:$0xff]
  %v1121 = vld [vmem:[%s0 + $0x1b] sm:$0xff]
  %v1122 = vld [vmem:[%s0 + $0x23] sm:$0xff]
  %v1123 = vld [vmem:[%s0 + $0x2b] sm:$0xff]
  %v1124 = vld [vmem:[%s0 + $0x33] sm:$0xff]
  %v1125 = vld [vmem:[%s0 + $0x3b] sm:$0xff]
  %v1126 = vld [vmem:[%s0 + $0x43] sm:$0xff]
  %v1127 = vld [vmem:[%s0 + $0x4b] sm:$0xff]
  %v1128 = vld [vmem:[%s0 + $0x53] sm:$0xff]
  %v1129 = vld [vmem:[%s0 + $0x5b] sm:$0xff]
  %v1130 = vld [vmem:[%s0 + $0x63] sm:$0xff]
  %v1131 = vld [vmem:[%s0 + $0x6b] sm:$0xff]
  %v1132 = vld [vmem:[%s0 + $0x73] sm:$0xff]
  %v1133 = vld [vmem:[%s0 + $0x7b] sm:$0xff]
  %v1134 = vld [vmem:[%s0 + $0x83] sm:$0xff]
  %v1135 = vld [vmem:[%s0 + $0x8b] sm:$0xff]
  %v1136 = vld [vmem:[%s0 + $0x93] sm:$0xff]
  %v1137 = vld [vmem:[%s0 + $0x9b] sm:$0xff]
  %v1138 = vld [vmem:[%s0 + $0xa3] sm:$0xff]
  %v1139 = vld [vmem:[%s0 + $0xab] sm:$0xff]
  %v1140 = vld [vmem:[%s0 + $0xb3] sm:$0xff]
  %v1141 = vld [vmem:[%s0 + $0xbb] sm:$0xff]
  %v1142 = vld [vmem:[%s0 + $0xc3] sm:$0xff]
  %v1143 = vld [vmem:[%s0 + $0xcb] sm:$0xff]
  %v1144 = vld [vmem:[%s0 + $0xd3] sm:$0xff]
  %v1145 = vld [vmem:[%s0 + $0xdb] sm:$0xff]
  %v1146 = vld [vmem:[%s0 + $0xe3] sm:$0xff]
  %v1147 = vld [vmem:[%s0 + $0xeb] sm:$0xff]
  %v1148 = vld [vmem:[%s0 + $0xf3] sm:$0xff]
  %v1149 = vld [vmem:[%s0 + $0xfb] sm:$0xf]
  %v1150 = vpack.c.bf16 %v1119, %v1118
  %v1151 = vpack.c.bf16 %v1121, %v1120
  %v1152 = vpack.c.bf16 %v1123, %v1122
  %v1153 = vpack.c.bf16 %v1125, %v1124
  %v1154 = vpack.c.bf16 %v1127, %v1126
  %v1155 = vpack.c.bf16 %v1129, %v1128
  %v1156 = vpack.c.bf16 %v1131, %v1130
  %v1157 = vpack.c.bf16 %v1133, %v1132
  %v1158 = vpack.c.bf16 %v1135, %v1134
  %v1159 = vpack.c.bf16 %v1137, %v1136
  %v1160 = vpack.c.bf16 %v1139, %v1138
  %v1161 = vpack.c.bf16 %v1141, %v1140
  %v1162 = vpack.c.bf16 %v1143, %v1142
  %v1163 = vpack.c.bf16 %v1145, %v1144
  %v1164 = vpack.c.bf16 %v1147, %v1146
  %v1165 = vpack.c.bf16 %v1149, %v1148
  %s1166 = scalar_lea.vmem %s1, 384
  %v1167 = vld [vmem:[%s1166] sm:$0xff]
  %v1168 = vld [vmem:[%s1166 + $0x8] sm:$0xff]
  %v1169 = vld [vmem:[%s1166 + $0x10] sm:$0xff]
  %v1170 = vld [vmem:[%s1166 + $0x18] sm:$0xff]
  %v1171 = vld [vmem:[%s1166 + $0x20] sm:$0xff]
  %v1172 = vld [vmem:[%s1166 + $0x28] sm:$0xff]
  %v1173 = vld [vmem:[%s1166 + $0x30] sm:$0xff]
  %v1174 = vld [vmem:[%s1166 + $0x38] sm:$0xff]
  %v1175 = vld [vmem:[%s1166 + $0x40] sm:$0xff]
  %v1176 = vld [vmem:[%s1166 + $0x48] sm:$0xff]
  %v1177 = vld [vmem:[%s1166 + $0x50] sm:$0xff]
  %v1178 = vld [vmem:[%s1166 + $0x58] sm:$0xff]
  %v1179 = vld [vmem:[%s1166 + $0x60] sm:$0xff]
  %v1180 = vld [vmem:[%s1166 + $0x68] sm:$0xff]
  %v1181 = vld [vmem:[%s1166 + $0x70] sm:$0xff]
  %v1182 = vld [vmem:[%s1166 + $0x78] sm:$0xff]
  %v1199 = vunpack.c.l.b16 %v1167
  %v1200 = vunpack.c.h.b16 %v1167
  %v1201 = vunpack.c.l.b16 %v1168
  %v1202 = vunpack.c.h.b16 %v1168
  %v1203 = vunpack.c.l.b16 %v1169
  %v1204 = vunpack.c.h.b16 %v1169
  %v1205 = vunpack.c.l.b16 %v1170
  %v1206 = vunpack.c.h.b16 %v1170
  %v1207 = vunpack.c.l.b16 %v1171
  %v1208 = vunpack.c.h.b16 %v1171
  %v1209 = vunpack.c.l.b16 %v1172
  %v1210 = vunpack.c.h.b16 %v1172
  %v1211 = vunpack.c.l.b16 %v1173
  %v1212 = vunpack.c.h.b16 %v1173
  %v1213 = vunpack.c.l.b16 %v1174
  %v1214 = vunpack.c.h.b16 %v1174
  %v1215 = vunpack.c.l.b16 %v1175
  %v1216 = vunpack.c.h.b16 %v1175
  %v1217 = vunpack.c.l.b16 %v1176
  %v1218 = vunpack.c.h.b16 %v1176
  %v1219 = vunpack.c.l.b16 %v1177
  %v1220 = vunpack.c.h.b16 %v1177
  %v1221 = vunpack.c.l.b16 %v1178
  %v1222 = vunpack.c.h.b16 %v1178
  %v1223 = vunpack.c.l.b16 %v1179
  %v1224 = vunpack.c.h.b16 %v1179
  %v1225 = vunpack.c.l.b16 %v1180
  %v1226 = vunpack.c.h.b16 %v1180
  %v1227 = vunpack.c.l.b16 %v1181
  %v1228 = vunpack.c.h.b16 %v1181
  %v1229 = vunpack.c.l.b16 %v1182
  %v1230 = vunpack.c.h.b16 %v1182
  %v1231 = vpack.c.b16 %v1201, %v1199
  %v1232 = vpack.c.b16 %v1202, %v1200
  %v1233 = vpack.c.b16 %v1205, %v1203
  %v1234 = vpack.c.b16 %v1206, %v1204
  %v1235 = vpack.c.b16 %v1209, %v1207
  %v1236 = vpack.c.b16 %v1210, %v1208
  %v1237 = vpack.c.b16 %v1213, %v1211
  %v1238 = vpack.c.b16 %v1214, %v1212
  %v1239 = vpack.c.b16 %v1217, %v1215
  %v1240 = vpack.c.b16 %v1218, %v1216
  %v1241 = vpack.c.b16 %v1221, %v1219
  %v1242 = vpack.c.b16 %v1222, %v1220
  %v1243 = vpack.c.b16 %v1225, %v1223
  %v1244 = vpack.c.b16 %v1226, %v1224
  %v1245 = vpack.c.b16 %v1229, %v1227
  %v1246 = vpack.c.b16 %v1230, %v1228
  %1263 = vmatprep.subr.bf16.mxu0 %v1246
  %1264 = vmatpush1.bf16.msra.mxu0 %v1245
  %1265 = vmatprep.subr.bf16.mxu0 %v1244
  %1266 = vmatpush1.bf16.msra.mxu0 %v1243
  %1267 = vmatprep.subr.bf16.mxu0 %v1242
  %1268 = vmatpush1.bf16.msra.mxu0 %v1241
  %1269 = vmatprep.subr.bf16.mxu0 %v1240
  %1270 = vmatpush1.bf16.msra.mxu0 %v1239
  %1271 = vmatprep.subr.bf16.mxu0 %v1238
  %1272 = vmatpush1.bf16.msra.mxu0 %v1237
  %1273 = vmatprep.subr.bf16.mxu0 %v1236
  %1274 = vmatpush1.bf16.msra.mxu0 %v1235
  %1275 = vmatprep.subr.bf16.mxu0 %v1234
  %1276 = vmatpush1.bf16.msra.mxu0 %v1233
  %1277 = vmatprep.subr.bf16.mxu0 %v1232
  %1278 = vmatpush1.bf16.msra.mxu0 %v1231
  %1279 = vmatprep.subr.bf16.mxu0 0
  %1280 = vmatpush2.bf16.msra.mxu0 0
  %1281 = vmatprep.subr.bf16.mxu0 0
  %1282 = vmatpush2.bf16.msra.mxu0 0
  %1283 = vmatprep.subr.bf16.mxu0 0
  %1284 = vmatpush2.bf16.msra.mxu0 0
  %1285 = vmatprep.subr.bf16.mxu0 0
  %1286 = vmatpush2.bf16.msra.mxu0 0
  %1287 = vmatprep.subr.bf16.mxu0 0
  %1288 = vmatpush2.bf16.msra.mxu0 0
  %1289 = vmatprep.subr.bf16.mxu0 0
  %1290 = vmatpush2.bf16.msra.mxu0 0
  %1291 = vmatprep.subr.bf16.mxu0 0
  %1292 = vmatpush2.bf16.msra.mxu0 0
  %1293 = vmatprep.subr.bf16.mxu0 0
  %1294 = vmatpush2.bf16.msra.mxu0 0
  %1295 = vmatprep.mubr.bf16.mxu0 0
  %1296 = vmatmul.mubr.bf16.gmra.mxu0 %v1150
  %v1297 = vpop.f32.mrf.mxu0
  %v1298 = vadd.f32 0.0, %v1297
  %v1299 = vpop.f32.mrf.mxu0
  %v1300 = vadd.f32 0.0, %v1299
  %v1301 = vpop.f32.mrf.mxu0
  %v1302 = vadd.f32 0.0, %v1301
  %v1303 = vpop.f32.mrf.mxu0
  %v1304 = vadd.f32 0.0, %v1303
  %1305 = vmatprep.mubr.bf16.mxu0 0
  %1306 = vmatmul.mubr.bf16.gmra.mxu0 %v1151
  %v1307 = vpop.f32.mrf.mxu0
  %v1308 = vadd.f32 0.0, %v1307
  %v1309 = vpop.f32.mrf.mxu0
  %v1310 = vadd.f32 0.0, %v1309
  %v1311 = vpop.f32.mrf.mxu0
  %v1312 = vadd.f32 0.0, %v1311
  %v1313 = vpop.f32.mrf.mxu0
  %v1314 = vadd.f32 0.0, %v1313
  %1315 = vmatprep.mubr.bf16.mxu0 0
  %1316 = vmatmul.mubr.bf16.gmra.mxu0 %v1152
  %v1317 = vpop.f32.mrf.mxu0
  %v1318 = vadd.f32 0.0, %v1317
  %v1319 = vpop.f32.mrf.mxu0
  %v1320 = vadd.f32 0.0, %v1319
  %v1321 = vpop.f32.mrf.mxu0
  %v1322 = vadd.f32 0.0, %v1321
  %v1323 = vpop.f32.mrf.mxu0
  %v1324 = vadd.f32 0.0, %v1323
  %1325 = vmatprep.mubr.bf16.mxu0 0
  %1326 = vmatmul.mubr.bf16.gmra.mxu0 %v1153
  %v1327 = vpop.f32.mrf.mxu0
  %v1328 = vadd.f32 0.0, %v1327
  %v1329 = vpop.f32.mrf.mxu0
  %v1330 = vadd.f32 0.0, %v1329
  %v1331 = vpop.f32.mrf.mxu0
  %v1332 = vadd.f32 0.0, %v1331
  %v1333 = vpop.f32.mrf.mxu0
  %v1334 = vadd.f32 0.0, %v1333
  %1335 = vmatprep.mubr.bf16.mxu0 0
  %1336 = vmatmul.mubr.bf16.gmra.mxu0 %v1154
  %v1337 = vpop.f32.mrf.mxu0
  %v1338 = vadd.f32 0.0, %v1337
  %v1339 = vpop.f32.mrf.mxu0
  %v1340 = vadd.f32 0.0, %v1339
  %v1341 = vpop.f32.mrf.mxu0
  %v1342 = vadd.f32 0.0, %v1341
  %v1343 = vpop.f32.mrf.mxu0
  %v1344 = vadd.f32 0.0, %v1343
  %1345 = vmatprep.mubr.bf16.mxu0 0
  %1346 = vmatmul.mubr.bf16.gmra.mxu0 %v1155
  %v1347 = vpop.f32.mrf.mxu0
  %v1348 = vadd.f32 0.0, %v1347
  %v1349 = vpop.f32.mrf.mxu0
  %v1350 = vadd.f32 0.0, %v1349
  %v1351 = vpop.f32.mrf.mxu0
  %v1352 = vadd.f32 0.0, %v1351
  %v1353 = vpop.f32.mrf.mxu0
  %v1354 = vadd.f32 0.0, %v1353
  %1355 = vmatprep.mubr.bf16.mxu0 0
  %1356 = vmatmul.mubr.bf16.gmra.mxu0 %v1156
  %v1357 = vpop.f32.mrf.mxu0
  %v1358 = vadd.f32 0.0, %v1357
  %v1359 = vpop.f32.mrf.mxu0
  %v1360 = vadd.f32 0.0, %v1359
  %v1361 = vpop.f32.mrf.mxu0
  %v1362 = vadd.f32 0.0, %v1361
  %v1363 = vpop.f32.mrf.mxu0
  %v1364 = vadd.f32 0.0, %v1363
  %1365 = vmatprep.mubr.bf16.mxu0 0
  %1366 = vmatmul.mubr.bf16.gmra.mxu0 %v1157
  %v1367 = vpop.f32.mrf.mxu0
  %v1368 = vadd.f32 0.0, %v1367
  %v1369 = vpop.f32.mrf.mxu0
  %v1370 = vadd.f32 0.0, %v1369
  %v1371 = vpop.f32.mrf.mxu0
  %v1372 = vadd.f32 0.0, %v1371
  %v1373 = vpop.f32.mrf.mxu0
  %v1374 = vadd.f32 0.0, %v1373
  %1375 = vmatprep.mubr.bf16.mxu0 0
  %1376 = vmatmul.mubr.bf16.gmra.mxu0 %v1158
  %v1377 = vpop.f32.mrf.mxu0
  %v1378 = vadd.f32 0.0, %v1377
  %v1379 = vpop.f32.mrf.mxu0
  %v1380 = vadd.f32 0.0, %v1379
  %v1381 = vpop.f32.mrf.mxu0
  %v1382 = vadd.f32 0.0, %v1381
  %v1383 = vpop.f32.mrf.mxu0
  %v1384 = vadd.f32 0.0, %v1383
  %1385 = vmatprep.mubr.bf16.mxu0 0
  %1386 = vmatmul.mubr.bf16.gmra.mxu0 %v1159
  %v1387 = vpop.f32.mrf.mxu0
  %v1388 = vadd.f32 0.0, %v1387
  %v1389 = vpop.f32.mrf.mxu0
  %v1390 = vadd.f32 0.0, %v1389
  %v1391 = vpop.f32.mrf.mxu0
  %v1392 = vadd.f32 0.0, %v1391
  %v1393 = vpop.f32.mrf.mxu0
  %v1394 = vadd.f32 0.0, %v1393
  %1395 = vmatprep.mubr.bf16.mxu0 0
  %1396 = vmatmul.mubr.bf16.gmra.mxu0 %v1160
  %v1397 = vpop.f32.mrf.mxu0
  %v1398 = vadd.f32 0.0, %v1397
  %v1399 = vpop.f32.mrf.mxu0
  %v1400 = vadd.f32 0.0, %v1399
  %v1401 = vpop.f32.mrf.mxu0
  %v1402 = vadd.f32 0.0, %v1401
  %v1403 = vpop.f32.mrf.mxu0
  %v1404 = vadd.f32 0.0, %v1403
  %1405 = vmatprep.mubr.bf16.mxu0 0
  %1406 = vmatmul.mubr.bf16.gmra.mxu0 %v1161
  %v1407 = vpop.f32.mrf.mxu0
  %v1408 = vadd.f32 0.0, %v1407
  %v1409 = vpop.f32.mrf.mxu0
  %v1410 = vadd.f32 0.0, %v1409
  %v1411 = vpop.f32.mrf.mxu0
  %v1412 = vadd.f32 0.0, %v1411
  %v1413 = vpop.f32.mrf.mxu0
  %v1414 = vadd.f32 0.0, %v1413
  %1415 = vmatprep.mubr.bf16.mxu0 0
  %1416 = vmatmul.mubr.bf16.gmra.mxu0 %v1162
  %v1417 = vpop.f32.mrf.mxu0
  %v1418 = vadd.f32 0.0, %v1417
  %v1419 = vpop.f32.mrf.mxu0
  %v1420 = vadd.f32 0.0, %v1419
  %v1421 = vpop.f32.mrf.mxu0
  %v1422 = vadd.f32 0.0, %v1421
  %v1423 = vpop.f32.mrf.mxu0
  %v1424 = vadd.f32 0.0, %v1423
  %1425 = vmatprep.mubr.bf16.mxu0 0
  %1426 = vmatmul.mubr.bf16.gmra.mxu0 %v1163
  %v1427 = vpop.f32.mrf.mxu0
  %v1428 = vadd.f32 0.0, %v1427
  %v1429 = vpop.f32.mrf.mxu0
  %v1430 = vadd.f32 0.0, %v1429
  %v1431 = vpop.f32.mrf.mxu0
  %v1432 = vadd.f32 0.0, %v1431
  %v1433 = vpop.f32.mrf.mxu0
  %v1434 = vadd.f32 0.0, %v1433
  %1435 = vmatprep.mubr.bf16.mxu0 0
  %1436 = vmatmul.mubr.bf16.gmra.mxu0 %v1164
  %v1437 = vpop.f32.mrf.mxu0
  %v1438 = vadd.f32 0.0, %v1437
  %v1439 = vpop.f32.mrf.mxu0
  %v1440 = vadd.f32 0.0, %v1439
  %v1441 = vpop.f32.mrf.mxu0
  %v1442 = vadd.f32 0.0, %v1441
  %v1443 = vpop.f32.mrf.mxu0
  %v1444 = vadd.f32 0.0, %v1443
  %1445 = vmatprep.mubr.bf16.mxu0 0
  %1446 = vmatmul.mubr.bf16.gmra.mxu0 %v1165
  %v1447 = vpop.f32.mrf.mxu0
  %v1448 = vadd.f32 0.0, %v1447
  %v1449 = vpop.f32.mrf.mxu0
  %v1450 = vadd.f32 0.0, %v1449
  %v1451 = vpop.f32.mrf.mxu0
  %v1452 = vadd.f32 0.0, %v1451
  %v1453 = vpop.f32.mrf.mxu0
  %v1454 = vadd.f32 0.0, %v1453
  %1455 = vdwg.mxu0
  %v1456 = vadd.f32 %v1054, %v1298
  %v1457 = vadd.f32 %v1055, %v1300
  %v1458 = vadd.f32 %v1056, %v1302
  %v1459 = vadd.f32 %v1057, %v1304
  %v1460 = vadd.f32 %v1058, %v1308
  %v1461 = vadd.f32 %v1059, %v1310
  %v1462 = vadd.f32 %v1060, %v1312
  %v1463 = vadd.f32 %v1061, %v1314
  %v1464 = vadd.f32 %v1062, %v1318
  %v1465 = vadd.f32 %v1063, %v1320
  %v1466 = vadd.f32 %v1064, %v1322
  %v1467 = vadd.f32 %v1065, %v1324
  %v1468 = vadd.f32 %v1066, %v1328
  %v1469 = vadd.f32 %v1067, %v1330
  %v1470 = vadd.f32 %v1068, %v1332
  %v1471 = vadd.f32 %v1069, %v1334
  %v1472 = vadd.f32 %v1070, %v1338
  %v1473 = vadd.f32 %v1071, %v1340
  %v1474 = vadd.f32 %v1072, %v1342
  %v1475 = vadd.f32 %v1073, %v1344
  %v1476 = vadd.f32 %v1074, %v1348
  %v1477 = vadd.f32 %v1075, %v1350
  %v1478 = vadd.f32 %v1076, %v1352
  %v1479 = vadd.f32 %v1077, %v1354
  %v1480 = vadd.f32 %v1078, %v1358
  %v1481 = vadd.f32 %v1079, %v1360
  %v1482 = vadd.f32 %v1080, %v1362
  %v1483 = vadd.f32 %v1081, %v1364
  %v1484 = vadd.f32 %v1082, %v1368
  %v1485 = vadd.f32 %v1083, %v1370
  %v1486 = vadd.f32 %v1084, %v1372
  %v1487 = vadd.f32 %v1085, %v1374
  %v1488 = vadd.f32 %v1086, %v1378
  %v1489 = vadd.f32 %v1087, %v1380
  %v1490 = vadd.f32 %v1088, %v1382
  %v1491 = vadd.f32 %v1089, %v1384
  %v1492 = vadd.f32 %v1090, %v1388
  %v1493 = vadd.f32 %v1091, %v1390
  %v1494 = vadd.f32 %v1092, %v1392
  %v1495 = vadd.f32 %v1093, %v1394
  %v1496 = vadd.f32 %v1094, %v1398
  %v1497 = vadd.f32 %v1095, %v1400
  %v1498 = vadd.f32 %v1096, %v1402
  %v1499 = vadd.f32 %v1097, %v1404
  %v1500 = vadd.f32 %v1098, %v1408
  %v1501 = vadd.f32 %v1099, %v1410
  %v1502 = vadd.f32 %v1100, %v1412
  %v1503 = vadd.f32 %v1101, %v1414
  %v1504 = vadd.f32 %v1102, %v1418
  %v1505 = vadd.f32 %v1103, %v1420
  %v1506 = vadd.f32 %v1104, %v1422
  %v1507 = vadd.f32 %v1105, %v1424
  %v1508 = vadd.f32 %v1106, %v1428
  %v1509 = vadd.f32 %v1107, %v1430
  %v1510 = vadd.f32 %v1108, %v1432
  %v1511 = vadd.f32 %v1109, %v1434
  %v1512 = vadd.f32 %v1110, %v1438
  %v1513 = vadd.f32 %v1111, %v1440
  %v1514 = vadd.f32 %v1112, %v1442
  %v1515 = vadd.f32 %v1113, %v1444
  %v1516 = vadd.f32 %v1114, %v1448
  %v1517 = vadd.f32 %v1115, %v1450
  %v1518 = vadd.f32 %v1116, %v1452
  %v1519 = vadd.f32 %v1117, %v1454
  %v1520 = vld [vmem:[%s0 + $0x4] sm:$0xff]
  %v1521 = vld [vmem:[%s0 + $0xc] sm:$0xff]
  %v1522 = vld [vmem:[%s0 + $0x14] sm:$0xff]
  %v1523 = vld [vmem:[%s0 + $0x1c] sm:$0xff]
  %v1524 = vld [vmem:[%s0 + $0x24] sm:$0xff]
  %v1525 = vld [vmem:[%s0 + $0x2c] sm:$0xff]
  %v1526 = vld [vmem:[%s0 + $0x34] sm:$0xff]
  %v1527 = vld [vmem:[%s0 + $0x3c] sm:$0xff]
  %v1528 = vld [vmem:[%s0 + $0x44] sm:$0xff]
  %v1529 = vld [vmem:[%s0 + $0x4c] sm:$0xff]
  %v1530 = vld [vmem:[%s0 + $0x54] sm:$0xff]
  %v1531 = vld [vmem:[%s0 + $0x5c] sm:$0xff]
  %v1532 = vld [vmem:[%s0 + $0x64] sm:$0xff]
  %v1533 = vld [vmem:[%s0 + $0x6c] sm:$0xff]
  %v1534 = vld [vmem:[%s0 + $0x74] sm:$0xff]
  %v1535 = vld [vmem:[%s0 + $0x7c] sm:$0xff]
  %v1536 = vld [vmem:[%s0 + $0x84] sm:$0xff]
  %v1537 = vld [vmem:[%s0 + $0x8c] sm:$0xff]
  %v1538 = vld [vmem:[%s0 + $0x94] sm:$0xff]
  %v1539 = vld [vmem:[%s0 + $0x9c] sm:$0xff]
  %v1540 = vld [vmem:[%s0 + $0xa4] sm:$0xff]
  %v1541 = vld [vmem:[%s0 + $0xac] sm:$0xff]
  %v1542 = vld [vmem:[%s0 + $0xb4] sm:$0xff]
  %v1543 = vld [vmem:[%s0 + $0xbc] sm:$0xff]
  %v1544 = vld [vmem:[%s0 + $0xc4] sm:$0xff]
  %v1545 = vld [vmem:[%s0 + $0xcc] sm:$0xff]
  %v1546 = vld [vmem:[%s0 + $0xd4] sm:$0xff]
  %v1547 = vld [vmem:[%s0 + $0xdc] sm:$0xff]
  %v1548 = vld [vmem:[%s0 + $0xe4] sm:$0xff]
  %v1549 = vld [vmem:[%s0 + $0xec] sm:$0xff]
  %v1550 = vld [vmem:[%s0 + $0xf4] sm:$0xff]
  %v1551 = vld [vmem:[%s0 + $0xfc] sm:$0xf]
  %v1552 = vpack.c.bf16 %v1521, %v1520
  %v1553 = vpack.c.bf16 %v1523, %v1522
  %v1554 = vpack.c.bf16 %v1525, %v1524
  %v1555 = vpack.c.bf16 %v1527, %v1526
  %v1556 = vpack.c.bf16 %v1529, %v1528
  %v1557 = vpack.c.bf16 %v1531, %v1530
  %v1558 = vpack.c.bf16 %v1533, %v1532
  %v1559 = vpack.c.bf16 %v1535, %v1534
  %v1560 = vpack.c.bf16 %v1537, %v1536
  %v1561 = vpack.c.bf16 %v1539, %v1538
  %v1562 = vpack.c.bf16 %v1541, %v1540
  %v1563 = vpack.c.bf16 %v1543, %v1542
  %v1564 = vpack.c.bf16 %v1545, %v1544
  %v1565 = vpack.c.bf16 %v1547, %v1546
  %v1566 = vpack.c.bf16 %v1549, %v1548
  %v1567 = vpack.c.bf16 %v1551, %v1550
  %s1568 = scalar_lea.vmem %s1, 512
  %v1569 = vld [vmem:[%s1568] sm:$0xff]
  %v1570 = vld [vmem:[%s1568 + $0x8] sm:$0xff]
  %v1571 = vld [vmem:[%s1568 + $0x10] sm:$0xff]
  %v1572 = vld [vmem:[%s1568 + $0x18] sm:$0xff]
  %v1573 = vld [vmem:[%s1568 + $0x20] sm:$0xff]
  %v1574 = vld [vmem:[%s1568 + $0x28] sm:$0xff]
  %v1575 = vld [vmem:[%s1568 + $0x30] sm:$0xff]
  %v1576 = vld [vmem:[%s1568 + $0x38] sm:$0xff]
  %v1577 = vld [vmem:[%s1568 + $0x40] sm:$0xff]
  %v1578 = vld [vmem:[%s1568 + $0x48] sm:$0xff]
  %v1579 = vld [vmem:[%s1568 + $0x50] sm:$0xff]
  %v1580 = vld [vmem:[%s1568 + $0x58] sm:$0xff]
  %v1581 = vld [vmem:[%s1568 + $0x60] sm:$0xff]
  %v1582 = vld [vmem:[%s1568 + $0x68] sm:$0xff]
  %v1583 = vld [vmem:[%s1568 + $0x70] sm:$0xff]
  %v1584 = vld [vmem:[%s1568 + $0x78] sm:$0xff]
  %v1601 = vunpack.c.l.b16 %v1569
  %v1602 = vunpack.c.h.b16 %v1569
  %v1603 = vunpack.c.l.b16 %v1570
  %v1604 = vunpack.c.h.b16 %v1570
  %v1605 = vunpack.c.l.b16 %v1571
  %v1606 = vunpack.c.h.b16 %v1571
  %v1607 = vunpack.c.l.b16 %v1572
  %v1608 = vunpack.c.h.b16 %v1572
  %v1609 = vunpack.c.l.b16 %v1573
  %v1610 = vunpack.c.h.b16 %v1573
  %v1611 = vunpack.c.l.b16 %v1574
  %v1612 = vunpack.c.h.b16 %v1574
  %v1613 = vunpack.c.l.b16 %v1575
  %v1614 = vunpack.c.h.b16 %v1575
  %v1615 = vunpack.c.l.b16 %v1576
  %v1616 = vunpack.c.h.b16 %v1576
  %v1617 = vunpack.c.l.b16 %v1577
  %v1618 = vunpack.c.h.b16 %v1577
  %v1619 = vunpack.c.l.b16 %v1578
  %v1620 = vunpack.c.h.b16 %v1578
  %v1621 = vunpack.c.l.b16 %v1579
  %v1622 = vunpack.c.h.b16 %v1579
  %v1623 = vunpack.c.l.b16 %v1580
  %v1624 = vunpack.c.h.b16 %v1580
  %v1625 = vunpack.c.l.b16 %v1581
  %v1626 = vunpack.c.h.b16 %v1581
  %v1627 = vunpack.c.l.b16 %v1582
  %v1628 = vunpack.c.h.b16 %v1582
  %v1629 = vunpack.c.l.b16 %v1583
  %v1630 = vunpack.c.h.b16 %v1583
  %v1631 = vunpack.c.l.b16 %v1584
  %v1632 = vunpack.c.h.b16 %v1584
  %v1633 = vpack.c.b16 %v1603, %v1601
  %v1634 = vpack.c.b16 %v1604, %v1602
  %v1635 = vpack.c.b16 %v1607, %v1605
  %v1636 = vpack.c.b16 %v1608, %v1606
  %v1637 = vpack.c.b16 %v1611, %v1609
  %v1638 = vpack.c.b16 %v1612, %v1610
  %v1639 = vpack.c.b16 %v1615, %v1613
  %v1640 = vpack.c.b16 %v1616, %v1614
  %v1641 = vpack.c.b16 %v1619, %v1617
  %v1642 = vpack.c.b16 %v1620, %v1618
  %v1643 = vpack.c.b16 %v1623, %v1621
  %v1644 = vpack.c.b16 %v1624, %v1622
  %v1645 = vpack.c.b16 %v1627, %v1625
  %v1646 = vpack.c.b16 %v1628, %v1626
  %v1647 = vpack.c.b16 %v1631, %v1629
  %v1648 = vpack.c.b16 %v1632, %v1630
  %1665 = vmatprep.subr.bf16.mxu0 %v1648
  %1666 = vmatpush1.bf16.msra.mxu0 %v1647
  %1667 = vmatprep.subr.bf16.mxu0 %v1646
  %1668 = vmatpush1.bf16.msra.mxu0 %v1645
  %1669 = vmatprep.subr.bf16.mxu0 %v1644
  %1670 = vmatpush1.bf16.msra.mxu0 %v1643
  %1671 = vmatprep.subr.bf16.mxu0 %v1642
  %1672 = vmatpush1.bf16.msra.mxu0 %v1641
  %1673 = vmatprep.subr.bf16.mxu0 %v1640
  %1674 = vmatpush1.bf16.msra.mxu0 %v1639
  %1675 = vmatprep.subr.bf16.mxu0 %v1638
  %1676 = vmatpush1.bf16.msra.mxu0 %v1637
  %1677 = vmatprep.subr.bf16.mxu0 %v1636
  %1678 = vmatpush1.bf16.msra.mxu0 %v1635
  %1679 = vmatprep.subr.bf16.mxu0 %v1634
  %1680 = vmatpush1.bf16.msra.mxu0 %v1633
  %1681 = vmatprep.subr.bf16.mxu0 0
  %1682 = vmatpush2.bf16.msra.mxu0 0
  %1683 = vmatprep.subr.bf16.mxu0 0
  %1684 = vmatpush2.bf16.msra.mxu0 0
  %1685 = vmatprep.subr.bf16.mxu0 0
  %1686 = vmatpush2.bf16.msra.mxu0 0
  %1687 = vmatprep.subr.bf16.mxu0 0
  %1688 = vmatpush2.bf16.msra.mxu0 0
  %1689 = vmatprep.subr.bf16.mxu0 0
  %1690 = vmatpush2.bf16.msra.mxu0 0
  %1691 = vmatprep.subr.bf16.mxu0 0
  %1692 = vmatpush2.bf16.msra.mxu0 0
  %1693 = vmatprep.subr.bf16.mxu0 0
  %1694 = vmatpush2.bf16.msra.mxu0 0
  %1695 = vmatprep.subr.bf16.mxu0 0
  %1696 = vmatpush2.bf16.msra.mxu0 0
  %1697 = vmatprep.mubr.bf16.mxu0 0
  %1698 = vmatmul.mubr.bf16.gmra.mxu0 %v1552
  %v1699 = vpop.f32.mrf.mxu0
  %v1700 = vadd.f32 0.0, %v1699
  %v1701 = vpop.f32.mrf.mxu0
  %v1702 = vadd.f32 0.0, %v1701
  %v1703 = vpop.f32.mrf.mxu0
  %v1704 = vadd.f32 0.0, %v1703
  %v1705 = vpop.f32.mrf.mxu0
  %v1706 = vadd.f32 0.0, %v1705
  %1707 = vmatprep.mubr.bf16.mxu0 0
  %1708 = vmatmul.mubr.bf16.gmra.mxu0 %v1553
  %v1709 = vpop.f32.mrf.mxu0
  %v1710 = vadd.f32 0.0, %v1709
  %v1711 = vpop.f32.mrf.mxu0
  %v1712 = vadd.f32 0.0, %v1711
  %v1713 = vpop.f32.mrf.mxu0
  %v1714 = vadd.f32 0.0, %v1713
  %v1715 = vpop.f32.mrf.mxu0
  %v1716 = vadd.f32 0.0, %v1715
  %1717 = vmatprep.mubr.bf16.mxu0 0
  %1718 = vmatmul.mubr.bf16.gmra.mxu0 %v1554
  %v1719 = vpop.f32.mrf.mxu0
  %v1720 = vadd.f32 0.0, %v1719
  %v1721 = vpop.f32.mrf.mxu0
  %v1722 = vadd.f32 0.0, %v1721
  %v1723 = vpop.f32.mrf.mxu0
  %v1724 = vadd.f32 0.0, %v1723
  %v1725 = vpop.f32.mrf.mxu0
  %v1726 = vadd.f32 0.0, %v1725
  %1727 = vmatprep.mubr.bf16.mxu0 0
  %1728 = vmatmul.mubr.bf16.gmra.mxu0 %v1555
  %v1729 = vpop.f32.mrf.mxu0
  %v1730 = vadd.f32 0.0, %v1729
  %v1731 = vpop.f32.mrf.mxu0
  %v1732 = vadd.f32 0.0, %v1731
  %v1733 = vpop.f32.mrf.mxu0
  %v1734 = vadd.f32 0.0, %v1733
  %v1735 = vpop.f32.mrf.mxu0
  %v1736 = vadd.f32 0.0, %v1735
  %1737 = vmatprep.mubr.bf16.mxu0 0
  %1738 = vmatmul.mubr.bf16.gmra.mxu0 %v1556
  %v1739 = vpop.f32.mrf.mxu0
  %v1740 = vadd.f32 0.0, %v1739
  %v1741 = vpop.f32.mrf.mxu0
  %v1742 = vadd.f32 0.0, %v1741
  %v1743 = vpop.f32.mrf.mxu0
  %v1744 = vadd.f32 0.0, %v1743
  %v1745 = vpop.f32.mrf.mxu0
  %v1746 = vadd.f32 0.0, %v1745
  %1747 = vmatprep.mubr.bf16.mxu0 0
  %1748 = vmatmul.mubr.bf16.gmra.mxu0 %v1557
  %v1749 = vpop.f32.mrf.mxu0
  %v1750 = vadd.f32 0.0, %v1749
  %v1751 = vpop.f32.mrf.mxu0
  %v1752 = vadd.f32 0.0, %v1751
  %v1753 = vpop.f32.mrf.mxu0
  %v1754 = vadd.f32 0.0, %v1753
  %v1755 = vpop.f32.mrf.mxu0
  %v1756 = vadd.f32 0.0, %v1755
  %1757 = vmatprep.mubr.bf16.mxu0 0
  %1758 = vmatmul.mubr.bf16.gmra.mxu0 %v1558
  %v1759 = vpop.f32.mrf.mxu0
  %v1760 = vadd.f32 0.0, %v1759
  %v1761 = vpop.f32.mrf.mxu0
  %v1762 = vadd.f32 0.0, %v1761
  %v1763 = vpop.f32.mrf.mxu0
  %v1764 = vadd.f32 0.0, %v1763
  %v1765 = vpop.f32.mrf.mxu0
  %v1766 = vadd.f32 0.0, %v1765
  %1767 = vmatprep.mubr.bf16.mxu0 0
  %1768 = vmatmul.mubr.bf16.gmra.mxu0 %v1559
  %v1769 = vpop.f32.mrf.mxu0
  %v1770 = vadd.f32 0.0, %v1769
  %v1771 = vpop.f32.mrf.mxu0
  %v1772 = vadd.f32 0.0, %v1771
  %v1773 = vpop.f32.mrf.mxu0
  %v1774 = vadd.f32 0.0, %v1773
  %v1775 = vpop.f32.mrf.mxu0
  %v1776 = vadd.f32 0.0, %v1775
  %1777 = vmatprep.mubr.bf16.mxu0 0
  %1778 = vmatmul.mubr.bf16.gmra.mxu0 %v1560
  %v1779 = vpop.f32.mrf.mxu0
  %v1780 = vadd.f32 0.0, %v1779
  %v1781 = vpop.f32.mrf.mxu0
  %v1782 = vadd.f32 0.0, %v1781
  %v1783 = vpop.f32.mrf.mxu0
  %v1784 = vadd.f32 0.0, %v1783
  %v1785 = vpop.f32.mrf.mxu0
  %v1786 = vadd.f32 0.0, %v1785
  %1787 = vmatprep.mubr.bf16.mxu0 0
  %1788 = vmatmul.mubr.bf16.gmra.mxu0 %v1561
  %v1789 = vpop.f32.mrf.mxu0
  %v1790 = vadd.f32 0.0, %v1789
  %v1791 = vpop.f32.mrf.mxu0
  %v1792 = vadd.f32 0.0, %v1791
  %v1793 = vpop.f32.mrf.mxu0
  %v1794 = vadd.f32 0.0, %v1793
  %v1795 = vpop.f32.mrf.mxu0
  %v1796 = vadd.f32 0.0, %v1795
  %1797 = vmatprep.mubr.bf16.mxu0 0
  %1798 = vmatmul.mubr.bf16.gmra.mxu0 %v1562
  %v1799 = vpop.f32.mrf.mxu0
  %v1800 = vadd.f32 0.0, %v1799
  %v1801 = vpop.f32.mrf.mxu0
  %v1802 = vadd.f32 0.0, %v1801
  %v1803 = vpop.f32.mrf.mxu0
  %v1804 = vadd.f32 0.0, %v1803
  %v1805 = vpop.f32.mrf.mxu0
  %v1806 = vadd.f32 0.0, %v1805
  %1807 = vmatprep.mubr.bf16.mxu0 0
  %1808 = vmatmul.mubr.bf16.gmra.mxu0 %v1563
  %v1809 = vpop.f32.mrf.mxu0
  %v1810 = vadd.f32 0.0, %v1809
  %v1811 = vpop.f32.mrf.mxu0
  %v1812 = vadd.f32 0.0, %v1811
  %v1813 = vpop.f32.mrf.mxu0
  %v1814 = vadd.f32 0.0, %v1813
  %v1815 = vpop.f32.mrf.mxu0
  %v1816 = vadd.f32 0.0, %v1815
  %1817 = vmatprep.mubr.bf16.mxu0 0
  %1818 = vmatmul.mubr.bf16.gmra.mxu0 %v1564
  %v1819 = vpop.f32.mrf.mxu0
  %v1820 = vadd.f32 0.0, %v1819
  %v1821 = vpop.f32.mrf.mxu0
  %v1822 = vadd.f32 0.0, %v1821
  %v1823 = vpop.f32.mrf.mxu0
  %v1824 = vadd.f32 0.0, %v1823
  %v1825 = vpop.f32.mrf.mxu0
  %v1826 = vadd.f32 0.0, %v1825
  %1827 = vmatprep.mubr.bf16.mxu0 0
  %1828 = vmatmul.mubr.bf16.gmra.mxu0 %v1565
  %v1829 = vpop.f32.mrf.mxu0
  %v1830 = vadd.f32 0.0, %v1829
  %v1831 = vpop.f32.mrf.mxu0
  %v1832 = vadd.f32 0.0, %v1831
  %v1833 = vpop.f32.mrf.mxu0
  %v1834 = vadd.f32 0.0, %v1833
  %v1835 = vpop.f32.mrf.mxu0
  %v1836 = vadd.f32 0.0, %v1835
  %1837 = vmatprep.mubr.bf16.mxu0 0
  %1838 = vmatmul.mubr.bf16.gmra.mxu0 %v1566
  %v1839 = vpop.f32.mrf.mxu0
  %v1840 = vadd.f32 0.0, %v1839
  %v1841 = vpop.f32.mrf.mxu0
  %v1842 = vadd.f32 0.0, %v1841
  %v1843 = vpop.f32.mrf.mxu0
  %v1844 = vadd.f32 0.0, %v1843
  %v1845 = vpop.f32.mrf.mxu0
  %v1846 = vadd.f32 0.0, %v1845
  %1847 = vmatprep.mubr.bf16.mxu0 0
  %1848 = vmatmul.mubr.bf16.gmra.mxu0 %v1567
  %v1849 = vpop.f32.mrf.mxu0
  %v1850 = vadd.f32 0.0, %v1849
  %v1851 = vpop.f32.mrf.mxu0
  %v1852 = vadd.f32 0.0, %v1851
  %v1853 = vpop.f32.mrf.mxu0
  %v1854 = vadd.f32 0.0, %v1853
  %v1855 = vpop.f32.mrf.mxu0
  %v1856 = vadd.f32 0.0, %v1855
  %1857 = vdwg.mxu0
  %v1858 = vadd.f32 %v1456, %v1700
  %v1859 = vadd.f32 %v1457, %v1702
  %v1860 = vadd.f32 %v1458, %v1704
  %v1861 = vadd.f32 %v1459, %v1706
  %v1862 = vadd.f32 %v1460, %v1710
  %v1863 = vadd.f32 %v1461, %v1712
  %v1864 = vadd.f32 %v1462, %v1714
  %v1865 = vadd.f32 %v1463, %v1716
  %v1866 = vadd.f32 %v1464, %v1720
  %v1867 = vadd.f32 %v1465, %v1722
  %v1868 = vadd.f32 %v1466, %v1724
  %v1869 = vadd.f32 %v1467, %v1726
  %v1870 = vadd.f32 %v1468, %v1730
  %v1871 = vadd.f32 %v1469, %v1732
  %v1872 = vadd.f32 %v1470, %v1734
  %v1873 = vadd.f32 %v1471, %v1736
  %v1874 = vadd.f32 %v1472, %v1740
  %v1875 = vadd.f32 %v1473, %v1742
  %v1876 = vadd.f32 %v1474, %v1744
  %v1877 = vadd.f32 %v1475, %v1746
  %v1878 = vadd.f32 %v1476, %v1750
  %v1879 = vadd.f32 %v1477, %v1752
  %v1880 = vadd.f32 %v1478, %v1754
  %v1881 = vadd.f32 %v1479, %v1756
  %v1882 = vadd.f32 %v1480, %v1760
  %v1883 = vadd.f32 %v1481, %v1762
  %v1884 = vadd.f32 %v1482, %v1764
  %v1885 = vadd.f32 %v1483, %v1766
  %v1886 = vadd.f32 %v1484, %v1770
  %v1887 = vadd.f32 %v1485, %v1772
  %v1888 = vadd.f32 %v1486, %v1774
  %v1889 = vadd.f32 %v1487, %v1776
  %v1890 = vadd.f32 %v1488, %v1780
  %v1891 = vadd.f32 %v1489, %v1782
  %v1892 = vadd.f32 %v1490, %v1784
  %v1893 = vadd.f32 %v1491, %v1786
  %v1894 = vadd.f32 %v1492, %v1790
  %v1895 = vadd.f32 %v1493, %v1792
  %v1896 = vadd.f32 %v1494, %v1794
  %v1897 = vadd.f32 %v1495, %v1796
  %v1898 = vadd.f32 %v1496, %v1800
  %v1899 = vadd.f32 %v1497, %v1802
  %v1900 = vadd.f32 %v1498, %v1804
  %v1901 = vadd.f32 %v1499, %v1806
  %v1902 = vadd.f32 %v1500, %v1810
  %v1903 = vadd.f32 %v1501, %v1812
  %v1904 = vadd.f32 %v1502, %v1814
  %v1905 = vadd.f32 %v1503, %v1816
  %v1906 = vadd.f32 %v1504, %v1820
  %v1907 = vadd.f32 %v1505, %v1822
  %v1908 = vadd.f32 %v1506, %v1824
  %v1909 = vadd.f32 %v1507, %v1826
  %v1910 = vadd.f32 %v1508, %v1830
  %v1911 = vadd.f32 %v1509, %v1832
  %v1912 = vadd.f32 %v1510, %v1834
  %v1913 = vadd.f32 %v1511, %v1836
  %v1914 = vadd.f32 %v1512, %v1840
  %v1915 = vadd.f32 %v1513, %v1842
  %v1916 = vadd.f32 %v1514, %v1844
  %v1917 = vadd.f32 %v1515, %v1846
  %v1918 = vadd.f32 %v1516, %v1850
  %v1919 = vadd.f32 %v1517, %v1852
  %v1920 = vadd.f32 %v1518, %v1854
  %v1921 = vadd.f32 %v1519, %v1856
  %v1922 = vmax.f32 %v1858, %v1859
  %v1923 = vmax.f32 %v1860, %v1861
  %v1924 = vmax.f32 %v1862, %v1863
  %v1925 = vmax.f32 %v1864, %v1865
  %v1926 = vmax.f32 %v1866, %v1867
  %v1927 = vmax.f32 %v1868, %v1869
  %v1928 = vmax.f32 %v1870, %v1871
  %v1929 = vmax.f32 %v1872, %v1873
  %v1930 = vmax.f32 %v1874, %v1875
  %v1931 = vmax.f32 %v1876, %v1877
  %v1932 = vmax.f32 %v1878, %v1879
  %v1933 = vmax.f32 %v1880, %v1881
  %v1934 = vmax.f32 %v1882, %v1883
  %v1935 = vmax.f32 %v1884, %v1885
  %v1936 = vmax.f32 %v1886, %v1887
  %v1937 = vmax.f32 %v1888, %v1889
  %v1938 = vmax.f32 %v1890, %v1891
  %v1939 = vmax.f32 %v1892, %v1893
  %v1940 = vmax.f32 %v1894, %v1895
  %v1941 = vmax.f32 %v1896, %v1897
  %v1942 = vmax.f32 %v1898, %v1899
  %v1943 = vmax.f32 %v1900, %v1901
  %v1944 = vmax.f32 %v1902, %v1903
  %v1945 = vmax.f32 %v1904, %v1905
  %v1946 = vmax.f32 %v1906, %v1907
  %v1947 = vmax.f32 %v1908, %v1909
  %v1948 = vmax.f32 %v1910, %v1911
  %v1949 = vmax.f32 %v1912, %v1913
  %v1950 = vmax.f32 %v1914, %v1915
  %v1951 = vmax.f32 %v1916, %v1917
  %v1952 = vmax.f32 %v1918, %v1919
  %v1953 = vmax.f32 %v1920, %v1921
  %1954 = vst [vmem:[#allocation2] sm:$0xff] %v1922
  %1955 = vst [vmem:[#allocation2 + $0x8] sm:$0xff] %v1923
  %1956 = vst [vmem:[#allocation2 + $0x10] sm:$0xff] %v1924
  %1957 = vst [vmem:[#allocation2 + $0x18] sm:$0xff] %v1925
  %1958 = vst [vmem:[#allocation2 + $0x20] sm:$0xff] %v1926
  %1959 = vst [vmem:[#allocation2 + $0x28] sm:$0xff] %v1927
  %1960 = vst [vmem:[#allocation2 + $0x30] sm:$0xff] %v1928
  %1961 = vst [vmem:[#allocation2 + $0x38] sm:$0xff] %v1929
  %1962 = vst [vmem:[#allocation2 + $0x40] sm:$0xff] %v1930
  %1963 = vst [vmem:[#allocation2 + $0x48] sm:$0xff] %v1931
  %1964 = vst [vmem:[#allocation2 + $0x50] sm:$0xff] %v1932
  %1965 = vst [vmem:[#allocation2 + $0x58] sm:$0xff] %v1933
  %1966 = vst [vmem:[#allocation2 + $0x60] sm:$0xff] %v1934
  %1967 = vst [vmem:[#allocation2 + $0x68] sm:$0xff] %v1935
  %1968 = vst [vmem:[#allocation2 + $0x70] sm:$0xff] %v1936
  %1969 = vst [vmem:[#allocation2 + $0x78] sm:$0xff] %v1937
  %1970 = vst [vmem:[#allocation2 + $0x80] sm:$0xff] %v1938
  %1971 = vst [vmem:[#allocation2 + $0x88] sm:$0xff] %v1939
  %1972 = vst [vmem:[#allocation2 + $0x90] sm:$0xff] %v1940
  %1973 = vst [vmem:[#allocation2 + $0x98] sm:$0xff] %v1941
  %1974 = vst [vmem:[#allocation2 + $0xa0] sm:$0xff] %v1942
  %1975 = vst [vmem:[#allocation2 + $0xa8] sm:$0xff] %v1943
  %1976 = vst [vmem:[#allocation2 + $0xb0] sm:$0xff] %v1944
  %1977 = vst [vmem:[#allocation2 + $0xb8] sm:$0xff] %v1945
  %1978 = vst [vmem:[#allocation2 + $0xc0] sm:$0xff] %v1946
  %1979 = vst [vmem:[#allocation2 + $0xc8] sm:$0xff] %v1947
  %1980 = vst [vmem:[#allocation2 + $0xd0] sm:$0xff] %v1948
  %1981 = vst [vmem:[#allocation2 + $0xd8] sm:$0xff] %v1949
  %1982 = vst [vmem:[#allocation2 + $0xe0] sm:$0xff] %v1950
  %1983 = vst [vmem:[#allocation2 + $0xe8] sm:$0xff] %v1951
  %1984 = vst [vmem:[#allocation2 + $0xf0] sm:$0xff] %v1952
  %1985 = vst [vmem:[#allocation2 + $0xf8] sm:$0xf] %v1953
  %v1986 = vld [vmem:[#allocation2] ss:$2 sm:$0xff]
  %s1987 = scalar_lea.vmem [#allocation2], 16
  %v1988 = vld [vmem:[%s1987] ss:$2 sm:$0xff]
  %s1989 = scalar_lea.vmem [#allocation2], 32
  %v1990 = vld [vmem:[%s1989] ss:$2 sm:$0xff]
  %s1991 = scalar_lea.vmem [#allocation2], 48
  %v1992 = vld [vmem:[%s1991] ss:$2 sm:$0xff]
  %s1993 = scalar_lea.vmem [#allocation2], 64
  %v1994 = vld [vmem:[%s1993] ss:$2 sm:$0xff]
  %s1995 = scalar_lea.vmem [#allocation2], 80
  %v1996 = vld [vmem:[%s1995] ss:$2 sm:$0xff]
  %s1997 = scalar_lea.vmem [#allocation2], 96
  %v1998 = vld [vmem:[%s1997] ss:$2 sm:$0xff]
  %s1999 = scalar_lea.vmem [#allocation2], 112
  %v2000 = vld [vmem:[%s1999] ss:$2 sm:$0xff]
  %s2001 = scalar_lea.vmem [#allocation2], 128
  %v2002 = vld [vmem:[%s2001] ss:$2 sm:$0xff]
  %s2003 = scalar_lea.vmem [#allocation2], 144
  %v2004 = vld [vmem:[%s2003] ss:$2 sm:$0xff]
  %s2005 = scalar_lea.vmem [#allocation2], 160
  %v2006 = vld [vmem:[%s2005] ss:$2 sm:$0xff]
  %s2007 = scalar_lea.vmem [#allocation2], 176
  %v2008 = vld [vmem:[%s2007] ss:$2 sm:$0xff]
  %s2009 = scalar_lea.vmem [#allocation2], 192
  %v2010 = vld [vmem:[%s2009] ss:$2 sm:$0xff]
  %s2011 = scalar_lea.vmem [#allocation2], 208
  %v2012 = vld [vmem:[%s2011] ss:$2 sm:$0xff]
  %s2013 = scalar_lea.vmem [#allocation2], 224
  %v2014 = vld [vmem:[%s2013] ss:$2 sm:$0xff]
  %s2015 = scalar_lea.vmem [#allocation2], 240
  %v2016 = vld [vmem:[%s2015] ss:$2 sm:$0xff]
  %s2017 = scalar_lea.vmem [#allocation2], 1
  %v2018 = vld [vmem:[%s2017] ss:$2 sm:$0xff]
  %s2019 = scalar_lea.vmem [#allocation2], 17
  %v2020 = vld [vmem:[%s2019] ss:$2 sm:$0xff]
  %s2021 = scalar_lea.vmem [#allocation2], 33
  %v2022 = vld [vmem:[%s2021] ss:$2 sm:$0xff]
  %s2023 = scalar_lea.vmem [#allocation2], 49
  %v2024 = vld [vmem:[%s2023] ss:$2 sm:$0xff]
  %s2025 = scalar_lea.vmem [#allocation2], 65
  %v2026 = vld [vmem:[%s2025] ss:$2 sm:$0xff]
  %s2027 = scalar_lea.vmem [#allocation2], 81
  %v2028 = vld [vmem:[%s2027] ss:$2 sm:$0xff]
  %s2029 = scalar_lea.vmem [#allocation2], 97
  %v2030 = vld [vmem:[%s2029] ss:$2 sm:$0xff]
  %s2031 = scalar_lea.vmem [#allocation2], 113
  %v2032 = vld [vmem:[%s2031] ss:$2 sm:$0xff]
  %s2033 = scalar_lea.vmem [#allocation2], 129
  %v2034 = vld [vmem:[%s2033] ss:$2 sm:$0xff]
  %s2035 = scalar_lea.vmem [#allocation2], 145
  %v2036 = vld [vmem:[%s2035] ss:$2 sm:$0xff]
  %s2037 = scalar_lea.vmem [#allocation2], 161
  %v2038 = vld [vmem:[%s2037] ss:$2 sm:$0xff]
  %s2039 = scalar_lea.vmem [#allocation2], 177
  %v2040 = vld [vmem:[%s2039] ss:$2 sm:$0xff]
  %s2041 = scalar_lea.vmem [#allocation2], 193
  %v2042 = vld [vmem:[%s2041] ss:$2 sm:$0xff]
  %s2043 = scalar_lea.vmem [#allocation2], 209
  %v2044 = vld [vmem:[%s2043] ss:$2 sm:$0xff]
  %s2045 = scalar_lea.vmem [#allocation2], 225
  %v2046 = vld [vmem:[%s2045] ss:$2 sm:$0xff]
  %s2047 = scalar_lea.vmem [#allocation2], 241
  %v2048 = vld [vmem:[%s2047] ss:$2 sm:$0xff]
  %v2049 = vmax.f32 %v1986, %v2018
  %v2050 = vmax.f32 %v1988, %v2020
  %v2051 = vmax.f32 %v1990, %v2022
  %v2052 = vmax.f32 %v1992, %v2024
  %v2053 = vmax.f32 %v1994, %v2026
  %v2054 = vmax.f32 %v1996, %v2028
  %v2055 = vmax.f32 %v1998, %v2030
  %v2056 = vmax.f32 %v2000, %v2032
  %v2057 = vmax.f32 %v2002, %v2034
  %v2058 = vmax.f32 %v2004, %v2036
  %v2059 = vmax.f32 %v2006, %v2038
  %v2060 = vmax.f32 %v2008, %v2040
  %v2061 = vmax.f32 %v2010, %v2042
  %v2062 = vmax.f32 %v2012, %v2044
  %v2063 = vmax.f32 %v2014, %v2046
  %v2064 = vmax.f32 %v2016, %v2048
  %v2065 = vld [vmem:[%s2] sm:$0x1]
  %v2067 = vlaneseq
  %v2068 = vshrl.u32 %v2067, 7
  %v2069 = vsub.s32 0, %v2068
  %v2070 = vrot.slane %v2065, %v2069
  %v2072 = vadd.f32 %v2049, %v2070
  %v2073 = vadd.f32 %v2050, %v2070
  %v2074 = vadd.f32 %v2051, %v2070
  %v2075 = vadd.f32 %v2052, %v2070
  %v2076 = vadd.f32 %v2053, %v2070
  %v2077 = vadd.f32 %v2054, %v2070
  %v2078 = vadd.f32 %v2055, %v2070
  %v2079 = vadd.f32 %v2056, %v2070
  %v2080 = vadd.f32 %v2057, %v2070
  %v2081 = vadd.f32 %v2058, %v2070
  %v2082 = vadd.f32 %v2059, %v2070
  %v2083 = vadd.f32 %v2060, %v2070
  %v2084 = vadd.f32 %v2061, %v2070
  %v2085 = vadd.f32 %v2062, %v2070
  %v2086 = vadd.f32 %v2063, %v2070
  %v2087 = vadd.f32 %v2064, %v2070
  %v2088 = vmax.f32 %v2072, 0.0
  %v2089 = vmax.f32 %v2073, 0.0
  %v2090 = vmax.f32 %v2074, 0.0
  %v2091 = vmax.f32 %v2075, 0.0
  %v2092 = vmax.f32 %v2076, 0.0
  %v2093 = vmax.f32 %v2077, 0.0
  %v2094 = vmax.f32 %v2078, 0.0
  %v2095 = vmax.f32 %v2079, 0.0
  %v2096 = vmax.f32 %v2080, 0.0
  %v2097 = vmax.f32 %v2081, 0.0
  %v2098 = vmax.f32 %v2082, 0.0
  %v2099 = vmax.f32 %v2083, 0.0
  %v2100 = vmax.f32 %v2084, 0.0
  %v2101 = vmax.f32 %v2085, 0.0
  %v2102 = vmax.f32 %v2086, 0.0
  %v2103 = vmax.f32 %v2087, 0.0
  %2104 = vst [vmem:[#allocation3] sm:$0xff] %v2088
  %2105 = vst [vmem:[#allocation3 + $0x8] sm:$0xff] %v2089
  %2106 = vst [vmem:[#allocation3 + $0x10] sm:$0xff] %v2090
  %2107 = vst [vmem:[#allocation3 + $0x18] sm:$0xff] %v2091
  %2108 = vst [vmem:[#allocation3 + $0x20] sm:$0xff] %v2092
  %2109 = vst [vmem:[#allocation3 + $0x28] sm:$0xff] %v2093
  %2110 = vst [vmem:[#allocation3 + $0x30] sm:$0xff] %v2094
  %2111 = vst [vmem:[#allocation3 + $0x38] sm:$0xff] %v2095
  %2112 = vst [vmem:[#allocation3 + $0x40] sm:$0xff] %v2096
  %2113 = vst [vmem:[#allocation3 + $0x48] sm:$0xff] %v2097
  %2114 = vst [vmem:[#allocation3 + $0x50] sm:$0xff] %v2098
  %2115 = vst [vmem:[#allocation3 + $0x58] sm:$0xff] %v2099
  %2116 = vst [vmem:[#allocation3 + $0x60] sm:$0xff] %v2100
  %2117 = vst [vmem:[#allocation3 + $0x68] sm:$0xff] %v2101
  %2118 = vst [vmem:[#allocation3 + $0x70] sm:$0xff] %v2102
  %2119 = vst [vmem:[#allocation3 + $0x78] sm:$0xff] %v2103
  %v2120 = vld [vmem:[#allocation3] sm:$0xff]
  %v2121 = vld [vmem:[#allocation3 + $0x8] sm:$0xff]
  %v2122 = vld [vmem:[#allocation3 + $0x10] sm:$0xff]
  %v2123 = vld [vmem:[#allocation3 + $0x18] sm:$0xff]
  %v2124 = vld [vmem:[#allocation3 + $0x20] sm:$0xff]
  %v2125 = vld [vmem:[#allocation3 + $0x28] sm:$0xff]
  %v2126 = vld [vmem:[#allocation3 + $0x30] sm:$0xff]
  %v2127 = vld [vmem:[#allocation3 + $0x38] sm:$0xff]
  %v2128 = vld [vmem:[#allocation3 + $0x40] sm:$0xff]
  %v2129 = vld [vmem:[#allocation3 + $0x48] sm:$0xff]
  %v2130 = vld [vmem:[#allocation3 + $0x50] sm:$0xff]
  %v2131 = vld [vmem:[#allocation3 + $0x58] sm:$0xff]
  %v2132 = vld [vmem:[#allocation3 + $0x60] sm:$0xff]
  %v2133 = vld [vmem:[#allocation3 + $0x68] sm:$0xff]
  %v2134 = vld [vmem:[#allocation3 + $0x70] sm:$0xff]
  %v2135 = vld [vmem:[#allocation3 + $0x78] sm:$0xf]
  %v2136 = vpack.c.bf16 %v2121, %v2120
  %v2137 = vpack.c.bf16 %v2123, %v2122
  %v2138 = vpack.c.bf16 %v2125, %v2124
  %v2139 = vpack.c.bf16 %v2127, %v2126
  %v2140 = vpack.c.bf16 %v2129, %v2128
  %v2141 = vpack.c.bf16 %v2131, %v2130
  %v2142 = vpack.c.bf16 %v2133, %v2132
  %v2143 = vpack.c.bf16 %v2135, %v2134
  %v2144 = vld [vmem:[%s3] sm:$0xff]
  %v2145 = vld [vmem:[%s3 + $0x8] sm:$0xff]
  %v2146 = vld [vmem:[%s3 + $0x10] sm:$0xff]
  %v2147 = vld [vmem:[%s3 + $0x18] sm:$0xff]
  %v2148 = vld [vmem:[%s3 + $0x20] sm:$0xff]
  %v2149 = vld [vmem:[%s3 + $0x28] sm:$0xff]
  %v2150 = vld [vmem:[%s3 + $0x30] sm:$0xff]
  %v2151 = vld [vmem:[%s3 + $0x38] sm:$0xff]
  %v2152 = vld [vmem:[%s3 + $0x40] sm:$0xff]
  %v2153 = vld [vmem:[%s3 + $0x48] sm:$0xff]
  %v2154 = vld [vmem:[%s3 + $0x50] sm:$0xff]
  %v2155 = vld [vmem:[%s3 + $0x58] sm:$0xff]
  %v2156 = vld [vmem:[%s3 + $0x60] sm:$0xff]
  %v2157 = vld [vmem:[%s3 + $0x68] sm:$0xff]
  %v2158 = vld [vmem:[%s3 + $0x70] sm:$0xff]
  %v2159 = vld [vmem:[%s3 + $0x78] sm:$0xff]
  %v2160 = vld [vmem:[#allocation3 + $0x1] sm:$0xff]
  %v2161 = vld [vmem:[#allocation3 + $0x9] sm:$0xff]
  %v2162 = vld [vmem:[#allocation3 + $0x11] sm:$0xff]
  %v2163 = vld [vmem:[#allocation3 + $0x19] sm:$0xff]
  %v2164 = vld [vmem:[#allocation3 + $0x21] sm:$0xff]
  %v2165 = vld [vmem:[#allocation3 + $0x29] sm:$0xff]
  %v2166 = vld [vmem:[#allocation3 + $0x31] sm:$0xff]
  %v2167 = vld [vmem:[#allocation3 + $0x39] sm:$0xff]
  %v2168 = vld [vmem:[#allocation3 + $0x41] sm:$0xff]
  %v2169 = vld [vmem:[#allocation3 + $0x49] sm:$0xff]
  %v2170 = vld [vmem:[#allocation3 + $0x51] sm:$0xff]
  %v2171 = vld [vmem:[#allocation3 + $0x59] sm:$0xff]
  %v2172 = vld [vmem:[#allocation3 + $0x61] sm:$0xff]
  %v2173 = vld [vmem:[#allocation3 + $0x69] sm:$0xff]
  %v2174 = vld [vmem:[#allocation3 + $0x71] sm:$0xff]
  %v2175 = vld [vmem:[#allocation3 + $0x79] sm:$0xf]
  %v2176 = vpack.c.bf16 %v2161, %v2160
  %v2177 = vpack.c.bf16 %v2163, %v2162
  %v2178 = vpack.c.bf16 %v2165, %v2164
  %v2179 = vpack.c.bf16 %v2167, %v2166
  %v2180 = vpack.c.bf16 %v2169, %v2168
  %v2181 = vpack.c.bf16 %v2171, %v2170
  %v2182 = vpack.c.bf16 %v2173, %v2172
  %v2183 = vpack.c.bf16 %v2175, %v2174
  %s2184 = scalar_lea.vmem %s3, 128
  %v2185 = vld [vmem:[%s2184] sm:$0xff]
  %v2186 = vld [vmem:[%s2184 + $0x8] sm:$0xff]
  %v2187 = vld [vmem:[%s2184 + $0x10] sm:$0xff]
  %v2188 = vld [vmem:[%s2184 + $0x18] sm:$0xff]
  %v2189 = vld [vmem:[%s2184 + $0x20] sm:$0xff]
  %v2190 = vld [vmem:[%s2184 + $0x28] sm:$0xff]
  %v2191 = vld [vmem:[%s2184 + $0x30] sm:$0xff]
  %v2192 = vld [vmem:[%s2184 + $0x38] sm:$0xff]
  %v2193 = vld [vmem:[%s2184 + $0x40] sm:$0xff]
  %v2194 = vld [vmem:[%s2184 + $0x48] sm:$0xff]
  %v2195 = vld [vmem:[%s2184 + $0x50] sm:$0xff]
  %v2196 = vld [vmem:[%s2184 + $0x58] sm:$0xff]
  %v2197 = vld [vmem:[%s2184 + $0x60] sm:$0xff]
  %v2198 = vld [vmem:[%s2184 + $0x68] sm:$0xff]
  %v2199 = vld [vmem:[%s2184 + $0x70] sm:$0xff]
  %v2200 = vld [vmem:[%s2184 + $0x78] sm:$0xff]
  %v2217 = vunpack.c.l.b16 %v2185
  %v2218 = vunpack.c.h.b16 %v2185
  %v2219 = vunpack.c.l.b16 %v2186
  %v2220 = vunpack.c.h.b16 %v2186
  %v2221 = vunpack.c.l.b16 %v2187
  %v2222 = vunpack.c.h.b16 %v2187
  %v2223 = vunpack.c.l.b16 %v2188
  %v2224 = vunpack.c.h.b16 %v2188
  %v2225 = vunpack.c.l.b16 %v2189
  %v2226 = vunpack.c.h.b16 %v2189
  %v2227 = vunpack.c.l.b16 %v2190
  %v2228 = vunpack.c.h.b16 %v2190
  %v2229 = vunpack.c.l.b16 %v2191
  %v2230 = vunpack.c.h.b16 %v2191
  %v2231 = vunpack.c.l.b16 %v2192
  %v2232 = vunpack.c.h.b16 %v2192
  %v2233 = vunpack.c.l.b16 %v2193
  %v2234 = vunpack.c.h.b16 %v2193
  %v2235 = vunpack.c.l.b16 %v2194
  %v2236 = vunpack.c.h.b16 %v2194
  %v2237 = vunpack.c.l.b16 %v2195
  %v2238 = vunpack.c.h.b16 %v2195
  %v2239 = vunpack.c.l.b16 %v2196
  %v2240 = vunpack.c.h.b16 %v2196
  %v2241 = vunpack.c.l.b16 %v2197
  %v2242 = vunpack.c.h.b16 %v2197
  %v2243 = vunpack.c.l.b16 %v2198
  %v2244 = vunpack.c.h.b16 %v2198
  %v2245 = vunpack.c.l.b16 %v2199
  %v2246 = vunpack.c.h.b16 %v2199
  %v2247 = vunpack.c.l.b16 %v2200
  %v2248 = vunpack.c.h.b16 %v2200
  %v2249 = vpack.c.b16 %v2219, %v2217
  %v2250 = vpack.c.b16 %v2220, %v2218
  %v2251 = vpack.c.b16 %v2223, %v2221
  %v2252 = vpack.c.b16 %v2224, %v2222
  %v2253 = vpack.c.b16 %v2227, %v2225
  %v2254 = vpack.c.b16 %v2228, %v2226
  %v2255 = vpack.c.b16 %v2231, %v2229
  %v2256 = vpack.c.b16 %v2232, %v2230
  %v2257 = vpack.c.b16 %v2235, %v2233
  %v2258 = vpack.c.b16 %v2236, %v2234
  %v2259 = vpack.c.b16 %v2239, %v2237
  %v2260 = vpack.c.b16 %v2240, %v2238
  %v2261 = vpack.c.b16 %v2243, %v2241
  %v2262 = vpack.c.b16 %v2244, %v2242
  %v2263 = vpack.c.b16 %v2247, %v2245
  %v2264 = vpack.c.b16 %v2248, %v2246
  %2281 = vmatprep.subr.bf16.mxu0 %v2264
  %2282 = vmatpush1.bf16.msra.mxu0 %v2263
  %2283 = vmatprep.subr.bf16.mxu0 %v2262
  %2284 = vmatpush1.bf16.msra.mxu0 %v2261
  %2285 = vmatprep.subr.bf16.mxu0 %v2260
  %2286 = vmatpush1.bf16.msra.mxu0 %v2259
  %2287 = vmatprep.subr.bf16.mxu0 %v2258
  %2288 = vmatpush1.bf16.msra.mxu0 %v2257
  %2289 = vmatprep.subr.bf16.mxu0 %v2256
  %2290 = vmatpush1.bf16.msra.mxu0 %v2255
  %2291 = vmatprep.subr.bf16.mxu0 %v2254
  %2292 = vmatpush1.bf16.msra.mxu0 %v2253
  %2293 = vmatprep.subr.bf16.mxu0 %v2252
  %2294 = vmatpush1.bf16.msra.mxu0 %v2251
  %2295 = vmatprep.subr.bf16.mxu0 %v2250
  %2296 = vmatpush1.bf16.msra.mxu0 %v2249
  %2297 = vmatprep.subr.bf16.mxu0 0
  %2298 = vmatpush2.bf16.msra.mxu0 0
  %2299 = vmatprep.subr.bf16.mxu0 0
  %2300 = vmatpush2.bf16.msra.mxu0 0
  %2301 = vmatprep.subr.bf16.mxu0 0
  %2302 = vmatpush2.bf16.msra.mxu0 0
  %2303 = vmatprep.subr.bf16.mxu0 0
  %2304 = vmatpush2.bf16.msra.mxu0 0
  %2305 = vmatprep.subr.bf16.mxu0 0
  %2306 = vmatpush2.bf16.msra.mxu0 0
  %2307 = vmatprep.subr.bf16.mxu0 0
  %2308 = vmatpush2.bf16.msra.mxu0 0
  %2309 = vmatprep.subr.bf16.mxu0 0
  %2310 = vmatpush2.bf16.msra.mxu0 0
  %2311 = vmatprep.subr.bf16.mxu0 0
  %2312 = vmatpush2.bf16.msra.mxu0 0
  %2313 = vmatprep.mubr.bf16.mxu0 0
  %2314 = vmatmul.mubr.bf16.gmra.mxu0 %v2176
  %v2315 = vpop.f32.mrf.mxu0
  %v2316 = vadd.f32 0.0, %v2315
  %v2317 = vpop.f32.mrf.mxu0
  %v2318 = vadd.f32 0.0, %v2317
  %v2319 = vpop.f32.mrf.mxu0
  %v2320 = vadd.f32 0.0, %v2319
  %v2321 = vpop.f32.mrf.mxu0
  %v2322 = vadd.f32 0.0, %v2321
  %2323 = vmatprep.mubr.bf16.mxu0 0
  %2324 = vmatmul.mubr.bf16.gmra.mxu0 %v2177
  %v2325 = vpop.f32.mrf.mxu0
  %v2326 = vadd.f32 0.0, %v2325
  %v2327 = vpop.f32.mrf.mxu0
  %v2328 = vadd.f32 0.0, %v2327
  %v2329 = vpop.f32.mrf.mxu0
  %v2330 = vadd.f32 0.0, %v2329
  %v2331 = vpop.f32.mrf.mxu0
  %v2332 = vadd.f32 0.0, %v2331
  %2333 = vmatprep.mubr.bf16.mxu0 0
  %2334 = vmatmul.mubr.bf16.gmra.mxu0 %v2178
  %v2335 = vpop.f32.mrf.mxu0
  %v2336 = vadd.f32 0.0, %v2335
  %v2337 = vpop.f32.mrf.mxu0
  %v2338 = vadd.f32 0.0, %v2337
  %v2339 = vpop.f32.mrf.mxu0
  %v2340 = vadd.f32 0.0, %v2339
  %v2341 = vpop.f32.mrf.mxu0
  %v2342 = vadd.f32 0.0, %v2341
  %2343 = vmatprep.mubr.bf16.mxu0 0
  %2344 = vmatmul.mubr.bf16.gmra.mxu0 %v2179
  %v2345 = vpop.f32.mrf.mxu0
  %v2346 = vadd.f32 0.0, %v2345
  %v2347 = vpop.f32.mrf.mxu0
  %v2348 = vadd.f32 0.0, %v2347
  %v2349 = vpop.f32.mrf.mxu0
  %v2350 = vadd.f32 0.0, %v2349
  %v2351 = vpop.f32.mrf.mxu0
  %v2352 = vadd.f32 0.0, %v2351
  %2353 = vmatprep.mubr.bf16.mxu0 0
  %2354 = vmatmul.mubr.bf16.gmra.mxu0 %v2180
  %v2355 = vpop.f32.mrf.mxu0
  %v2356 = vadd.f32 0.0, %v2355
  %v2357 = vpop.f32.mrf.mxu0
  %v2358 = vadd.f32 0.0, %v2357
  %v2359 = vpop.f32.mrf.mxu0
  %v2360 = vadd.f32 0.0, %v2359
  %v2361 = vpop.f32.mrf.mxu0
  %v2362 = vadd.f32 0.0, %v2361
  %2363 = vmatprep.mubr.bf16.mxu0 0
  %2364 = vmatmul.mubr.bf16.gmra.mxu0 %v2181
  %v2365 = vpop.f32.mrf.mxu0
  %v2366 = vadd.f32 0.0, %v2365
  %v2367 = vpop.f32.mrf.mxu0
  %v2368 = vadd.f32 0.0, %v2367
  %v2369 = vpop.f32.mrf.mxu0
  %v2370 = vadd.f32 0.0, %v2369
  %v2371 = vpop.f32.mrf.mxu0
  %v2372 = vadd.f32 0.0, %v2371
  %2373 = vmatprep.mubr.bf16.mxu0 0
  %2374 = vmatmul.mubr.bf16.gmra.mxu0 %v2182
  %v2375 = vpop.f32.mrf.mxu0
  %v2376 = vadd.f32 0.0, %v2375
  %v2377 = vpop.f32.mrf.mxu0
  %v2378 = vadd.f32 0.0, %v2377
  %v2379 = vpop.f32.mrf.mxu0
  %v2380 = vadd.f32 0.0, %v2379
  %v2381 = vpop.f32.mrf.mxu0
  %v2382 = vadd.f32 0.0, %v2381
  %2383 = vmatprep.mubr.bf16.mxu0 0
  %2384 = vmatmul.mubr.bf16.gmra.mxu0 %v2183
  %v2385 = vpop.f32.mrf.mxu0
  %v2386 = vadd.f32 0.0, %v2385
  %v2387 = vpop.f32.mrf.mxu0
  %v2388 = vadd.f32 0.0, %v2387
  %v2389 = vpop.f32.mrf.mxu0
  %v2390 = vadd.f32 0.0, %v2389
  %v2391 = vpop.f32.mrf.mxu0
  %v2392 = vadd.f32 0.0, %v2391
  %2393 = vdwg.mxu0
  %v2410 = vunpack.c.l.b16 %v2144
  %v2411 = vunpack.c.h.b16 %v2144
  %v2412 = vunpack.c.l.b16 %v2145
  %v2413 = vunpack.c.h.b16 %v2145
  %v2414 = vunpack.c.l.b16 %v2146
  %v2415 = vunpack.c.h.b16 %v2146
  %v2416 = vunpack.c.l.b16 %v2147
  %v2417 = vunpack.c.h.b16 %v2147
  %v2418 = vunpack.c.l.b16 %v2148
  %v2419 = vunpack.c.h.b16 %v2148
  %v2420 = vunpack.c.l.b16 %v2149
  %v2421 = vunpack.c.h.b16 %v2149
  %v2422 = vunpack.c.l.b16 %v2150
  %v2423 = vunpack.c.h.b16 %v2150
  %v2424 = vunpack.c.l.b16 %v2151
  %v2425 = vunpack.c.h.b16 %v2151
  %v2426 = vunpack.c.l.b16 %v2152
  %v2427 = vunpack.c.h.b16 %v2152
  %v2428 = vunpack.c.l.b16 %v2153
  %v2429 = vunpack.c.h.b16 %v2153
  %v2430 = vunpack.c.l.b16 %v2154
  %v2431 = vunpack.c.h.b16 %v2154
  %v2432 = vunpack.c.l.b16 %v2155
  %v2433 = vunpack.c.h.b16 %v2155
  %v2434 = vunpack.c.l.b16 %v2156
  %v2435 = vunpack.c.h.b16 %v2156
  %v2436 = vunpack.c.l.b16 %v2157
  %v2437 = vunpack.c.h.b16 %v2157
  %v2438 = vunpack.c.l.b16 %v2158
  %v2439 = vunpack.c.h.b16 %v2158
  %v2440 = vunpack.c.l.b16 %v2159
  %v2441 = vunpack.c.h.b16 %v2159
  %v2442 = vpack.c.b16 %v2412, %v2410
  %v2443 = vpack.c.b16 %v2413, %v2411
  %v2444 = vpack.c.b16 %v2416, %v2414
  %v2445 = vpack.c.b16 %v2417, %v2415
  %v2446 = vpack.c.b16 %v2420, %v2418
  %v2447 = vpack.c.b16 %v2421, %v2419
  %v2448 = vpack.c.b16 %v2424, %v2422
  %v2449 = vpack.c.b16 %v2425, %v2423
  %v2450 = vpack.c.b16 %v2428, %v2426
  %v2451 = vpack.c.b16 %v2429, %v2427
  %v2452 = vpack.c.b16 %v2432, %v2430
  %v2453 = vpack.c.b16 %v2433, %v2431
  %v2454 = vpack.c.b16 %v2436, %v2434
  %v2455 = vpack.c.b16 %v2437, %v2435
  %v2456 = vpack.c.b16 %v2440, %v2438
  %v2457 = vpack.c.b16 %v2441, %v2439
  %2474 = vmatprep.subr.bf16.mxu0 %v2457
  %2475 = vmatpush1.bf16.msra.mxu0 %v2456
  %2476 = vmatprep.subr.bf16.mxu0 %v2455
  %2477 = vmatpush1.bf16.msra.mxu0 %v2454
  %2478 = vmatprep.subr.bf16.mxu0 %v2453
  %2479 = vmatpush1.bf16.msra.mxu0 %v2452
  %2480 = vmatprep.subr.bf16.mxu0 %v2451
  %2481 = vmatpush1.bf16.msra.mxu0 %v2450
  %2482 = vmatprep.subr.bf16.mxu0 %v2449
  %2483 = vmatpush1.bf16.msra.mxu0 %v2448
  %2484 = vmatprep.subr.bf16.mxu0 %v2447
  %2485 = vmatpush1.bf16.msra.mxu0 %v2446
  %2486 = vmatprep.subr.bf16.mxu0 %v2445
  %2487 = vmatpush1.bf16.msra.mxu0 %v2444
  %2488 = vmatprep.subr.bf16.mxu0 %v2443
  %2489 = vmatpush1.bf16.msra.mxu0 %v2442
  %2490 = vmatprep.subr.bf16.mxu0 0
  %2491 = vmatpush2.bf16.msra.mxu0 0
  %2492 = vmatprep.subr.bf16.mxu0 0
  %2493 = vmatpush2.bf16.msra.mxu0 0
  %2494 = vmatprep.subr.bf16.mxu0 0
  %2495 = vmatpush2.bf16.msra.mxu0 0
  %2496 = vmatprep.subr.bf16.mxu0 0
  %2497 = vmatpush2.bf16.msra.mxu0 0
  %2498 = vmatprep.subr.bf16.mxu0 0
  %2499 = vmatpush2.bf16.msra.mxu0 0
  %2500 = vmatprep.subr.bf16.mxu0 0
  %2501 = vmatpush2.bf16.msra.mxu0 0
  %2502 = vmatprep.subr.bf16.mxu0 0
  %2503 = vmatpush2.bf16.msra.mxu0 0
  %2504 = vmatprep.subr.bf16.mxu0 0
  %2505 = vmatpush2.bf16.msra.mxu0 0
  %2506 = vmatprep.mubr.bf16.mxu0 0
  %2507 = vmatmul.mubr.bf16.gmra.mxu0 %v2136
  %v2508 = vpop.f32.mrf.mxu0
  %v2509 = vadd.f32 %v2316, %v2508
  %v2510 = vpop.f32.mrf.mxu0
  %v2511 = vadd.f32 %v2318, %v2510
  %v2512 = vpop.f32.mrf.mxu0
  %v2513 = vadd.f32 %v2320, %v2512
  %v2514 = vpop.f32.mrf.mxu0
  %v2515 = vadd.f32 %v2322, %v2514
  %2516 = vmatprep.mubr.bf16.mxu0 0
  %2517 = vmatmul.mubr.bf16.gmra.mxu0 %v2137
  %v2518 = vpop.f32.mrf.mxu0
  %v2519 = vadd.f32 %v2326, %v2518
  %v2520 = vpop.f32.mrf.mxu0
  %v2521 = vadd.f32 %v2328, %v2520
  %v2522 = vpop.f32.mrf.mxu0
  %v2523 = vadd.f32 %v2330, %v2522
  %v2524 = vpop.f32.mrf.mxu0
  %v2525 = vadd.f32 %v2332, %v2524
  %2526 = vmatprep.mubr.bf16.mxu0 0
  %2527 = vmatmul.mubr.bf16.gmra.mxu0 %v2138
  %v2528 = vpop.f32.mrf.mxu0
  %v2529 = vadd.f32 %v2336, %v2528
  %v2530 = vpop.f32.mrf.mxu0
  %v2531 = vadd.f32 %v2338, %v2530
  %v2532 = vpop.f32.mrf.mxu0
  %v2533 = vadd.f32 %v2340, %v2532
  %v2534 = vpop.f32.mrf.mxu0
  %v2535 = vadd.f32 %v2342, %v2534
  %2536 = vmatprep.mubr.bf16.mxu0 0
  %2537 = vmatmul.mubr.bf16.gmra.mxu0 %v2139
  %v2538 = vpop.f32.mrf.mxu0
  %v2539 = vadd.f32 %v2346, %v2538
  %v2540 = vpop.f32.mrf.mxu0
  %v2541 = vadd.f32 %v2348, %v2540
  %v2542 = vpop.f32.mrf.mxu0
  %v2543 = vadd.f32 %v2350, %v2542
  %v2544 = vpop.f32.mrf.mxu0
  %v2545 = vadd.f32 %v2352, %v2544
  %2546 = vmatprep.mubr.bf16.mxu0 0
  %2547 = vmatmul.mubr.bf16.gmra.mxu0 %v2140
  %v2548 = vpop.f32.mrf.mxu0
  %v2549 = vadd.f32 %v2356, %v2548
  %v2550 = vpop.f32.mrf.mxu0
  %v2551 = vadd.f32 %v2358, %v2550
  %v2552 = vpop.f32.mrf.mxu0
  %v2553 = vadd.f32 %v2360, %v2552
  %v2554 = vpop.f32.mrf.mxu0
  %v2555 = vadd.f32 %v2362, %v2554
  %2556 = vmatprep.mubr.bf16.mxu0 0
  %2557 = vmatmul.mubr.bf16.gmra.mxu0 %v2141
  %v2558 = vpop.f32.mrf.mxu0
  %v2559 = vadd.f32 %v2366, %v2558
  %v2560 = vpop.f32.mrf.mxu0
  %v2561 = vadd.f32 %v2368, %v2560
  %v2562 = vpop.f32.mrf.mxu0
  %v2563 = vadd.f32 %v2370, %v2562
  %v2564 = vpop.f32.mrf.mxu0
  %v2565 = vadd.f32 %v2372, %v2564
  %2566 = vmatprep.mubr.bf16.mxu0 0
  %2567 = vmatmul.mubr.bf16.gmra.mxu0 %v2142
  %v2568 = vpop.f32.mrf.mxu0
  %v2569 = vadd.f32 %v2376, %v2568
  %v2570 = vpop.f32.mrf.mxu0
  %v2571 = vadd.f32 %v2378, %v2570
  %v2572 = vpop.f32.mrf.mxu0
  %v2573 = vadd.f32 %v2380, %v2572
  %v2574 = vpop.f32.mrf.mxu0
  %v2575 = vadd.f32 %v2382, %v2574
  %2576 = vmatprep.mubr.bf16.mxu0 0
  %2577 = vmatmul.mubr.bf16.gmra.mxu0 %v2143
  %v2578 = vpop.f32.mrf.mxu0
  %v2579 = vadd.f32 %v2386, %v2578
  %v2580 = vpop.f32.mrf.mxu0
  %v2581 = vadd.f32 %v2388, %v2580
  %v2582 = vpop.f32.mrf.mxu0
  %v2583 = vadd.f32 %v2390, %v2582
  %v2584 = vpop.f32.mrf.mxu0
  %v2585 = vadd.f32 %v2392, %v2584
  %2586 = vdwg.mxu0
  %v2587 = vld [vmem:[#allocation3 + $0x2] sm:$0xff]
  %v2588 = vld [vmem:[#allocation3 + $0xa] sm:$0xff]
  %v2589 = vld [vmem:[#allocation3 + $0x12] sm:$0xff]
  %v2590 = vld [vmem:[#allocation3 + $0x1a] sm:$0xff]
  %v2591 = vld [vmem:[#allocation3 + $0x22] sm:$0xff]
  %v2592 = vld [vmem:[#allocation3 + $0x2a] sm:$0xff]
  %v2593 = vld [vmem:[#allocation3 + $0x32] sm:$0xff]
  %v2594 = vld [vmem:[#allocation3 + $0x3a] sm:$0xff]
  %v2595 = vld [vmem:[#allocation3 + $0x42] sm:$0xff]
  %v2596 = vld [vmem:[#allocation3 + $0x4a] sm:$0xff]
  %v2597 = vld [vmem:[#allocation3 + $0x52] sm:$0xff]
  %v2598 = vld [vmem:[#allocation3 + $0x5a] sm:$0xff]
  %v2599 = vld [vmem:[#allocation3 + $0x62] sm:$0xff]
  %v2600 = vld [vmem:[#allocation3 + $0x6a] sm:$0xff]
  %v2601 = vld [vmem:[#allocation3 + $0x72] sm:$0xff]
  %v2602 = vld [vmem:[#allocation3 + $0x7a] sm:$0xf]
  %v2603 = vpack.c.bf16 %v2588, %v2587
  %v2604 = vpack.c.bf16 %v2590, %v2589
  %v2605 = vpack.c.bf16 %v2592, %v2591
  %v2606 = vpack.c.bf16 %v2594, %v2593
  %v2607 = vpack.c.bf16 %v2596, %v2595
  %v2608 = vpack.c.bf16 %v2598, %v2597
  %v2609 = vpack.c.bf16 %v2600, %v2599
  %v2610 = vpack.c.bf16 %v2602, %v2601
  %s2611 = scalar_lea.vmem %s3, 256
  %v2612 = vld [vmem:[%s2611] sm:$0xff]
  %v2613 = vld [vmem:[%s2611 + $0x8] sm:$0xff]
  %v2614 = vld [vmem:[%s2611 + $0x10] sm:$0xff]
  %v2615 = vld [vmem:[%s2611 + $0x18] sm:$0xff]
  %v2616 = vld [vmem:[%s2611 + $0x20] sm:$0xff]
  %v2617 = vld [vmem:[%s2611 + $0x28] sm:$0xff]
  %v2618 = vld [vmem:[%s2611 + $0x30] sm:$0xff]
  %v2619 = vld [vmem:[%s2611 + $0x38] sm:$0xff]
  %v2620 = vld [vmem:[%s2611 + $0x40] sm:$0xff]
  %v2621 = vld [vmem:[%s2611 + $0x48] sm:$0xff]
  %v2622 = vld [vmem:[%s2611 + $0x50] sm:$0xff]
  %v2623 = vld [vmem:[%s2611 + $0x58] sm:$0xff]
  %v2624 = vld [vmem:[%s2611 + $0x60] sm:$0xff]
  %v2625 = vld [vmem:[%s2611 + $0x68] sm:$0xff]
  %v2626 = vld [vmem:[%s2611 + $0x70] sm:$0xff]
  %v2627 = vld [vmem:[%s2611 + $0x78] sm:$0xff]
  %v2644 = vunpack.c.l.b16 %v2612
  %v2645 = vunpack.c.h.b16 %v2612
  %v2646 = vunpack.c.l.b16 %v2613
  %v2647 = vunpack.c.h.b16 %v2613
  %v2648 = vunpack.c.l.b16 %v2614
  %v2649 = vunpack.c.h.b16 %v2614
  %v2650 = vunpack.c.l.b16 %v2615
  %v2651 = vunpack.c.h.b16 %v2615
  %v2652 = vunpack.c.l.b16 %v2616
  %v2653 = vunpack.c.h.b16 %v2616
  %v2654 = vunpack.c.l.b16 %v2617
  %v2655 = vunpack.c.h.b16 %v2617
  %v2656 = vunpack.c.l.b16 %v2618
  %v2657 = vunpack.c.h.b16 %v2618
  %v2658 = vunpack.c.l.b16 %v2619
  %v2659 = vunpack.c.h.b16 %v2619
  %v2660 = vunpack.c.l.b16 %v2620
  %v2661 = vunpack.c.h.b16 %v2620
  %v2662 = vunpack.c.l.b16 %v2621
  %v2663 = vunpack.c.h.b16 %v2621
  %v2664 = vunpack.c.l.b16 %v2622
  %v2665 = vunpack.c.h.b16 %v2622
  %v2666 = vunpack.c.l.b16 %v2623
  %v2667 = vunpack.c.h.b16 %v2623
  %v2668 = vunpack.c.l.b16 %v2624
  %v2669 = vunpack.c.h.b16 %v2624
  %v2670 = vunpack.c.l.b16 %v2625
  %v2671 = vunpack.c.h.b16 %v2625
  %v2672 = vunpack.c.l.b16 %v2626
  %v2673 = vunpack.c.h.b16 %v2626
  %v2674 = vunpack.c.l.b16 %v2627
  %v2675 = vunpack.c.h.b16 %v2627
  %v2676 = vpack.c.b16 %v2646, %v2644
  %v2677 = vpack.c.b16 %v2647, %v2645
  %v2678 = vpack.c.b16 %v2650, %v2648
  %v2679 = vpack.c.b16 %v2651, %v2649
  %v2680 = vpack.c.b16 %v2654, %v2652
  %v2681 = vpack.c.b16 %v2655, %v2653
  %v2682 = vpack.c.b16 %v2658, %v2656
  %v2683 = vpack.c.b16 %v2659, %v2657
  %v2684 = vpack.c.b16 %v2662, %v2660
  %v2685 = vpack.c.b16 %v2663, %v2661
  %v2686 = vpack.c.b16 %v2666, %v2664
  %v2687 = vpack.c.b16 %v2667, %v2665
  %v2688 = vpack.c.b16 %v2670, %v2668
  %v2689 = vpack.c.b16 %v2671, %v2669
  %v2690 = vpack.c.b16 %v2674, %v2672
  %v2691 = vpack.c.b16 %v2675, %v2673
  %2708 = vmatprep.subr.bf16.mxu0 %v2691
  %2709 = vmatpush1.bf16.msra.mxu0 %v2690
  %2710 = vmatprep.subr.bf16.mxu0 %v2689
  %2711 = vmatpush1.bf16.msra.mxu0 %v2688
  %2712 = vmatprep.subr.bf16.mxu0 %v2687
  %2713 = vmatpush1.bf16.msra.mxu0 %v2686
  %2714 = vmatprep.subr.bf16.mxu0 %v2685
  %2715 = vmatpush1.bf16.msra.mxu0 %v2684
  %2716 = vmatprep.subr.bf16.mxu0 %v2683
  %2717 = vmatpush1.bf16.msra.mxu0 %v2682
  %2718 = vmatprep.subr.bf16.mxu0 %v2681
  %2719 = vmatpush1.bf16.msra.mxu0 %v2680
  %2720 = vmatprep.subr.bf16.mxu0 %v2679
  %2721 = vmatpush1.bf16.msra.mxu0 %v2678
  %2722 = vmatprep.subr.bf16.mxu0 %v2677
  %2723 = vmatpush1.bf16.msra.mxu0 %v2676
  %2724 = vmatprep.subr.bf16.mxu0 0
  %2725 = vmatpush2.bf16.msra.mxu0 0
  %2726 = vmatprep.subr.bf16.mxu0 0
  %2727 = vmatpush2.bf16.msra.mxu0 0
  %2728 = vmatprep.subr.bf16.mxu0 0
  %2729 = vmatpush2.bf16.msra.mxu0 0
  %2730 = vmatprep.subr.bf16.mxu0 0
  %2731 = vmatpush2.bf16.msra.mxu0 0
  %2732 = vmatprep.subr.bf16.mxu0 0
  %2733 = vmatpush2.bf16.msra.mxu0 0
  %2734 = vmatprep.subr.bf16.mxu0 0
  %2735 = vmatpush2.bf16.msra.mxu0 0
  %2736 = vmatprep.subr.bf16.mxu0 0
  %2737 = vmatpush2.bf16.msra.mxu0 0
  %2738 = vmatprep.subr.bf16.mxu0 0
  %2739 = vmatpush2.bf16.msra.mxu0 0
  %2740 = vmatprep.mubr.bf16.mxu0 0
  %2741 = vmatmul.mubr.bf16.gmra.mxu0 %v2603
  %v2742 = vpop.f32.mrf.mxu0
  %v2743 = vadd.f32 0.0, %v2742
  %v2744 = vpop.f32.mrf.mxu0
  %v2745 = vadd.f32 0.0, %v2744
  %v2746 = vpop.f32.mrf.mxu0
  %v2747 = vadd.f32 0.0, %v2746
  %v2748 = vpop.f32.mrf.mxu0
  %v2749 = vadd.f32 0.0, %v2748
  %2750 = vmatprep.mubr.bf16.mxu0 0
  %2751 = vmatmul.mubr.bf16.gmra.mxu0 %v2604
  %v2752 = vpop.f32.mrf.mxu0
  %v2753 = vadd.f32 0.0, %v2752
  %v2754 = vpop.f32.mrf.mxu0
  %v2755 = vadd.f32 0.0, %v2754
  %v2756 = vpop.f32.mrf.mxu0
  %v2757 = vadd.f32 0.0, %v2756
  %v2758 = vpop.f32.mrf.mxu0
  %v2759 = vadd.f32 0.0, %v2758
  %2760 = vmatprep.mubr.bf16.mxu0 0
  %2761 = vmatmul.mubr.bf16.gmra.mxu0 %v2605
  %v2762 = vpop.f32.mrf.mxu0
  %v2763 = vadd.f32 0.0, %v2762
  %v2764 = vpop.f32.mrf.mxu0
  %v2765 = vadd.f32 0.0, %v2764
  %v2766 = vpop.f32.mrf.mxu0
  %v2767 = vadd.f32 0.0, %v2766
  %v2768 = vpop.f32.mrf.mxu0
  %v2769 = vadd.f32 0.0, %v2768
  %2770 = vmatprep.mubr.bf16.mxu0 0
  %2771 = vmatmul.mubr.bf16.gmra.mxu0 %v2606
  %v2772 = vpop.f32.mrf.mxu0
  %v2773 = vadd.f32 0.0, %v2772
  %v2774 = vpop.f32.mrf.mxu0
  %v2775 = vadd.f32 0.0, %v2774
  %v2776 = vpop.f32.mrf.mxu0
  %v2777 = vadd.f32 0.0, %v2776
  %v2778 = vpop.f32.mrf.mxu0
  %v2779 = vadd.f32 0.0, %v2778
  %2780 = vmatprep.mubr.bf16.mxu0 0
  %2781 = vmatmul.mubr.bf16.gmra.mxu0 %v2607
  %v2782 = vpop.f32.mrf.mxu0
  %v2783 = vadd.f32 0.0, %v2782
  %v2784 = vpop.f32.mrf.mxu0
  %v2785 = vadd.f32 0.0, %v2784
  %v2786 = vpop.f32.mrf.mxu0
  %v2787 = vadd.f32 0.0, %v2786
  %v2788 = vpop.f32.mrf.mxu0
  %v2789 = vadd.f32 0.0, %v2788
  %2790 = vmatprep.mubr.bf16.mxu0 0
  %2791 = vmatmul.mubr.bf16.gmra.mxu0 %v2608
  %v2792 = vpop.f32.mrf.mxu0
  %v2793 = vadd.f32 0.0, %v2792
  %v2794 = vpop.f32.mrf.mxu0
  %v2795 = vadd.f32 0.0, %v2794
  %v2796 = vpop.f32.mrf.mxu0
  %v2797 = vadd.f32 0.0, %v2796
  %v2798 = vpop.f32.mrf.mxu0
  %v2799 = vadd.f32 0.0, %v2798
  %2800 = vmatprep.mubr.bf16.mxu0 0
  %2801 = vmatmul.mubr.bf16.gmra.mxu0 %v2609
  %v2802 = vpop.f32.mrf.mxu0
  %v2803 = vadd.f32 0.0, %v2802
  %v2804 = vpop.f32.mrf.mxu0
  %v2805 = vadd.f32 0.0, %v2804
  %v2806 = vpop.f32.mrf.mxu0
  %v2807 = vadd.f32 0.0, %v2806
  %v2808 = vpop.f32.mrf.mxu0
  %v2809 = vadd.f32 0.0, %v2808
  %2810 = vmatprep.mubr.bf16.mxu0 0
  %2811 = vmatmul.mubr.bf16.gmra.mxu0 %v2610
  %v2812 = vpop.f32.mrf.mxu0
  %v2813 = vadd.f32 0.0, %v2812
  %v2814 = vpop.f32.mrf.mxu0
  %v2815 = vadd.f32 0.0, %v2814
  %v2816 = vpop.f32.mrf.mxu0
  %v2817 = vadd.f32 0.0, %v2816
  %v2818 = vpop.f32.mrf.mxu0
  %v2819 = vadd.f32 0.0, %v2818
  %2820 = vdwg.mxu0
  %v2821 = vadd.f32 %v2509, %v2743
  %v2822 = vadd.f32 %v2511, %v2745
  %v2823 = vadd.f32 %v2513, %v2747
  %v2824 = vadd.f32 %v2515, %v2749
  %v2825 = vadd.f32 %v2519, %v2753
  %v2826 = vadd.f32 %v2521, %v2755
  %v2827 = vadd.f32 %v2523, %v2757
  %v2828 = vadd.f32 %v2525, %v2759
  %v2829 = vadd.f32 %v2529, %v2763
  %v2830 = vadd.f32 %v2531, %v2765
  %v2831 = vadd.f32 %v2533, %v2767
  %v2832 = vadd.f32 %v2535, %v2769
  %v2833 = vadd.f32 %v2539, %v2773
  %v2834 = vadd.f32 %v2541, %v2775
  %v2835 = vadd.f32 %v2543, %v2777
  %v2836 = vadd.f32 %v2545, %v2779
  %v2837 = vadd.f32 %v2549, %v2783
  %v2838 = vadd.f32 %v2551, %v2785
  %v2839 = vadd.f32 %v2553, %v2787
  %v2840 = vadd.f32 %v2555, %v2789
  %v2841 = vadd.f32 %v2559, %v2793
  %v2842 = vadd.f32 %v2561, %v2795
  %v2843 = vadd.f32 %v2563, %v2797
  %v2844 = vadd.f32 %v2565, %v2799
  %v2845 = vadd.f32 %v2569, %v2803
  %v2846 = vadd.f32 %v2571, %v2805
  %v2847 = vadd.f32 %v2573, %v2807
  %v2848 = vadd.f32 %v2575, %v2809
  %v2849 = vadd.f32 %v2579, %v2813
  %v2850 = vadd.f32 %v2581, %v2815
  %v2851 = vadd.f32 %v2583, %v2817
  %v2852 = vadd.f32 %v2585, %v2819
  %v2853 = vld [vmem:[#allocation3 + $0x3] sm:$0xff]
  %v2854 = vld [vmem:[#allocation3 + $0xb] sm:$0xff]
  %v2855 = vld [vmem:[#allocation3 + $0x13] sm:$0xff]
  %v2856 = vld [vmem:[#allocation3 + $0x1b] sm:$0xff]
  %v2857 = vld [vmem:[#allocation3 + $0x23] sm:$0xff]
  %v2858 = vld [vmem:[#allocation3 + $0x2b] sm:$0xff]
  %v2859 = vld [vmem:[#allocation3 + $0x33] sm:$0xff]
  %v2860 = vld [vmem:[#allocation3 + $0x3b] sm:$0xff]
  %v2861 = vld [vmem:[#allocation3 + $0x43] sm:$0xff]
  %v2862 = vld [vmem:[#allocation3 + $0x4b] sm:$0xff]
  %v2863 = vld [vmem:[#allocation3 + $0x53] sm:$0xff]
  %v2864 = vld [vmem:[#allocation3 + $0x5b] sm:$0xff]
  %v2865 = vld [vmem:[#allocation3 + $0x63] sm:$0xff]
  %v2866 = vld [vmem:[#allocation3 + $0x6b] sm:$0xff]
  %v2867 = vld [vmem:[#allocation3 + $0x73] sm:$0xff]
  %v2868 = vld [vmem:[#allocation3 + $0x7b] sm:$0xf]
  %v2869 = vpack.c.bf16 %v2854, %v2853
  %v2870 = vpack.c.bf16 %v2856, %v2855
  %v2871 = vpack.c.bf16 %v2858, %v2857
  %v2872 = vpack.c.bf16 %v2860, %v2859
  %v2873 = vpack.c.bf16 %v2862, %v2861
  %v2874 = vpack.c.bf16 %v2864, %v2863
  %v2875 = vpack.c.bf16 %v2866, %v2865
  %v2876 = vpack.c.bf16 %v2868, %v2867
  %s2877 = scalar_lea.vmem %s3, 384
  %v2878 = vld [vmem:[%s2877] sm:$0xff]
  %v2879 = vld [vmem:[%s2877 + $0x8] sm:$0xff]
  %v2880 = vld [vmem:[%s2877 + $0x10] sm:$0xff]
  %v2881 = vld [vmem:[%s2877 + $0x18] sm:$0xff]
  %v2882 = vld [vmem:[%s2877 + $0x20] sm:$0xff]
  %v2883 = vld [vmem:[%s2877 + $0x28] sm:$0xff]
  %v2884 = vld [vmem:[%s2877 + $0x30] sm:$0xff]
  %v2885 = vld [vmem:[%s2877 + $0x38] sm:$0xff]
  %v2886 = vld [vmem:[%s2877 + $0x40] sm:$0xff]
  %v2887 = vld [vmem:[%s2877 + $0x48] sm:$0xff]
  %v2888 = vld [vmem:[%s2877 + $0x50] sm:$0xff]
  %v2889 = vld [vmem:[%s2877 + $0x58] sm:$0xff]
  %v2890 = vld [vmem:[%s2877 + $0x60] sm:$0xff]
  %v2891 = vld [vmem:[%s2877 + $0x68] sm:$0xff]
  %v2892 = vld [vmem:[%s2877 + $0x70] sm:$0xff]
  %v2893 = vld [vmem:[%s2877 + $0x78] sm:$0xff]
  %v2910 = vunpack.c.l.b16 %v2878
  %v2911 = vunpack.c.h.b16 %v2878
  %v2912 = vunpack.c.l.b16 %v2879
  %v2913 = vunpack.c.h.b16 %v2879
  %v2914 = vunpack.c.l.b16 %v2880
  %v2915 = vunpack.c.h.b16 %v2880
  %v2916 = vunpack.c.l.b16 %v2881
  %v2917 = vunpack.c.h.b16 %v2881
  %v2918 = vunpack.c.l.b16 %v2882
  %v2919 = vunpack.c.h.b16 %v2882
  %v2920 = vunpack.c.l.b16 %v2883
  %v2921 = vunpack.c.h.b16 %v2883
  %v2922 = vunpack.c.l.b16 %v2884
  %v2923 = vunpack.c.h.b16 %v2884
  %v2924 = vunpack.c.l.b16 %v2885
  %v2925 = vunpack.c.h.b16 %v2885
  %v2926 = vunpack.c.l.b16 %v2886
  %v2927 = vunpack.c.h.b16 %v2886
  %v2928 = vunpack.c.l.b16 %v2887
  %v2929 = vunpack.c.h.b16 %v2887
  %v2930 = vunpack.c.l.b16 %v2888
  %v2931 = vunpack.c.h.b16 %v2888
  %v2932 = vunpack.c.l.b16 %v2889
  %v2933 = vunpack.c.h.b16 %v2889
  %v2934 = vunpack.c.l.b16 %v2890
  %v2935 = vunpack.c.h.b16 %v2890
  %v2936 = vunpack.c.l.b16 %v2891
  %v2937 = vunpack.c.h.b16 %v2891
  %v2938 = vunpack.c.l.b16 %v2892
  %v2939 = vunpack.c.h.b16 %v2892
  %v2940 = vunpack.c.l.b16 %v2893
  %v2941 = vunpack.c.h.b16 %v2893
  %v2942 = vpack.c.b16 %v2912, %v2910
  %v2943 = vpack.c.b16 %v2913, %v2911
  %v2944 = vpack.c.b16 %v2916, %v2914
  %v2945 = vpack.c.b16 %v2917, %v2915
  %v2946 = vpack.c.b16 %v2920, %v2918
  %v2947 = vpack.c.b16 %v2921, %v2919
  %v2948 = vpack.c.b16 %v2924, %v2922
  %v2949 = vpack.c.b16 %v2925, %v2923
  %v2950 = vpack.c.b16 %v2928, %v2926
  %v2951 = vpack.c.b16 %v2929, %v2927
  %v2952 = vpack.c.b16 %v2932, %v2930
  %v2953 = vpack.c.b16 %v2933, %v2931
  %v2954 = vpack.c.b16 %v2936, %v2934
  %v2955 = vpack.c.b16 %v2937, %v2935
  %v2956 = vpack.c.b16 %v2940, %v2938
  %v2957 = vpack.c.b16 %v2941, %v2939
  %2974 = vmatprep.subr.bf16.mxu0 %v2957
  %2975 = vmatpush1.bf16.msra.mxu0 %v2956
  %2976 = vmatprep.subr.bf16.mxu0 %v2955
  %2977 = vmatpush1.bf16.msra.mxu0 %v2954
  %2978 = vmatprep.subr.bf16.mxu0 %v2953
  %2979 = vmatpush1.bf16.msra.mxu0 %v2952
  %2980 = vmatprep.subr.bf16.mxu0 %v2951
  %2981 = vmatpush1.bf16.msra.mxu0 %v2950
  %2982 = vmatprep.subr.bf16.mxu0 %v2949
  %2983 = vmatpush1.bf16.msra.mxu0 %v2948
  %2984 = vmatprep.subr.bf16.mxu0 %v2947
  %2985 = vmatpush1.bf16.msra.mxu0 %v2946
  %2986 = vmatprep.subr.bf16.mxu0 %v2945
  %2987 = vmatpush1.bf16.msra.mxu0 %v2944
  %2988 = vmatprep.subr.bf16.mxu0 %v2943
  %2989 = vmatpush1.bf16.msra.mxu0 %v2942
  %2990 = vmatprep.subr.bf16.mxu0 0
  %2991 = vmatpush2.bf16.msra.mxu0 0
  %2992 = vmatprep.subr.bf16.mxu0 0
  %2993 = vmatpush2.bf16.msra.mxu0 0
  %2994 = vmatprep.subr.bf16.mxu0 0
  %2995 = vmatpush2.bf16.msra.mxu0 0
  %2996 = vmatprep.subr.bf16.mxu0 0
  %2997 = vmatpush2.bf16.msra.mxu0 0
  %2998 = vmatprep.subr.bf16.mxu0 0
  %2999 = vmatpush2.bf16.msra.mxu0 0
  %3000 = vmatprep.subr.bf16.mxu0 0
  %3001 = vmatpush2.bf16.msra.mxu0 0
  %3002 = vmatprep.subr.bf16.mxu0 0
  %3003 = vmatpush2.bf16.msra.mxu0 0
  %3004 = vmatprep.subr.bf16.mxu0 0
  %3005 = vmatpush2.bf16.msra.mxu0 0
  %3006 = vmatprep.mubr.bf16.mxu0 0
  %3007 = vmatmul.mubr.bf16.gmra.mxu0 %v2869
  %v3008 = vpop.f32.mrf.mxu0
  %v3009 = vadd.f32 0.0, %v3008
  %v3010 = vpop.f32.mrf.mxu0
  %v3011 = vadd.f32 0.0, %v3010
  %v3012 = vpop.f32.mrf.mxu0
  %v3013 = vadd.f32 0.0, %v3012
  %v3014 = vpop.f32.mrf.mxu0
  %v3015 = vadd.f32 0.0, %v3014
  %3016 = vmatprep.mubr.bf16.mxu0 0
  %3017 = vmatmul.mubr.bf16.gmra.mxu0 %v2870
  %v3018 = vpop.f32.mrf.mxu0
  %v3019 = vadd.f32 0.0, %v3018
  %v3020 = vpop.f32.mrf.mxu0
  %v3021 = vadd.f32 0.0, %v3020
  %v3022 = vpop.f32.mrf.mxu0
  %v3023 = vadd.f32 0.0, %v3022
  %v3024 = vpop.f32.mrf.mxu0
  %v3025 = vadd.f32 0.0, %v3024
  %3026 = vmatprep.mubr.bf16.mxu0 0
  %3027 = vmatmul.mubr.bf16.gmra.mxu0 %v2871
  %v3028 = vpop.f32.mrf.mxu0
  %v3029 = vadd.f32 0.0, %v3028
  %v3030 = vpop.f32.mrf.mxu0
  %v3031 = vadd.f32 0.0, %v3030
  %v3032 = vpop.f32.mrf.mxu0
  %v3033 = vadd.f32 0.0, %v3032
  %v3034 = vpop.f32.mrf.mxu0
  %v3035 = vadd.f32 0.0, %v3034
  %3036 = vmatprep.mubr.bf16.mxu0 0
  %3037 = vmatmul.mubr.bf16.gmra.mxu0 %v2872
  %v3038 = vpop.f32.mrf.mxu0
  %v3039 = vadd.f32 0.0, %v3038
  %v3040 = vpop.f32.mrf.mxu0
  %v3041 = vadd.f32 0.0, %v3040
  %v3042 = vpop.f32.mrf.mxu0
  %v3043 = vadd.f32 0.0, %v3042
  %v3044 = vpop.f32.mrf.mxu0
  %v3045 = vadd.f32 0.0, %v3044
  %3046 = vmatprep.mubr.bf16.mxu0 0
  %3047 = vmatmul.mubr.bf16.gmra.mxu0 %v2873
  %v3048 = vpop.f32.mrf.mxu0
  %v3049 = vadd.f32 0.0, %v3048
  %v3050 = vpop.f32.mrf.mxu0
  %v3051 = vadd.f32 0.0, %v3050
  %v3052 = vpop.f32.mrf.mxu0
  %v3053 = vadd.f32 0.0, %v3052
  %v3054 = vpop.f32.mrf.mxu0
  %v3055 = vadd.f32 0.0, %v3054
  %3056 = vmatprep.mubr.bf16.mxu0 0
  %3057 = vmatmul.mubr.bf16.gmra.mxu0 %v2874
  %v3058 = vpop.f32.mrf.mxu0
  %v3059 = vadd.f32 0.0, %v3058
  %v3060 = vpop.f32.mrf.mxu0
  %v3061 = vadd.f32 0.0, %v3060
  %v3062 = vpop.f32.mrf.mxu0
  %v3063 = vadd.f32 0.0, %v3062
  %v3064 = vpop.f32.mrf.mxu0
  %v3065 = vadd.f32 0.0, %v3064
  %3066 = vmatprep.mubr.bf16.mxu0 0
  %3067 = vmatmul.mubr.bf16.gmra.mxu0 %v2875
  %v3068 = vpop.f32.mrf.mxu0
  %v3069 = vadd.f32 0.0, %v3068
  %v3070 = vpop.f32.mrf.mxu0
  %v3071 = vadd.f32 0.0, %v3070
  %v3072 = vpop.f32.mrf.mxu0
  %v3073 = vadd.f32 0.0, %v3072
  %v3074 = vpop.f32.mrf.mxu0
  %v3075 = vadd.f32 0.0, %v3074
  %3076 = vmatprep.mubr.bf16.mxu0 0
  %3077 = vmatmul.mubr.bf16.gmra.mxu0 %v2876
  %v3078 = vpop.f32.mrf.mxu0
  %v3079 = vadd.f32 0.0, %v3078
  %v3080 = vpop.f32.mrf.mxu0
  %v3081 = vadd.f32 0.0, %v3080
  %v3082 = vpop.f32.mrf.mxu0
  %v3083 = vadd.f32 0.0, %v3082
  %v3084 = vpop.f32.mrf.mxu0
  %v3085 = vadd.f32 0.0, %v3084
  %3086 = vdwg.mxu0
  %v3087 = vadd.f32 %v2821, %v3009
  %v3088 = vadd.f32 %v2822, %v3011
  %v3089 = vadd.f32 %v2823, %v3013
  %v3090 = vadd.f32 %v2824, %v3015
  %v3091 = vadd.f32 %v2825, %v3019
  %v3092 = vadd.f32 %v2826, %v3021
  %v3093 = vadd.f32 %v2827, %v3023
  %v3094 = vadd.f32 %v2828, %v3025
  %v3095 = vadd.f32 %v2829, %v3029
  %v3096 = vadd.f32 %v2830, %v3031
  %v3097 = vadd.f32 %v2831, %v3033
  %v3098 = vadd.f32 %v2832, %v3035
  %v3099 = vadd.f32 %v2833, %v3039
  %v3100 = vadd.f32 %v2834, %v3041
  %v3101 = vadd.f32 %v2835, %v3043
  %v3102 = vadd.f32 %v2836, %v3045
  %v3103 = vadd.f32 %v2837, %v3049
  %v3104 = vadd.f32 %v2838, %v3051
  %v3105 = vadd.f32 %v2839, %v3053
  %v3106 = vadd.f32 %v2840, %v3055
  %v3107 = vadd.f32 %v2841, %v3059
  %v3108 = vadd.f32 %v2842, %v3061
  %v3109 = vadd.f32 %v2843, %v3063
  %v3110 = vadd.f32 %v2844, %v3065
  %v3111 = vadd.f32 %v2845, %v3069
  %v3112 = vadd.f32 %v2846, %v3071
  %v3113 = vadd.f32 %v2847, %v3073
  %v3114 = vadd.f32 %v2848, %v3075
  %v3115 = vadd.f32 %v2849, %v3079
  %v3116 = vadd.f32 %v2850, %v3081
  %v3117 = vadd.f32 %v2851, %v3083
  %v3118 = vadd.f32 %v2852, %v3085
  %v3119 = vld [vmem:[#allocation3 + $0x4] sm:$0xff]
  %v3120 = vld [vmem:[#allocation3 + $0xc] sm:$0xff]
  %v3121 = vld [vmem:[#allocation3 + $0x14] sm:$0xff]
  %v3122 = vld [vmem:[#allocation3 + $0x1c] sm:$0xff]
  %v3123 = vld [vmem:[#allocation3 + $0x24] sm:$0xff]
  %v3124 = vld [vmem:[#allocation3 + $0x2c] sm:$0xff]
  %v3125 = vld [vmem:[#allocation3 + $0x34] sm:$0xff]
  %v3126 = vld [vmem:[#allocation3 + $0x3c] sm:$0xff]
  %v3127 = vld [vmem:[#allocation3 + $0x44] sm:$0xff]
  %v3128 = vld [vmem:[#allocation3 + $0x4c] sm:$0xff]
  %v3129 = vld [vmem:[#allocation3 + $0x54] sm:$0xff]
  %v3130 = vld [vmem:[#allocation3 + $0x5c] sm:$0xff]
  %v3131 = vld [vmem:[#allocation3 + $0x64] sm:$0xff]
  %v3132 = vld [vmem:[#allocation3 + $0x6c] sm:$0xff]
  %v3133 = vld [vmem:[#allocation3 + $0x74] sm:$0xff]
  %v3134 = vld [vmem:[#allocation3 + $0x7c] sm:$0xf]
  %v3135 = vpack.c.bf16 %v3120, %v3119
  %v3136 = vpack.c.bf16 %v3122, %v3121
  %v3137 = vpack.c.bf16 %v3124, %v3123
  %v3138 = vpack.c.bf16 %v3126, %v3125
  %v3139 = vpack.c.bf16 %v3128, %v3127
  %v3140 = vpack.c.bf16 %v3130, %v3129
  %v3141 = vpack.c.bf16 %v3132, %v3131
  %v3142 = vpack.c.bf16 %v3134, %v3133
  %s3143 = scalar_lea.vmem %s3, 512
  %v3144 = vld [vmem:[%s3143] sm:$0xff]
  %v3145 = vld [vmem:[%s3143 + $0x8] sm:$0xff]
  %v3146 = vld [vmem:[%s3143 + $0x10] sm:$0xff]
  %v3147 = vld [vmem:[%s3143 + $0x18] sm:$0xff]
  %v3148 = vld [vmem:[%s3143 + $0x20] sm:$0xff]
  %v3149 = vld [vmem:[%s3143 + $0x28] sm:$0xff]
  %v3150 = vld [vmem:[%s3143 + $0x30] sm:$0xff]
  %v3151 = vld [vmem:[%s3143 + $0x38] sm:$0xff]
  %v3152 = vld [vmem:[%s3143 + $0x40] sm:$0xff]
  %v3153 = vld [vmem:[%s3143 + $0x48] sm:$0xff]
  %v3154 = vld [vmem:[%s3143 + $0x50] sm:$0xff]
  %v3155 = vld [vmem:[%s3143 + $0x58] sm:$0xff]
  %v3156 = vld [vmem:[%s3143 + $0x60] sm:$0xff]
  %v3157 = vld [vmem:[%s3143 + $0x68] sm:$0xff]
  %v3158 = vld [vmem:[%s3143 + $0x70] sm:$0xff]
  %v3159 = vld [vmem:[%s3143 + $0x78] sm:$0xff]
  %v3176 = vunpack.c.l.b16 %v3144
  %v3177 = vunpack.c.h.b16 %v3144
  %v3178 = vunpack.c.l.b16 %v3145
  %v3179 = vunpack.c.h.b16 %v3145
  %v3180 = vunpack.c.l.b16 %v3146
  %v3181 = vunpack.c.h.b16 %v3146
  %v3182 = vunpack.c.l.b16 %v3147
  %v3183 = vunpack.c.h.b16 %v3147
  %v3184 = vunpack.c.l.b16 %v3148
  %v3185 = vunpack.c.h.b16 %v3148
  %v3186 = vunpack.c.l.b16 %v3149
  %v3187 = vunpack.c.h.b16 %v3149
  %v3188 = vunpack.c.l.b16 %v3150
  %v3189 = vunpack.c.h.b16 %v3150
  %v3190 = vunpack.c.l.b16 %v3151
  %v3191 = vunpack.c.h.b16 %v3151
  %v3192 = vunpack.c.l.b16 %v3152
  %v3193 = vunpack.c.h.b16 %v3152
  %v3194 = vunpack.c.l.b16 %v3153
  %v3195 = vunpack.c.h.b16 %v3153
  %v3196 = vunpack.c.l.b16 %v3154
  %v3197 = vunpack.c.h.b16 %v3154
  %v3198 = vunpack.c.l.b16 %v3155
  %v3199 = vunpack.c.h.b16 %v3155
  %v3200 = vunpack.c.l.b16 %v3156
  %v3201 = vunpack.c.h.b16 %v3156
  %v3202 = vunpack.c.l.b16 %v3157
  %v3203 = vunpack.c.h.b16 %v3157
  %v3204 = vunpack.c.l.b16 %v3158
  %v3205 = vunpack.c.h.b16 %v3158
  %v3206 = vunpack.c.l.b16 %v3159
  %v3207 = vunpack.c.h.b16 %v3159
  %v3208 = vpack.c.b16 %v3178, %v3176
  %v3209 = vpack.c.b16 %v3179, %v3177
  %v3210 = vpack.c.b16 %v3182, %v3180
  %v3211 = vpack.c.b16 %v3183, %v3181
  %v3212 = vpack.c.b16 %v3186, %v3184
  %v3213 = vpack.c.b16 %v3187, %v3185
  %v3214 = vpack.c.b16 %v3190, %v3188
  %v3215 = vpack.c.b16 %v3191, %v3189
  %v3216 = vpack.c.b16 %v3194, %v3192
  %v3217 = vpack.c.b16 %v3195, %v3193
  %v3218 = vpack.c.b16 %v3198, %v3196
  %v3219 = vpack.c.b16 %v3199, %v3197
  %v3220 = vpack.c.b16 %v3202, %v3200
  %v3221 = vpack.c.b16 %v3203, %v3201
  %v3222 = vpack.c.b16 %v3206, %v3204
  %v3223 = vpack.c.b16 %v3207, %v3205
  %3240 = vmatprep.subr.bf16.mxu0 %v3223
  %3241 = vmatpush1.bf16.msra.mxu0 %v3222
  %3242 = vmatprep.subr.bf16.mxu0 %v3221
  %3243 = vmatpush1.bf16.msra.mxu0 %v3220
  %3244 = vmatprep.subr.bf16.mxu0 %v3219
  %3245 = vmatpush1.bf16.msra.mxu0 %v3218
  %3246 = vmatprep.subr.bf16.mxu0 %v3217
  %3247 = vmatpush1.bf16.msra.mxu0 %v3216
  %3248 = vmatprep.subr.bf16.mxu0 %v3215
  %3249 = vmatpush1.bf16.msra.mxu0 %v3214
  %3250 = vmatprep.subr.bf16.mxu0 %v3213
  %3251 = vmatpush1.bf16.msra.mxu0 %v3212
  %3252 = vmatprep.subr.bf16.mxu0 %v3211
  %3253 = vmatpush1.bf16.msra.mxu0 %v3210
  %3254 = vmatprep.subr.bf16.mxu0 %v3209
  %3255 = vmatpush1.bf16.msra.mxu0 %v3208
  %3256 = vmatprep.subr.bf16.mxu0 0
  %3257 = vmatpush2.bf16.msra.mxu0 0
  %3258 = vmatprep.subr.bf16.mxu0 0
  %3259 = vmatpush2.bf16.msra.mxu0 0
  %3260 = vmatprep.subr.bf16.mxu0 0
  %3261 = vmatpush2.bf16.msra.mxu0 0
  %3262 = vmatprep.subr.bf16.mxu0 0
  %3263 = vmatpush2.bf16.msra.mxu0 0
  %3264 = vmatprep.subr.bf16.mxu0 0
  %3265 = vmatpush2.bf16.msra.mxu0 0
  %3266 = vmatprep.subr.bf16.mxu0 0
  %3267 = vmatpush2.bf16.msra.mxu0 0
  %3268 = vmatprep.subr.bf16.mxu0 0
  %3269 = vmatpush2.bf16.msra.mxu0 0
  %3270 = vmatprep.subr.bf16.mxu0 0
  %3271 = vmatpush2.bf16.msra.mxu0 0
  %3272 = vmatprep.mubr.bf16.mxu0 0
  %3273 = vmatmul.mubr.bf16.gmra.mxu0 %v3135
  %v3274 = vpop.f32.mrf.mxu0
  %v3275 = vadd.f32 0.0, %v3274
  %v3276 = vpop.f32.mrf.mxu0
  %v3277 = vadd.f32 0.0, %v3276
  %v3278 = vpop.f32.mrf.mxu0
  %v3279 = vadd.f32 0.0, %v3278
  %v3280 = vpop.f32.mrf.mxu0
  %v3281 = vadd.f32 0.0, %v3280
  %3282 = vmatprep.mubr.bf16.mxu0 0
  %3283 = vmatmul.mubr.bf16.gmra.mxu0 %v3136
  %v3284 = vpop.f32.mrf.mxu0
  %v3285 = vadd.f32 0.0, %v3284
  %v3286 = vpop.f32.mrf.mxu0
  %v3287 = vadd.f32 0.0, %v3286
  %v3288 = vpop.f32.mrf.mxu0
  %v3289 = vadd.f32 0.0, %v3288
  %v3290 = vpop.f32.mrf.mxu0
  %v3291 = vadd.f32 0.0, %v3290
  %3292 = vmatprep.mubr.bf16.mxu0 0
  %3293 = vmatmul.mubr.bf16.gmra.mxu0 %v3137
  %v3294 = vpop.f32.mrf.mxu0
  %v3295 = vadd.f32 0.0, %v3294
  %v3296 = vpop.f32.mrf.mxu0
  %v3297 = vadd.f32 0.0, %v3296
  %v3298 = vpop.f32.mrf.mxu0
  %v3299 = vadd.f32 0.0, %v3298
  %v3300 = vpop.f32.mrf.mxu0
  %v3301 = vadd.f32 0.0, %v3300
  %3302 = vmatprep.mubr.bf16.mxu0 0
  %3303 = vmatmul.mubr.bf16.gmra.mxu0 %v3138
  %v3304 = vpop.f32.mrf.mxu0
  %v3305 = vadd.f32 0.0, %v3304
  %v3306 = vpop.f32.mrf.mxu0
  %v3307 = vadd.f32 0.0, %v3306
  %v3308 = vpop.f32.mrf.mxu0
  %v3309 = vadd.f32 0.0, %v3308
  %v3310 = vpop.f32.mrf.mxu0
  %v3311 = vadd.f32 0.0, %v3310
  %3312 = vmatprep.mubr.bf16.mxu0 0
  %3313 = vmatmul.mubr.bf16.gmra.mxu0 %v3139
  %v3314 = vpop.f32.mrf.mxu0
  %v3315 = vadd.f32 0.0, %v3314
  %v3316 = vpop.f32.mrf.mxu0
  %v3317 = vadd.f32 0.0, %v3316
  %v3318 = vpop.f32.mrf.mxu0
  %v3319 = vadd.f32 0.0, %v3318
  %v3320 = vpop.f32.mrf.mxu0
  %v3321 = vadd.f32 0.0, %v3320
  %3322 = vmatprep.mubr.bf16.mxu0 0
  %3323 = vmatmul.mubr.bf16.gmra.mxu0 %v3140
  %v3324 = vpop.f32.mrf.mxu0
  %v3325 = vadd.f32 0.0, %v3324
  %v3326 = vpop.f32.mrf.mxu0
  %v3327 = vadd.f32 0.0, %v3326
  %v3328 = vpop.f32.mrf.mxu0
  %v3329 = vadd.f32 0.0, %v3328
  %v3330 = vpop.f32.mrf.mxu0
  %v3331 = vadd.f32 0.0, %v3330
  %3332 = vmatprep.mubr.bf16.mxu0 0
  %3333 = vmatmul.mubr.bf16.gmra.mxu0 %v3141
  %v3334 = vpop.f32.mrf.mxu0
  %v3335 = vadd.f32 0.0, %v3334
  %v3336 = vpop.f32.mrf.mxu0
  %v3337 = vadd.f32 0.0, %v3336
  %v3338 = vpop.f32.mrf.mxu0
  %v3339 = vadd.f32 0.0, %v3338
  %v3340 = vpop.f32.mrf.mxu0
  %v3341 = vadd.f32 0.0, %v3340
  %3342 = vmatprep.mubr.bf16.mxu0 0
  %3343 = vmatmul.mubr.bf16.gmra.mxu0 %v3142
  %v3344 = vpop.f32.mrf.mxu0
  %v3345 = vadd.f32 0.0, %v3344
  %v3346 = vpop.f32.mrf.mxu0
  %v3347 = vadd.f32 0.0, %v3346
  %v3348 = vpop.f32.mrf.mxu0
  %v3349 = vadd.f32 0.0, %v3348
  %v3350 = vpop.f32.mrf.mxu0
  %v3351 = vadd.f32 0.0, %v3350
  %3352 = vdwg.mxu0
  %v3353 = vadd.f32 %v3087, %v3275
  %v3354 = vadd.f32 %v3088, %v3277
  %v3355 = vadd.f32 %v3089, %v3279
  %v3356 = vadd.f32 %v3090, %v3281
  %v3357 = vadd.f32 %v3091, %v3285
  %v3358 = vadd.f32 %v3092, %v3287
  %v3359 = vadd.f32 %v3093, %v3289
  %v3360 = vadd.f32 %v3094, %v3291
  %v3361 = vadd.f32 %v3095, %v3295
  %v3362 = vadd.f32 %v3096, %v3297
  %v3363 = vadd.f32 %v3097, %v3299
  %v3364 = vadd.f32 %v3098, %v3301
  %v3365 = vadd.f32 %v3099, %v3305
  %v3366 = vadd.f32 %v3100, %v3307
  %v3367 = vadd.f32 %v3101, %v3309
  %v3368 = vadd.f32 %v3102, %v3311
  %v3369 = vadd.f32 %v3103, %v3315
  %v3370 = vadd.f32 %v3104, %v3317
  %v3371 = vadd.f32 %v3105, %v3319
  %v3372 = vadd.f32 %v3106, %v3321
  %v3373 = vadd.f32 %v3107, %v3325
  %v3374 = vadd.f32 %v3108, %v3327
  %v3375 = vadd.f32 %v3109, %v3329
  %v3376 = vadd.f32 %v3110, %v3331
  %v3377 = vadd.f32 %v3111, %v3335
  %v3378 = vadd.f32 %v3112, %v3337
  %v3379 = vadd.f32 %v3113, %v3339
  %v3380 = vadd.f32 %v3114, %v3341
  %v3381 = vadd.f32 %v3115, %v3345
  %v3382 = vadd.f32 %v3116, %v3347
  %v3383 = vadd.f32 %v3117, %v3349
  %v3384 = vadd.f32 %v3118, %v3351
  %v3385 = vmax.f32 %v3353, %v3354
  %v3386 = vmax.f32 %v3355, %v3356
  %v3387 = vmax.f32 %v3357, %v3358
  %v3388 = vmax.f32 %v3359, %v3360
  %v3389 = vmax.f32 %v3361, %v3362
  %v3390 = vmax.f32 %v3363, %v3364
  %v3391 = vmax.f32 %v3365, %v3366
  %v3392 = vmax.f32 %v3367, %v3368
  %v3393 = vmax.f32 %v3369, %v3370
  %v3394 = vmax.f32 %v3371, %v3372
  %v3395 = vmax.f32 %v3373, %v3374
  %v3396 = vmax.f32 %v3375, %v3376
  %v3397 = vmax.f32 %v3377, %v3378
  %v3398 = vmax.f32 %v3379, %v3380
  %v3399 = vmax.f32 %v3381, %v3382
  %v3400 = vmax.f32 %v3383, %v3384
  %3401 = vst [vmem:[#allocation4] sm:$0xff] %v3385
  %3402 = vst [vmem:[#allocation4 + $0x8] sm:$0xff] %v3386
  %3403 = vst [vmem:[#allocation4 + $0x10] sm:$0xff] %v3387
  %3404 = vst [vmem:[#allocation4 + $0x18] sm:$0xff] %v3388
  %3405 = vst [vmem:[#allocation4 + $0x20] sm:$0xff] %v3389
  %3406 = vst [vmem:[#allocation4 + $0x28] sm:$0xff] %v3390
  %3407 = vst [vmem:[#allocation4 + $0x30] sm:$0xff] %v3391
  %3408 = vst [vmem:[#allocation4 + $0x38] sm:$0xff] %v3392
  %3409 = vst [vmem:[#allocation4 + $0x40] sm:$0xff] %v3393
  %3410 = vst [vmem:[#allocation4 + $0x48] sm:$0xff] %v3394
  %3411 = vst [vmem:[#allocation4 + $0x50] sm:$0xff] %v3395
  %3412 = vst [vmem:[#allocation4 + $0x58] sm:$0xff] %v3396
  %3413 = vst [vmem:[#allocation4 + $0x60] sm:$0xff] %v3397
  %3414 = vst [vmem:[#allocation4 + $0x68] sm:$0xff] %v3398
  %3415 = vst [vmem:[#allocation4 + $0x70] sm:$0xff] %v3399
  %3416 = vst [vmem:[#allocation4 + $0x78] sm:$0xf] %v3400
  %v3417 = vld [vmem:[#allocation4] ss:$2 sm:$0xff]
  %s3418 = scalar_lea.vmem [#allocation4], 16
  %v3419 = vld [vmem:[%s3418] ss:$2 sm:$0xff]
  %s3420 = scalar_lea.vmem [#allocation4], 32
  %v3421 = vld [vmem:[%s3420] ss:$2 sm:$0xff]
  %s3422 = scalar_lea.vmem [#allocation4], 48
  %v3423 = vld [vmem:[%s3422] ss:$2 sm:$0xff]
  %s3424 = scalar_lea.vmem [#allocation4], 64
  %v3425 = vld [vmem:[%s3424] ss:$2 sm:$0xff]
  %s3426 = scalar_lea.vmem [#allocation4], 80
  %v3427 = vld [vmem:[%s3426] ss:$2 sm:$0xff]
  %s3428 = scalar_lea.vmem [#allocation4], 96
  %v3429 = vld [vmem:[%s3428] ss:$2 sm:$0xff]
  %s3430 = scalar_lea.vmem [#allocation4], 112
  %v3431 = vld [vmem:[%s3430] ss:$2 sm:$0xff]
  %s3432 = scalar_lea.vmem [#allocation4], 1
  %v3433 = vld [vmem:[%s3432] ss:$2 sm:$0xff]
  %s3434 = scalar_lea.vmem [#allocation4], 17
  %v3435 = vld [vmem:[%s3434] ss:$2 sm:$0xff]
  %s3436 = scalar_lea.vmem [#allocation4], 33
  %v3437 = vld [vmem:[%s3436] ss:$2 sm:$0xff]
  %s3438 = scalar_lea.vmem [#allocation4], 49
  %v3439 = vld [vmem:[%s3438] ss:$2 sm:$0xff]
  %s3440 = scalar_lea.vmem [#allocation4], 65
  %v3441 = vld [vmem:[%s3440] ss:$2 sm:$0xff]
  %s3442 = scalar_lea.vmem [#allocation4], 81
  %v3443 = vld [vmem:[%s3442] ss:$2 sm:$0xff]
  %s3444 = scalar_lea.vmem [#allocation4], 97
  %v3445 = vld [vmem:[%s3444] ss:$2 sm:$0xff]
  %s3446 = scalar_lea.vmem [#allocation4], 113
  %v3447 = vld [vmem:[%s3446] ss:$2 sm:$0xff]
  %v3448 = vmax.f32 %v3417, %v3433
  %v3449 = vmax.f32 %v3419, %v3435
  %v3450 = vmax.f32 %v3421, %v3437
  %v3451 = vmax.f32 %v3423, %v3439
  %v3452 = vmax.f32 %v3425, %v3441
  %v3453 = vmax.f32 %v3427, %v3443
  %v3454 = vmax.f32 %v3429, %v3445
  %v3455 = vmax.f32 %v3431, %v3447
  %v3456 = vld [vmem:[%s4] sm:$0x1]
  %v3458 = vlaneseq
  %v3459 = vshrl.u32 %v3458, 7
  %v3460 = vsub.s32 0, %v3459
  %v3461 = vrot.slane %v3456, %v3460
  %v3463 = vadd.f32 %v3448, %v3461
  %v3464 = vadd.f32 %v3449, %v3461
  %v3465 = vadd.f32 %v3450, %v3461
  %v3466 = vadd.f32 %v3451, %v3461
  %v3467 = vadd.f32 %v3452, %v3461
  %v3468 = vadd.f32 %v3453, %v3461
  %v3469 = vadd.f32 %v3454, %v3461
  %v3470 = vadd.f32 %v3455, %v3461
  %v3471 = vmax.f32 %v3463, 0.0
  %v3472 = vmax.f32 %v3464, 0.0
  %v3473 = vmax.f32 %v3465, 0.0
  %v3474 = vmax.f32 %v3466, 0.0
  %v3475 = vmax.f32 %v3467, 0.0
  %v3476 = vmax.f32 %v3468, 0.0
  %v3477 = vmax.f32 %v3469, 0.0
  %v3478 = vmax.f32 %v3470, 0.0
  %3479 = vst [vmem:[#allocation5] sm:$0xff] %v3471
  %3480 = vst [vmem:[#allocation5 + $0x8] sm:$0xff] %v3472
  %3481 = vst [vmem:[#allocation5 + $0x10] sm:$0xff] %v3473
  %3482 = vst [vmem:[#allocation5 + $0x18] sm:$0xff] %v3474
  %3483 = vst [vmem:[#allocation5 + $0x20] sm:$0xff] %v3475
  %3484 = vst [vmem:[#allocation5 + $0x28] sm:$0xff] %v3476
  %3485 = vst [vmem:[#allocation5 + $0x30] sm:$0xff] %v3477
  %3486 = vst [vmem:[#allocation5 + $0x38] sm:$0xff] %v3478
  %v3487 = vld [vmem:[#allocation5] ss:$8 sm:$0xf]
  %v3488 = vld [vmem:[#allocation5] ss:$8 sm:$0xf0]
  %v3489 = vor.u32 %v3487, %v3488
  %v3490 = vpack.c.bf16 %v3489, %v3489
  %v3491 = vld [vmem:[%s5] sm:$0xf]
  %v3492 = vld [vmem:[%s5 + $0x4] sm:$0xf]
  %v3493 = vld [vmem:[%s5 + $0x8] sm:$0xf]
  %v3494 = vld [vmem:[%s5 + $0xc] sm:$0xf]
  %v3495 = vld [vmem:[%s5 + $0x10] sm:$0xf]
  %v3496 = vld [vmem:[%s5 + $0x14] sm:$0xf]
  %v3497 = vld [vmem:[%s5 + $0x18] sm:$0xf]
  %v3498 = vld [vmem:[%s5 + $0x1c] sm:$0xf]
  %v3499 = vld [vmem:[%s5 + $0x20] sm:$0xf]
  %v3500 = vld [vmem:[%s5 + $0x24] sm:$0xf]
  %v3501 = vld [vmem:[%s5 + $0x28] sm:$0xf]
  %v3502 = vld [vmem:[%s5 + $0x2c] sm:$0xf]
  %v3503 = vld [vmem:[%s5 + $0x30] sm:$0xf]
  %v3504 = vld [vmem:[%s5 + $0x34] sm:$0xf]
  %v3505 = vld [vmem:[%s5 + $0x38] sm:$0xf]
  %v3506 = vld [vmem:[%s5 + $0x3c] sm:$0xf]
  %s3507 = scalar_lea.vmem [#allocation5], 1
  %v3508 = vld [vmem:[%s3507] ss:$8 sm:$0xf]
  %v3509 = vld [vmem:[%s3507] ss:$8 sm:$0xf0]
  %v3510 = vor.u32 %v3508, %v3509
  %v3511 = vpack.c.bf16 %v3510, %v3510
  %s3512 = scalar_lea.vmem %s5, 64
  %v3513 = vld [vmem:[%s3512] sm:$0xf]
  %v3514 = vld [vmem:[%s3512 + $0x4] sm:$0xf]
  %v3515 = vld [vmem:[%s3512 + $0x8] sm:$0xf]
  %v3516 = vld [vmem:[%s3512 + $0xc] sm:$0xf]
  %v3517 = vld [vmem:[%s3512 + $0x10] sm:$0xf]
  %v3518 = vld [vmem:[%s3512 + $0x14] sm:$0xf]
  %v3519 = vld [vmem:[%s3512 + $0x18] sm:$0xf]
  %v3520 = vld [vmem:[%s3512 + $0x1c] sm:$0xf]
  %v3521 = vld [vmem:[%s3512 + $0x20] sm:$0xf]
  %v3522 = vld [vmem:[%s3512 + $0x24] sm:$0xf]
  %v3523 = vld [vmem:[%s3512 + $0x28] sm:$0xf]
  %v3524 = vld [vmem:[%s3512 + $0x2c] sm:$0xf]
  %v3525 = vld [vmem:[%s3512 + $0x30] sm:$0xf]
  %v3526 = vld [vmem:[%s3512 + $0x34] sm:$0xf]
  %v3527 = vld [vmem:[%s3512 + $0x38] sm:$0xf]
  %v3528 = vld [vmem:[%s3512 + $0x3c] sm:$0xf]
  %v3545 = vunpack.c.l.b16 %v3513
  %v3546 = vunpack.c.l.b16 %v3514
  %v3547 = vunpack.c.l.b16 %v3515
  %v3548 = vunpack.c.l.b16 %v3516
  %v3549 = vunpack.c.l.b16 %v3517
  %v3550 = vunpack.c.l.b16 %v3518
  %v3551 = vunpack.c.l.b16 %v3519
  %v3552 = vunpack.c.l.b16 %v3520
  %v3553 = vunpack.c.l.b16 %v3521
  %v3554 = vunpack.c.l.b16 %v3522
  %v3555 = vunpack.c.l.b16 %v3523
  %v3556 = vunpack.c.l.b16 %v3524
  %v3557 = vunpack.c.l.b16 %v3525
  %v3558 = vunpack.c.l.b16 %v3526
  %v3559 = vunpack.c.l.b16 %v3527
  %v3560 = vunpack.c.l.b16 %v3528
  %v3561 = vpack.c.b16 %v3546, %v3545
  %v3562 = vpack.c.b16 %v3548, %v3547
  %v3563 = vpack.c.b16 %v3550, %v3549
  %v3564 = vpack.c.b16 %v3552, %v3551
  %v3565 = vpack.c.b16 %v3554, %v3553
  %v3566 = vpack.c.b16 %v3556, %v3555
  %v3567 = vpack.c.b16 %v3558, %v3557
  %v3568 = vpack.c.b16 %v3560, %v3559
  %3577 = vmatprep.subr.bf16.mxu0 0
  %3578 = vmatpush1.bf16.msra.mxu0 %v3568
  %3579 = vmatprep.subr.bf16.mxu0 0
  %3580 = vmatpush1.bf16.msra.mxu0 %v3567
  %3581 = vmatprep.subr.bf16.mxu0 0
  %3582 = vmatpush1.bf16.msra.mxu0 %v3566
  %3583 = vmatprep.subr.bf16.mxu0 0
  %3584 = vmatpush1.bf16.msra.mxu0 %v3565
  %3585 = vmatprep.subr.bf16.mxu0 0
  %3586 = vmatpush1.bf16.msra.mxu0 %v3564
  %3587 = vmatprep.subr.bf16.mxu0 0
  %3588 = vmatpush1.bf16.msra.mxu0 %v3563
  %3589 = vmatprep.subr.bf16.mxu0 0
  %3590 = vmatpush1.bf16.msra.mxu0 %v3562
  %3591 = vmatprep.subr.bf16.mxu0 0
  %3592 = vmatpush1.bf16.msra.mxu0 %v3561
  %3593 = vmatprep.subr.bf16.mxu0 0
  %3594 = vmatpush2.bf16.msra.mxu0 0
  %3595 = vmatprep.subr.bf16.mxu0 0
  %3596 = vmatpush2.bf16.msra.mxu0 0
  %3597 = vmatprep.subr.bf16.mxu0 0
  %3598 = vmatpush2.bf16.msra.mxu0 0
  %3599 = vmatprep.subr.bf16.mxu0 0
  %3600 = vmatpush2.bf16.msra.mxu0 0
  %3601 = vmatprep.subr.bf16.mxu0 0
  %3602 = vmatpush2.bf16.msra.mxu0 0
  %3603 = vmatprep.subr.bf16.mxu0 0
  %3604 = vmatpush2.bf16.msra.mxu0 0
  %3605 = vmatprep.subr.bf16.mxu0 0
  %3606 = vmatpush2.bf16.msra.mxu0 0
  %3607 = vmatprep.subr.bf16.mxu0 0
  %3608 = vmatpush2.bf16.msra.mxu0 0
  %3609 = vmatprep.mubr.bf16.mxu0 0
  %3610 = vmatmul.mubr.bf16.gmra.mxu0 %v3511
  %v3611 = vpop.f32.mrf.mxu0
  %v3612 = vadd.f32 0.0, %v3611
  %v3613 = vpop.f32.mrf.mxu0
  %v3614 = vpop.f32.mrf.mxu0
  %v3615 = vpop.f32.mrf.mxu0
  %3616 = vdwg.mxu0
  %v3633 = vunpack.c.l.b16 %v3491
  %v3634 = vunpack.c.l.b16 %v3492
  %v3635 = vunpack.c.l.b16 %v3493
  %v3636 = vunpack.c.l.b16 %v3494
  %v3637 = vunpack.c.l.b16 %v3495
  %v3638 = vunpack.c.l.b16 %v3496
  %v3639 = vunpack.c.l.b16 %v3497
  %v3640 = vunpack.c.l.b16 %v3498
  %v3641 = vunpack.c.l.b16 %v3499
  %v3642 = vunpack.c.l.b16 %v3500
  %v3643 = vunpack.c.l.b16 %v3501
  %v3644 = vunpack.c.l.b16 %v3502
  %v3645 = vunpack.c.l.b16 %v3503
  %v3646 = vunpack.c.l.b16 %v3504
  %v3647 = vunpack.c.l.b16 %v3505
  %v3648 = vunpack.c.l.b16 %v3506
  %v3649 = vpack.c.b16 %v3634, %v3633
  %v3650 = vpack.c.b16 %v3636, %v3635
  %v3651 = vpack.c.b16 %v3638, %v3637
  %v3652 = vpack.c.b16 %v3640, %v3639
  %v3653 = vpack.c.b16 %v3642, %v3641
  %v3654 = vpack.c.b16 %v3644, %v3643
  %v3655 = vpack.c.b16 %v3646, %v3645
  %v3656 = vpack.c.b16 %v3648, %v3647
  %3665 = vmatprep.subr.bf16.mxu0 0
  %3666 = vmatpush1.bf16.msra.mxu0 %v3656
  %3667 = vmatprep.subr.bf16.mxu0 0
  %3668 = vmatpush1.bf16.msra.mxu0 %v3655
  %3669 = vmatprep.subr.bf16.mxu0 0
  %3670 = vmatpush1.bf16.msra.mxu0 %v3654
  %3671 = vmatprep.subr.bf16.mxu0 0
  %3672 = vmatpush1.bf16.msra.mxu0 %v3653
  %3673 = vmatprep.subr.bf16.mxu0 0
  %3674 = vmatpush1.bf16.msra.mxu0 %v3652
  %3675 = vmatprep.subr.bf16.mxu0 0
  %3676 = vmatpush1.bf16.msra.mxu0 %v3651
  %3677 = vmatprep.subr.bf16.mxu0 0
  %3678 = vmatpush1.bf16.msra.mxu0 %v3650
  %3679 = vmatprep.subr.bf16.mxu0 0
  %3680 = vmatpush1.bf16.msra.mxu0 %v3649
  %3681 = vmatprep.subr.bf16.mxu0 0
  %3682 = vmatpush2.bf16.msra.mxu0 0
  %3683 = vmatprep.subr.bf16.mxu0 0
  %3684 = vmatpush2.bf16.msra.mxu0 0
  %3685 = vmatprep.subr.bf16.mxu0 0
  %3686 = vmatpush2.bf16.msra.mxu0 0
  %3687 = vmatprep.subr.bf16.mxu0 0
  %3688 = vmatpush2.bf16.msra.mxu0 0
  %3689 = vmatprep.subr.bf16.mxu0 0
  %3690 = vmatpush2.bf16.msra.mxu0 0
  %3691 = vmatprep.subr.bf16.mxu0 0
  %3692 = vmatpush2.bf16.msra.mxu0 0
  %3693 = vmatprep.subr.bf16.mxu0 0
  %3694 = vmatpush2.bf16.msra.mxu0 0
  %3695 = vmatprep.subr.bf16.mxu0 0
  %3696 = vmatpush2.bf16.msra.mxu0 0
  %3697 = vmatprep.mubr.bf16.mxu0 0
  %3698 = vmatmul.mubr.bf16.gmra.mxu0 %v3490
  %v3699 = vpop.f32.mrf.mxu0
  %v3700 = vadd.f32 %v3612, %v3699
  %v3701 = vpop.f32.mrf.mxu0
  %v3702 = vpop.f32.mrf.mxu0
  %v3703 = vpop.f32.mrf.mxu0
  %3704 = vdwg.mxu0
  %s3705 = scalar_lea.vmem [#allocation5], 2
  %v3706 = vld [vmem:[%s3705] ss:$8 sm:$0xf]
  %v3707 = vld [vmem:[%s3705] ss:$8 sm:$0xf0]
  %v3708 = vor.u32 %v3706, %v3707
  %v3709 = vpack.c.bf16 %v3708, %v3708
  %s3710 = scalar_lea.vmem %s5, 128
  %v3711 = vld [vmem:[%s3710] sm:$0xf]
  %v3712 = vld [vmem:[%s3710 + $0x4] sm:$0xf]
  %v3713 = vld [vmem:[%s3710 + $0x8] sm:$0xf]
  %v3714 = vld [vmem:[%s3710 + $0xc] sm:$0xf]
  %v3715 = vld [vmem:[%s3710 + $0x10] sm:$0xf]
  %v3716 = vld [vmem:[%s3710 + $0x14] sm:$0xf]
  %v3717 = vld [vmem:[%s3710 + $0x18] sm:$0xf]
  %v3718 = vld [vmem:[%s3710 + $0x1c] sm:$0xf]
  %v3719 = vld [vmem:[%s3710 + $0x20] sm:$0xf]
  %v3720 = vld [vmem:[%s3710 + $0x24] sm:$0xf]
  %v3721 = vld [vmem:[%s3710 + $0x28] sm:$0xf]
  %v3722 = vld [vmem:[%s3710 + $0x2c] sm:$0xf]
  %v3723 = vld [vmem:[%s3710 + $0x30] sm:$0xf]
  %v3724 = vld [vmem:[%s3710 + $0x34] sm:$0xf]
  %v3725 = vld [vmem:[%s3710 + $0x38] sm:$0xf]
  %v3726 = vld [vmem:[%s3710 + $0x3c] sm:$0xf]
  %v3743 = vunpack.c.l.b16 %v3711
  %v3744 = vunpack.c.l.b16 %v3712
  %v3745 = vunpack.c.l.b16 %v3713
  %v3746 = vunpack.c.l.b16 %v3714
  %v3747 = vunpack.c.l.b16 %v3715
  %v3748 = vunpack.c.l.b16 %v3716
  %v3749 = vunpack.c.l.b16 %v3717
  %v3750 = vunpack.c.l.b16 %v3718
  %v3751 = vunpack.c.l.b16 %v3719
  %v3752 = vunpack.c.l.b16 %v3720
  %v3753 = vunpack.c.l.b16 %v3721
  %v3754 = vunpack.c.l.b16 %v3722
  %v3755 = vunpack.c.l.b16 %v3723
  %v3756 = vunpack.c.l.b16 %v3724
  %v3757 = vunpack.c.l.b16 %v3725
  %v3758 = vunpack.c.l.b16 %v3726
  %v3759 = vpack.c.b16 %v3744, %v3743
  %v3760 = vpack.c.b16 %v3746, %v3745
  %v3761 = vpack.c.b16 %v3748, %v3747
  %v3762 = vpack.c.b16 %v3750, %v3749
  %v3763 = vpack.c.b16 %v3752, %v3751
  %v3764 = vpack.c.b16 %v3754, %v3753
  %v3765 = vpack.c.b16 %v3756, %v3755
  %v3766 = vpack.c.b16 %v3758, %v3757
  %3775 = vmatprep.subr.bf16.mxu0 0
  %3776 = vmatpush1.bf16.msra.mxu0 %v3766
  %3777 = vmatprep.subr.bf16.mxu0 0
  %3778 = vmatpush1.bf16.msra.mxu0 %v3765
  %3779 = vmatprep.subr.bf16.mxu0 0
  %3780 = vmatpush1.bf16.msra.mxu0 %v3764
  %3781 = vmatprep.subr.bf16.mxu0 0
  %3782 = vmatpush1.bf16.msra.mxu0 %v3763
  %3783 = vmatprep.subr.bf16.mxu0 0
  %3784 = vmatpush1.bf16.msra.mxu0 %v3762
  %3785 = vmatprep.subr.bf16.mxu0 0
  %3786 = vmatpush1.bf16.msra.mxu0 %v3761
  %3787 = vmatprep.subr.bf16.mxu0 0
  %3788 = vmatpush1.bf16.msra.mxu0 %v3760
  %3789 = vmatprep.subr.bf16.mxu0 0
  %3790 = vmatpush1.bf16.msra.mxu0 %v3759
  %3791 = vmatprep.subr.bf16.mxu0 0
  %3792 = vmatpush2.bf16.msra.mxu0 0
  %3793 = vmatprep.subr.bf16.mxu0 0
  %3794 = vmatpush2.bf16.msra.mxu0 0
  %3795 = vmatprep.subr.bf16.mxu0 0
  %3796 = vmatpush2.bf16.msra.mxu0 0
  %3797 = vmatprep.subr.bf16.mxu0 0
  %3798 = vmatpush2.bf16.msra.mxu0 0
  %3799 = vmatprep.subr.bf16.mxu0 0
  %3800 = vmatpush2.bf16.msra.mxu0 0
  %3801 = vmatprep.subr.bf16.mxu0 0
  %3802 = vmatpush2.bf16.msra.mxu0 0
  %3803 = vmatprep.subr.bf16.mxu0 0
  %3804 = vmatpush2.bf16.msra.mxu0 0
  %3805 = vmatprep.subr.bf16.mxu0 0
  %3806 = vmatpush2.bf16.msra.mxu0 0
  %3807 = vmatprep.mubr.bf16.mxu0 0
  %3808 = vmatmul.mubr.bf16.gmra.mxu0 %v3709
  %v3809 = vpop.f32.mrf.mxu0
  %v3810 = vadd.f32 0.0, %v3809
  %v3811 = vpop.f32.mrf.mxu0
  %v3812 = vpop.f32.mrf.mxu0
  %v3813 = vpop.f32.mrf.mxu0
  %3814 = vdwg.mxu0
  %v3815 = vadd.f32 %v3700, %v3810
  %s3816 = scalar_lea.vmem [#allocation5], 3
  %v3817 = vld [vmem:[%s3816] ss:$8 sm:$0xf]
  %v3818 = vld [vmem:[%s3816] ss:$8 sm:$0xf0]
  %v3819 = vor.u32 %v3817, %v3818
  %v3820 = vpack.c.bf16 %v3819, %v3819
  %s3821 = scalar_lea.vmem %s5, 192
  %v3822 = vld [vmem:[%s3821] sm:$0xf]
  %v3823 = vld [vmem:[%s3821 + $0x4] sm:$0xf]
  %v3824 = vld [vmem:[%s3821 + $0x8] sm:$0xf]
  %v3825 = vld [vmem:[%s3821 + $0xc] sm:$0xf]
  %v3826 = vld [vmem:[%s3821 + $0x10] sm:$0xf]
  %v3827 = vld [vmem:[%s3821 + $0x14] sm:$0xf]
  %v3828 = vld [vmem:[%s3821 + $0x18] sm:$0xf]
  %v3829 = vld [vmem:[%s3821 + $0x1c] sm:$0xf]
  %v3830 = vld [vmem:[%s3821 + $0x20] sm:$0xf]
  %v3831 = vld [vmem:[%s3821 + $0x24] sm:$0xf]
  %v3832 = vld [vmem:[%s3821 + $0x28] sm:$0xf]
  %v3833 = vld [vmem:[%s3821 + $0x2c] sm:$0xf]
  %v3834 = vld [vmem:[%s3821 + $0x30] sm:$0xf]
  %v3835 = vld [vmem:[%s3821 + $0x34] sm:$0xf]
  %v3836 = vld [vmem:[%s3821 + $0x38] sm:$0xf]
  %v3837 = vld [vmem:[%s3821 + $0x3c] sm:$0xf]
  %v3854 = vunpack.c.l.b16 %v3822
  %v3855 = vunpack.c.l.b16 %v3823
  %v3856 = vunpack.c.l.b16 %v3824
  %v3857 = vunpack.c.l.b16 %v3825
  %v3858 = vunpack.c.l.b16 %v3826
  %v3859 = vunpack.c.l.b16 %v3827
  %v3860 = vunpack.c.l.b16 %v3828
  %v3861 = vunpack.c.l.b16 %v3829
  %v3862 = vunpack.c.l.b16 %v3830
  %v3863 = vunpack.c.l.b16 %v3831
  %v3864 = vunpack.c.l.b16 %v3832
  %v3865 = vunpack.c.l.b16 %v3833
  %v3866 = vunpack.c.l.b16 %v3834
  %v3867 = vunpack.c.l.b16 %v3835
  %v3868 = vunpack.c.l.b16 %v3836
  %v3869 = vunpack.c.l.b16 %v3837
  %v3870 = vpack.c.b16 %v3855, %v3854
  %v3871 = vpack.c.b16 %v3857, %v3856
  %v3872 = vpack.c.b16 %v3859, %v3858
  %v3873 = vpack.c.b16 %v3861, %v3860
  %v3874 = vpack.c.b16 %v3863, %v3862
  %v3875 = vpack.c.b16 %v3865, %v3864
  %v3876 = vpack.c.b16 %v3867, %v3866
  %v3877 = vpack.c.b16 %v3869, %v3868
  %3886 = vmatprep.subr.bf16.mxu0 0
  %3887 = vmatpush1.bf16.msra.mxu0 %v3877
  %3888 = vmatprep.subr.bf16.mxu0 0
  %3889 = vmatpush1.bf16.msra.mxu0 %v3876
  %3890 = vmatprep.subr.bf16.mxu0 0
  %3891 = vmatpush1.bf16.msra.mxu0 %v3875
  %3892 = vmatprep.subr.bf16.mxu0 0
  %3893 = vmatpush1.bf16.msra.mxu0 %v3874
  %3894 = vmatprep.subr.bf16.mxu0 0
  %3895 = vmatpush1.bf16.msra.mxu0 %v3873
  %3896 = vmatprep.subr.bf16.mxu0 0
  %3897 = vmatpush1.bf16.msra.mxu0 %v3872
  %3898 = vmatprep.subr.bf16.mxu0 0
  %3899 = vmatpush1.bf16.msra.mxu0 %v3871
  %3900 = vmatprep.subr.bf16.mxu0 0
  %3901 = vmatpush1.bf16.msra.mxu0 %v3870
  %3902 = vmatprep.subr.bf16.mxu0 0
  %3903 = vmatpush2.bf16.msra.mxu0 0
  %3904 = vmatprep.subr.bf16.mxu0 0
  %3905 = vmatpush2.bf16.msra.mxu0 0
  %3906 = vmatprep.subr.bf16.mxu0 0
  %3907 = vmatpush2.bf16.msra.mxu0 0
  %3908 = vmatprep.subr.bf16.mxu0 0
  %3909 = vmatpush2.bf16.msra.mxu0 0
  %3910 = vmatprep.subr.bf16.mxu0 0
  %3911 = vmatpush2.bf16.msra.mxu0 0
  %3912 = vmatprep.subr.bf16.mxu0 0
  %3913 = vmatpush2.bf16.msra.mxu0 0
  %3914 = vmatprep.subr.bf16.mxu0 0
  %3915 = vmatpush2.bf16.msra.mxu0 0
  %3916 = vmatprep.subr.bf16.mxu0 0
  %3917 = vmatpush2.bf16.msra.mxu0 0
  %3918 = vmatprep.mubr.bf16.mxu0 0
  %3919 = vmatmul.mubr.bf16.gmra.mxu0 %v3820
  %v3920 = vpop.f32.mrf.mxu0
  %v3921 = vadd.f32 0.0, %v3920
  %v3922 = vpop.f32.mrf.mxu0
  %v3923 = vpop.f32.mrf.mxu0
  %v3924 = vpop.f32.mrf.mxu0
  %3925 = vdwg.mxu0
  %v3926 = vadd.f32 %v3815, %v3921
  %s3927 = scalar_lea.vmem [#allocation5], 4
  %v3928 = vld [vmem:[%s3927] ss:$8 sm:$0xf]
  %v3929 = vld [vmem:[%s3927] ss:$8 sm:$0xf0]
  %v3930 = vor.u32 %v3928, %v3929
  %v3931 = vpack.c.bf16 %v3930, %v3930
  %s3932 = scalar_lea.vmem %s5, 256
  %v3933 = vld [vmem:[%s3932] sm:$0xf]
  %v3934 = vld [vmem:[%s3932 + $0x4] sm:$0xf]
  %v3935 = vld [vmem:[%s3932 + $0x8] sm:$0xf]
  %v3936 = vld [vmem:[%s3932 + $0xc] sm:$0xf]
  %v3937 = vld [vmem:[%s3932 + $0x10] sm:$0xf]
  %v3938 = vld [vmem:[%s3932 + $0x14] sm:$0xf]
  %v3939 = vld [vmem:[%s3932 + $0x18] sm:$0xf]
  %v3940 = vld [vmem:[%s3932 + $0x1c] sm:$0xf]
  %v3941 = vld [vmem:[%s3932 + $0x20] sm:$0xf]
  %v3942 = vld [vmem:[%s3932 + $0x24] sm:$0xf]
  %v3943 = vld [vmem:[%s3932 + $0x28] sm:$0xf]
  %v3944 = vld [vmem:[%s3932 + $0x2c] sm:$0xf]
  %v3945 = vld [vmem:[%s3932 + $0x30] sm:$0xf]
  %v3946 = vld [vmem:[%s3932 + $0x34] sm:$0xf]
  %v3947 = vld [vmem:[%s3932 + $0x38] sm:$0xf]
  %v3948 = vld [vmem:[%s3932 + $0x3c] sm:$0xf]
  %v3965 = vunpack.c.l.b16 %v3933
  %v3966 = vunpack.c.l.b16 %v3934
  %v3967 = vunpack.c.l.b16 %v3935
  %v3968 = vunpack.c.l.b16 %v3936
  %v3969 = vunpack.c.l.b16 %v3937
  %v3970 = vunpack.c.l.b16 %v3938
  %v3971 = vunpack.c.l.b16 %v3939
  %v3972 = vunpack.c.l.b16 %v3940
  %v3973 = vunpack.c.l.b16 %v3941
  %v3974 = vunpack.c.l.b16 %v3942
  %v3975 = vunpack.c.l.b16 %v3943
  %v3976 = vunpack.c.l.b16 %v3944
  %v3977 = vunpack.c.l.b16 %v3945
  %v3978 = vunpack.c.l.b16 %v3946
  %v3979 = vunpack.c.l.b16 %v3947
  %v3980 = vunpack.c.l.b16 %v3948
  %v3981 = vpack.c.b16 %v3966, %v3965
  %v3982 = vpack.c.b16 %v3968, %v3967
  %v3983 = vpack.c.b16 %v3970, %v3969
  %v3984 = vpack.c.b16 %v3972, %v3971
  %v3985 = vpack.c.b16 %v3974, %v3973
  %v3986 = vpack.c.b16 %v3976, %v3975
  %v3987 = vpack.c.b16 %v3978, %v3977
  %v3988 = vpack.c.b16 %v3980, %v3979
  %3997 = vmatprep.subr.bf16.mxu0 0
  %3998 = vmatpush1.bf16.msra.mxu0 %v3988
  %3999 = vmatprep.subr.bf16.mxu0 0
  %4000 = vmatpush1.bf16.msra.mxu0 %v3987
  %4001 = vmatprep.subr.bf16.mxu0 0
  %4002 = vmatpush1.bf16.msra.mxu0 %v3986
  %4003 = vmatprep.subr.bf16.mxu0 0
  %4004 = vmatpush1.bf16.msra.mxu0 %v3985
  %4005 = vmatprep.subr.bf16.mxu0 0
  %4006 = vmatpush1.bf16.msra.mxu0 %v3984
  %4007 = vmatprep.subr.bf16.mxu0 0
  %4008 = vmatpush1.bf16.msra.mxu0 %v3983
  %4009 = vmatprep.subr.bf16.mxu0 0
  %4010 = vmatpush1.bf16.msra.mxu0 %v3982
  %4011 = vmatprep.subr.bf16.mxu0 0
  %4012 = vmatpush1.bf16.msra.mxu0 %v3981
  %4013 = vmatprep.subr.bf16.mxu0 0
  %4014 = vmatpush2.bf16.msra.mxu0 0
  %4015 = vmatprep.subr.bf16.mxu0 0
  %4016 = vmatpush2.bf16.msra.mxu0 0
  %4017 = vmatprep.subr.bf16.mxu0 0
  %4018 = vmatpush2.bf16.msra.mxu0 0
  %4019 = vmatprep.subr.bf16.mxu0 0
  %4020 = vmatpush2.bf16.msra.mxu0 0
  %4021 = vmatprep.subr.bf16.mxu0 0
  %4022 = vmatpush2.bf16.msra.mxu0 0
  %4023 = vmatprep.subr.bf16.mxu0 0
  %4024 = vmatpush2.bf16.msra.mxu0 0
  %4025 = vmatprep.subr.bf16.mxu0 0
  %4026 = vmatpush2.bf16.msra.mxu0 0
  %4027 = vmatprep.subr.bf16.mxu0 0
  %4028 = vmatpush2.bf16.msra.mxu0 0
  %4029 = vmatprep.mubr.bf16.mxu0 0
  %4030 = vmatmul.mubr.bf16.gmra.mxu0 %v3931
  %v4031 = vpop.f32.mrf.mxu0
  %v4032 = vadd.f32 0.0, %v4031
  %v4033 = vpop.f32.mrf.mxu0
  %v4034 = vpop.f32.mrf.mxu0
  %v4035 = vpop.f32.mrf.mxu0
  %4036 = vdwg.mxu0
  %v4037 = vadd.f32 %v3926, %v4032
  %v4038 = vld [vmem:[%s6] sm:$0x1]
  %v4040 = vlaneseq
  %v4041 = vshrl.u32 %v4040, 7
  %v4042 = vsub.s32 0, %v4041
  %v4043 = vrot.slane %v4038, %v4042
  %v4045 = vadd.f32 %v4037, %v4043
  %v4046 = vmax.f32 %v4045, 0.0
  %v4047 = vpack.c.bf16 %v4046, %v4046
  %v4048 = vld [vmem:[%s7] sm:$0xf]
  %v4049 = vld [vmem:[%s7 + $0x4] sm:$0xf]
  %v4050 = vld [vmem:[%s7 + $0x8] sm:$0xf]
  %v4051 = vld [vmem:[%s7 + $0xc] sm:$0xf]
  %v4052 = vld [vmem:[%s7 + $0x10] sm:$0xf]
  %v4053 = vld [vmem:[%s7 + $0x14] sm:$0xf]
  %v4054 = vld [vmem:[%s7 + $0x18] sm:$0xf]
  %v4055 = vld [vmem:[%s7 + $0x1c] sm:$0xf]
  %v4056 = vld [vmem:[%s7 + $0x20] sm:$0xf]
  %v4057 = vld [vmem:[%s7 + $0x24] sm:$0xf]
  %v4058 = vld [vmem:[%s7 + $0x28] sm:$0xf]
  %v4059 = vld [vmem:[%s7 + $0x2c] sm:$0xf]
  %v4060 = vld [vmem:[%s7 + $0x30] sm:$0xf]
  %v4061 = vld [vmem:[%s7 + $0x34] sm:$0xf]
  %v4062 = vld [vmem:[%s7 + $0x38] sm:$0xf]
  %v4063 = vld [vmem:[%s7 + $0x3c] sm:$0xf]
  %v4064 = vld [vmem:[%s8] sm:$0x1]
  %v4066 = vlaneseq
  %v4067 = vshrl.u32 %v4066, 7
  %v4068 = vsub.s32 0, %v4067
  %v4069 = vrot.slane %v4064, %v4068
  %v4087 = vunpack.c.l.b16 %v4048
  %v4088 = vunpack.c.l.b16 %v4049
  %v4089 = vunpack.c.l.b16 %v4050
  %v4090 = vunpack.c.l.b16 %v4051
  %v4091 = vunpack.c.l.b16 %v4052
  %v4092 = vunpack.c.l.b16 %v4053
  %v4093 = vunpack.c.l.b16 %v4054
  %v4094 = vunpack.c.l.b16 %v4055
  %v4095 = vunpack.c.l.b16 %v4056
  %v4096 = vunpack.c.l.b16 %v4057
  %v4097 = vunpack.c.l.b16 %v4058
  %v4098 = vunpack.c.l.b16 %v4059
  %v4099 = vunpack.c.l.b16 %v4060
  %v4100 = vunpack.c.l.b16 %v4061
  %v4101 = vunpack.c.l.b16 %v4062
  %v4102 = vunpack.c.l.b16 %v4063
  %v4103 = vpack.c.b16 %v4088, %v4087
  %v4104 = vpack.c.b16 %v4090, %v4089
  %v4105 = vpack.c.b16 %v4092, %v4091
  %v4106 = vpack.c.b16 %v4094, %v4093
  %v4107 = vpack.c.b16 %v4096, %v4095
  %v4108 = vpack.c.b16 %v4098, %v4097
  %v4109 = vpack.c.b16 %v4100, %v4099
  %v4110 = vpack.c.b16 %v4102, %v4101
  %4119 = vmatprep.subr.bf16.mxu0 0
  %4120 = vmatpush1.bf16.msra.mxu0 %v4110
  %4121 = vmatprep.subr.bf16.mxu0 0
  %4122 = vmatpush1.bf16.msra.mxu0 %v4109
  %4123 = vmatprep.subr.bf16.mxu0 0
  %4124 = vmatpush1.bf16.msra.mxu0 %v4108
  %4125 = vmatprep.subr.bf16.mxu0 0
  %4126 = vmatpush1.bf16.msra.mxu0 %v4107
  %4127 = vmatprep.subr.bf16.mxu0 0
  %4128 = vmatpush1.bf16.msra.mxu0 %v4106
  %4129 = vmatprep.subr.bf16.mxu0 0
  %4130 = vmatpush1.bf16.msra.mxu0 %v4105
  %4131 = vmatprep.subr.bf16.mxu0 0
  %4132 = vmatpush1.bf16.msra.mxu0 %v4104
  %4133 = vmatprep.subr.bf16.mxu0 0
  %4134 = vmatpush1.bf16.msra.mxu0 %v4103
  %4135 = vmatprep.subr.bf16.mxu0 0
  %4136 = vmatpush2.bf16.msra.mxu0 0
  %4137 = vmatprep.subr.bf16.mxu0 0
  %4138 = vmatpush2.bf16.msra.mxu0 0
  %4139 = vmatprep.subr.bf16.mxu0 0
  %4140 = vmatpush2.bf16.msra.mxu0 0
  %4141 = vmatprep.subr.bf16.mxu0 0
  %4142 = vmatpush2.bf16.msra.mxu0 0
  %4143 = vmatprep.subr.bf16.mxu0 0
  %4144 = vmatpush2.bf16.msra.mxu0 0
  %4145 = vmatprep.subr.bf16.mxu0 0
  %4146 = vmatpush2.bf16.msra.mxu0 0
  %4147 = vmatprep.subr.bf16.mxu0 0
  %4148 = vmatpush2.bf16.msra.mxu0 0
  %4149 = vmatprep.subr.bf16.mxu0 0
  %4150 = vmatpush2.bf16.msra.mxu0 0
  %4151 = vmatprep.mubr.bf16.mxu0 0
  %4152 = vmatmul.mubr.bf16.gmra.mxu0 %v4047
  %v4153 = vpop.f32.mrf.mxu0
  %v4154 = vadd.f32 %v4069, %v4153
  %v4155 = vpop.f32.mrf.mxu0
  %v4156 = vpop.f32.mrf.mxu0
  %v4157 = vpop.f32.mrf.mxu0
  %4158 = vdwg.mxu0
  %v4159 = vmax.f32 %v4154, 0.0
  %v4160 = vpack.c.bf16 %v4159, %v4159
  %v4161 = vld [vmem:[%s9] sm:$0xf]
  %v4162 = vld [vmem:[%s9 + $0x4] sm:$0xf]
  %v4163 = vld [vmem:[%s9 + $0x8] sm:$0xf]
  %v4164 = vld [vmem:[%s9 + $0xc] sm:$0xf]
  %v4165 = vld [vmem:[%s9 + $0x10] sm:$0xf]
  %v4166 = vld [vmem:[%s9 + $0x14] sm:$0xf]
  %v4167 = vld [vmem:[%s9 + $0x18] sm:$0xf]
  %v4168 = vld [vmem:[%s9 + $0x1c] sm:$0xf]
  %v4169 = vld [vmem:[%s9 + $0x20] sm:$0xf]
  %v4170 = vld [vmem:[%s9 + $0x24] sm:$0xf]
  %v4171 = vld [vmem:[%s9 + $0x28] sm:$0xf]
  %v4172 = vld [vmem:[%s9 + $0x2c] sm:$0xf]
  %v4173 = vld [vmem:[%s9 + $0x30] sm:$0xf]
  %v4174 = vld [vmem:[%s9 + $0x34] sm:$0xf]
  %v4175 = vld [vmem:[%s9 + $0x38] sm:$0xf]
  %v4176 = vld [vmem:[%s9 + $0x3c] sm:$0xf]
  %v4177 = vld [vmem:[%s10] sm:$0x1]
  %v4179 = vlaneseq
  %v4180 = vshrl.u32 %v4179, 7
  %v4181 = vsub.s32 0, %v4180
  %v4182 = vrot.slane %v4177, %v4181
  %v4200 = vunpack.c.l.b16 %v4161
  %v4201 = vunpack.c.l.b16 %v4162
  %v4202 = vunpack.c.l.b16 %v4163
  %v4203 = vunpack.c.l.b16 %v4164
  %v4204 = vunpack.c.l.b16 %v4165
  %v4205 = vunpack.c.l.b16 %v4166
  %v4206 = vunpack.c.l.b16 %v4167
  %v4207 = vunpack.c.l.b16 %v4168
  %v4208 = vunpack.c.l.b16 %v4169
  %v4209 = vunpack.c.l.b16 %v4170
  %v4210 = vunpack.c.l.b16 %v4171
  %v4211 = vunpack.c.l.b16 %v4172
  %v4212 = vunpack.c.l.b16 %v4173
  %v4213 = vunpack.c.l.b16 %v4174
  %v4214 = vunpack.c.l.b16 %v4175
  %v4215 = vunpack.c.l.b16 %v4176
  %v4216 = vpack.c.b16 %v4201, %v4200
  %v4217 = vpack.c.b16 %v4203, %v4202
  %v4218 = vpack.c.b16 %v4205, %v4204
  %v4219 = vpack.c.b16 %v4207, %v4206
  %v4220 = vpack.c.b16 %v4209, %v4208
  %v4221 = vpack.c.b16 %v4211, %v4210
  %v4222 = vpack.c.b16 %v4213, %v4212
  %v4223 = vpack.c.b16 %v4215, %v4214
  %4232 = vmatprep.subr.bf16.mxu0 0
  %4233 = vmatpush1.bf16.msra.mxu0 %v4223
  %4234 = vmatprep.subr.bf16.mxu0 0
  %4235 = vmatpush1.bf16.msra.mxu0 %v4222
  %4236 = vmatprep.subr.bf16.mxu0 0
  %4237 = vmatpush1.bf16.msra.mxu0 %v4221
  %4238 = vmatprep.subr.bf16.mxu0 0
  %4239 = vmatpush1.bf16.msra.mxu0 %v4220
  %4240 = vmatprep.subr.bf16.mxu0 0
  %4241 = vmatpush1.bf16.msra.mxu0 %v4219
  %4242 = vmatprep.subr.bf16.mxu0 0
  %4243 = vmatpush1.bf16.msra.mxu0 %v4218
  %4244 = vmatprep.subr.bf16.mxu0 0
  %4245 = vmatpush1.bf16.msra.mxu0 %v4217
  %4246 = vmatprep.subr.bf16.mxu0 0
  %4247 = vmatpush1.bf16.msra.mxu0 %v4216
  %4248 = vmatprep.subr.bf16.mxu0 0
  %4249 = vmatpush2.bf16.msra.mxu0 0
  %4250 = vmatprep.subr.bf16.mxu0 0
  %4251 = vmatpush2.bf16.msra.mxu0 0
  %4252 = vmatprep.subr.bf16.mxu0 0
  %4253 = vmatpush2.bf16.msra.mxu0 0
  %4254 = vmatprep.subr.bf16.mxu0 0
  %4255 = vmatpush2.bf16.msra.mxu0 0
  %4256 = vmatprep.subr.bf16.mxu0 0
  %4257 = vmatpush2.bf16.msra.mxu0 0
  %4258 = vmatprep.subr.bf16.mxu0 0
  %4259 = vmatpush2.bf16.msra.mxu0 0
  %4260 = vmatprep.subr.bf16.mxu0 0
  %4261 = vmatpush2.bf16.msra.mxu0 0
  %4262 = vmatprep.subr.bf16.mxu0 0
  %4263 = vmatpush2.bf16.msra.mxu0 0
  %4264 = vmatprep.mubr.bf16.mxu0 0
  %4265 = vmatmul.mubr.bf16.gmra.mxu0 %v4160
  %v4266 = vpop.f32.mrf.mxu0
  %v4267 = vadd.f32 %v4182, %v4266
  %v4268 = vpop.f32.mrf.mxu0
  %v4269 = vpop.f32.mrf.mxu0
  %v4270 = vpop.f32.mrf.mxu0
  %4271 = vdwg.mxu0
  %4272 = vst [vmem:[%s11] sm:$0xff] %v4267
  // Predicated region
  $region46: #{net_forward.1} parent=0 // pred_check
    _
  $region47: #{net_forward.1} parent=0 // pred_check_branch
    %4274 = sbr.rel (0) target = $region49
  $region48: #{net_forward.1} parent=0 // pred_region
    _
  $region49: #{net_forward.1} parent=0 // pred_fallthru
    _
  // Predicated region
  $region50: #{net_forward.1} parent=0 // pred_check
    _
  $region51: #{net_forward.1} parent=0 // pred_check_branch
    %4276 = sbr.rel (0) target = $region53
  $region52: #{net_forward.1} parent=0 // pred_region
    _
  $region53: #{net_forward.1} parent=0 // pred_fallthru
    _

</llo_original>
